<compile_context>
chip_gen: v7x
topology: tpu7x:2x2x1
jax: 0.10.0
libtpu: 0.0.40
codegen_flags: <defaults>
</compile_context>

<pallas_src>
import jax
import jax.numpy as jnp
from jax.experimental import pallas as pl
from jax.experimental.pallas import tpu as pltpu

N_EMBD = 128
N_HEAD = 4
HEAD_SIZE = N_EMBD // N_HEAD          # 32
FF_HIDDEN = 4 * N_EMBD                # 512
LN_EPS = 1e-5
NEG_MASK = -1e9                       # finite mask value (NaN-safe vs true -inf)


def _layernorm(x, gamma, beta):
    # x: [M, C] f32, gamma/beta: [1, C] f32.  LN math stays f32 (v5e VPU has no bf16).
    mean = jnp.mean(x, axis=-1, keepdims=True)
    var = jnp.mean((x - mean) ** 2, axis=-1, keepdims=True)
    inv = jax.lax.rsqrt(var + LN_EPS)
    return (x - mean) * inv * gamma + beta


def block_kernel(x_ref,
                 ln1g_ref, ln1b_ref,
                 wqkv_ref,
                 wproj_ref, bproj_ref,
                 ln2g_ref, ln2b_ref,
                 w1_ref, b1_ref, w2_ref, b2_ref,
                 out_ref):
    tb, T, C = x_ref.shape                                   # (TILE_B, T, C)
    M = tb * T
    x = x_ref[...].astype(jnp.float32).reshape(M, C)         # flatten batch into M rows

    # ---- LayerNorm 1 (f32) ----
    ln1 = _layernorm(x, ln1g_ref[...], ln1b_ref[...])

    # ---- Fused QKV projection: one [M,C] x [C,3C] MXU op (scale folded into wq cols) ----
    qkv = jnp.dot(ln1.astype(jnp.bfloat16), wqkv_ref[...],
                  preferred_element_type=jnp.float32)         # [M, 3C] f32
    qkv = qkv.astype(jnp.bfloat16)                            # single cast; heads slice this

    # Causal mask (shared across batch & heads), finite negative -> NaN-safe.
    row = jax.lax.broadcasted_iota(jnp.int32, (T, T), 0)
    col = jax.lax.broadcasted_iota(jnp.int32, (T, T), 1)
    causal = (row >= col)[None, :, :]                         # [1, T, T]

    head_outs = []
    for h in range(N_HEAD):
        sl_q = slice(h * HEAD_SIZE, (h + 1) * HEAD_SIZE)
        sl_k = slice(C + h * HEAD_SIZE, C + (h + 1) * HEAD_SIZE)
        sl_v = slice(2 * C + h * HEAD_SIZE, 2 * C + (h + 1) * HEAD_SIZE)
        q_h = qkv[:, sl_q].reshape(tb, T, HEAD_SIZE)          # bf16 [tb, T, 32]
        k_h = qkv[:, sl_k].reshape(tb, T, HEAD_SIZE)
        v_h = qkv[:, sl_v].reshape(tb, T, HEAD_SIZE)

        # batched scores, no explicit K transpose (contract on the last dims)
        wei = jnp.einsum('btd,bsd->bts', q_h, k_h,
                         preferred_element_type=jnp.float32)   # [tb, T, T] f32
        wei = jnp.where(causal, wei, jnp.float32(NEG_MASK))
        wei = wei - jnp.max(wei, axis=-1, keepdims=True)
        p = jnp.exp(wei)                                       # f32 softmax
        p = p * pl.reciprocal(jnp.sum(p, axis=-1, keepdims=True), approx=True)
        # TODO(synk): nn.Dropout (attn probs / proj / ffn) is identity in this eval-mode forward.

        ho = jnp.einsum('bts,bsd->btd', p.astype(jnp.bfloat16), v_h,
                        preferred_element_type=jnp.float32)    # [tb, T, 32] f32
        head_outs.append(ho.reshape(M, HEAD_SIZE))

    # Re-assemble heads into a lane-dense [M, C] slab -> ONE K=128 output projection.
    heads = jnp.concatenate(head_outs, axis=-1).astype(jnp.bfloat16)   # [M, C]
    sa = jnp.dot(heads, wproj_ref[...],
                 preferred_element_type=jnp.float32) + bproj_ref[...]

    x1 = x + sa                                               # residual 1

    # ---- LayerNorm 2 + FeedForward (bf16 MXU, f32 acc / elementwise) ----
    ln2 = _layernorm(x1, ln2g_ref[...], ln2b_ref[...])
    h1 = jnp.dot(ln2.astype(jnp.bfloat16), w1_ref[...],
                 preferred_element_type=jnp.float32) + b1_ref[...]
    h1 = jnp.maximum(h1, 0.0)                                 # ReLU
    ff = jnp.dot(h1.astype(jnp.bfloat16), w2_ref[...],
                 preferred_element_type=jnp.float32) + b2_ref[...]

    out_ref[...] = (x1 + ff).reshape(tb, T, C).astype(out_ref.dtype)   # residual 2


def _pick_tile_b(B, T, *, vmem_budget_bytes=24 << 20):
    """Largest divisor of B whose per-step activation working set fits the budget.

    The grid is a sequential loop on one TensorCore (v5e/v6e), so fewer, larger
    steps are strictly better until VMEM runs out; grid=(1,) is fine.  On v7x
    (2 TCs, 64 MiB VMEM) pass a smaller budget if you want >=2 parallel steps.
    """
    # Rough per-token VMEM bytes: f32 [*,128] slabs (x, ln1, sa, x1, ln2, ff,
    # head outs ~ 8*512B), qkv f32+bf16 (~2.3KB), FFN hidden f32+bf16 (~3KB),
    # double-buffered in/out tiles (~2KB), plus attention scores/probs (~8*T B).
    per_row = 12 * 1024 + 8 * T
    max_rows = max(T, vmem_budget_bytes // per_row)
    best = 1
    for d in range(1, B + 1):
        if B % d == 0 and d * T <= max_rows:
            best = d
    return best


def transformer_block(x, params, *, tile_b=None):
    """x: [B, T, C] f32 -> [B, T, C] f32."""
    B, T, C = x.shape
    assert C == N_EMBD
    # T % 8 == 0 keeps the in-kernel [tb,T,C] <-> [tb*T,C] reshapes layout-free
    # (no sublane repack copy on either end of the kernel).
    assert T % 8 == 0, "T must be a multiple of 8 (pad the sequence if needed)"
    if tile_b is None:
        tile_b = _pick_tile_b(B, T)
    assert B % tile_b == 0
    grid_b = B // tile_b

    bf = jnp.bfloat16
    scale = float(N_EMBD) ** -0.5          # C ** -0.5 with C = n_embd (PyTorch semantics)
    # Fused QKV weight [C, 3C] with the attention scale folded into the Q columns.
    wqkv = jnp.concatenate(
        [params["wq"] * scale, params["wk"], params["wv"]], axis=1).astype(bf)

    ordered = [
        params["ln1_g"], params["ln1_b"],
        wqkv,
        params["wproj"].astype(bf), params["bproj"],
        params["ln2_g"], params["ln2_b"],
        params["w1"].astype(bf), params["b1"],
        params["w2"].astype(bf), params["b2"],
    ]

    def full_spec(arr):
        nd = arr.ndim
        # Constant index_map -> weights stay resident across grid steps.
        return pl.BlockSpec(arr.shape, lambda g, _nd=nd: (0,) * _nd)

    in_specs = [pl.BlockSpec((tile_b, T, C), lambda g: (g, 0, 0))]
    in_specs += [full_spec(a) for a in ordered]

    # Advisory cost estimate: QKV+proj+FFN = 24*B*T*C^2, attention = 4*B*T^2*C.
    flops = 2 * B * T * C * (12 * C + 2 * T)
    transcendentals = B * N_HEAD * T * T + 2 * B * T
    bytes_accessed = (2 * B * T * C * 4
                      + sum(int(a.size) * a.dtype.itemsize for a in ordered))

    return pl.pallas_call(
        block_kernel,
        out_shape=jax.ShapeDtypeStruct((B, T, C), x.dtype),
        grid_spec=pltpu.PrefetchScalarGridSpec(
            num_scalar_prefetch=0,
            grid=(grid_b,),
            in_specs=in_specs,
            out_specs=pl.BlockSpec((tile_b, T, C), lambda g: (g, 0, 0)),
        ),
        compiler_params=pltpu.CompilerParams(
            dimension_semantics=("parallel",),
            # Under v7x's 64 MiB physical VMEM, comfortably above our ~24 MiB
            # activation budget; v5e/v6e have 128 MiB physical.
            vmem_limit_bytes=48 << 20),
        cost_estimate=pl.CostEstimate(
            flops=flops,
            transcendentals=transcendentals,
            bytes_accessed=bytes_accessed),
    )(x, *ordered)


def _reference(x, p):
    """Pure-JAX f32 reference of the same forward (eval mode)."""
    def ln(z, g, b):
        m = jnp.mean(z, -1, keepdims=True)
        v = jnp.mean((z - m) ** 2, -1, keepdims=True)
        return (z - m) * jax.lax.rsqrt(v + LN_EPS) * g + b

    B, T, C = x.shape
    l1 = ln(x, p["ln1_g"], p["ln1_b"])
    q = l1 @ p["wq"]; k = l1 @ p["wk"]; v = l1 @ p["wv"]
    mask = jnp.tril(jnp.ones((T, T), bool))
    outs = []
    for h in range(N_HEAD):
        sl = slice(h * HEAD_SIZE, (h + 1) * HEAD_SIZE)
        w = jnp.einsum("btd,bsd->bts", q[..., sl], k[..., sl]) * (C ** -0.5)
        w = jnp.where(mask, w, -jnp.inf)
        w = jax.nn.softmax(w, axis=-1)
        outs.append(jnp.einsum("bts,bsd->btd", w, v[..., sl]))
    sa = jnp.concatenate(outs, -1) @ p["wproj"] + p["bproj"]
    x1 = x + sa
    l2 = ln(x1, p["ln2_g"], p["ln2_b"])
    ff = jnp.maximum(l2 @ p["w1"] + p["b1"], 0.0) @ p["w2"] + p["b2"]
    return x1 + ff


if __name__ == "__main__":
    key = jax.random.PRNGKey(0)
    ks = jax.random.split(key, 8)
    B, T = 4, 8   # T <= block_size (256), multiple of 8

    def init(k, shape, scale=0.02):
        return jax.random.normal(k, shape, jnp.float32) * scale

    params = {
        "ln1_g": jnp.ones((1, N_EMBD), jnp.float32),
        "ln1_b": jnp.zeros((1, N_EMBD), jnp.float32),
        # per-head q/k/v weights stacked along the output dim -> [C, C], [in, out] layout
        "wq": init(ks[0], (N_EMBD, N_EMBD)),
        "wk": init(ks[1], (N_EMBD, N_EMBD)),
        "wv": init(ks[2], (N_EMBD, N_EMBD)),
        "wproj": init(ks[3], (N_EMBD, N_EMBD)),
        "bproj": jnp.zeros((1, N_EMBD), jnp.float32),
        "ln2_g": jnp.ones((1, N_EMBD), jnp.float32),
        "ln2_b": jnp.zeros((1, N_EMBD), jnp.float32),
        "w1": init(ks[4], (N_EMBD, FF_HIDDEN)),
        "b1": jnp.zeros((1, FF_HIDDEN), jnp.float32),
        "w2": init(ks[5], (FF_HIDDEN, N_EMBD)),
        "b2": jnp.zeros((1, N_EMBD), jnp.float32),
    }

    x = jax.random.normal(ks[6], (B, T, N_EMBD), jnp.float32)

    out = transformer_block(x, params)
    jax.block_until_ready(out)

    ref = _reference(x, params)
    assert out.shape == (B, T, N_EMBD)
    # bf16 matmul operands + approx reciprocal -> slightly looser tolerance than pure f32.
    assert jnp.allclose(out, ref, rtol=2e-2, atol=2e-2), "mismatch vs reference"

    print("KERNEL_OK")
</pallas_src>

<mosaic_0001>
module attributes {stable_mosaic.version = 11 : i64} {
  func.func @block_kernel(%arg0: i32, %arg1: memref<4x8x128xf32, #tpu.memory_space<vmem>>, %arg2: memref<1x128xf32, #tpu.memory_space<vmem>>, %arg3: memref<1x128xf32, #tpu.memory_space<vmem>>, %arg4: memref<128x384xbf16, #tpu.memory_space<vmem>>, %arg5: memref<128x128xbf16, #tpu.memory_space<vmem>>, %arg6: memref<1x128xf32, #tpu.memory_space<vmem>>, %arg7: memref<1x128xf32, #tpu.memory_space<vmem>>, %arg8: memref<1x128xf32, #tpu.memory_space<vmem>>, %arg9: memref<128x512xbf16, #tpu.memory_space<vmem>>, %arg10: memref<1x512xf32, #tpu.memory_space<vmem>>, %arg11: memref<512x128xbf16, #tpu.memory_space<vmem>>, %arg12: memref<1x128xf32, #tpu.memory_space<vmem>>, %arg13: memref<4x8x128xf32, #tpu.memory_space<vmem>>) attributes {dimension_semantics = [#tpu.dimension_semantics<parallel>], iteration_bounds = array<i64: 1>, scalar_prefetch = 0 : i64, scratch_operands = 0 : i64, tpu.core_type = #tpu.core_type<tc>, window_params = [{transform_indices = @transform_0, window_bounds = array<i64: 4, 8, 128>}, {pipeline_mode = #tpu.pipeline_mode<synchronous>, transform_indices = @transform_1, window_bounds = array<i64: 1, 128>}, {pipeline_mode = #tpu.pipeline_mode<synchronous>, transform_indices = @transform_2, window_bounds = array<i64: 1, 128>}, {pipeline_mode = #tpu.pipeline_mode<synchronous>, transform_indices = @transform_3, window_bounds = array<i64: 128, 384>}, {pipeline_mode = #tpu.pipeline_mode<synchronous>, transform_indices = @transform_4, window_bounds = array<i64: 128, 128>}, {pipeline_mode = #tpu.pipeline_mode<synchronous>, transform_indices = @transform_5, window_bounds = array<i64: 1, 128>}, {pipeline_mode = #tpu.pipeline_mode<synchronous>, transform_indices = @transform_6, window_bounds = array<i64: 1, 128>}, {pipeline_mode = #tpu.pipeline_mode<synchronous>, transform_indices = @transform_7, window_bounds = array<i64: 1, 128>}, {pipeline_mode = #tpu.pipeline_mode<synchronous>, transform_indices = @transform_8, window_bounds = array<i64: 128, 512>}, {pipeline_mode = #tpu.pipeline_mode<synchronous>, transform_indices = @transform_9, window_bounds = array<i64: 1, 512>}, {pipeline_mode = #tpu.pipeline_mode<synchronous>, transform_indices = @transform_10, window_bounds = array<i64: 512, 128>}, {pipeline_mode = #tpu.pipeline_mode<synchronous>, transform_indices = @transform_11, window_bounds = array<i64: 1, 128>}, {transform_indices = @transform_12, window_bounds = array<i64: 4, 8, 128>}]} {
    %c0 = arith.constant 0 : index
    %c0_0 = arith.constant 0 : index
    %c0_1 = arith.constant 0 : index
    %0 = vector.load %arg1[%c0, %c0_0, %c0_1] : memref<4x8x128xf32, #tpu.memory_space<vmem>>, vector<4x8x128xf32>
    %1 = vector.shape_cast %0 : vector<4x8x128xf32> to vector<32x128xf32>
    %c0_2 = arith.constant 0 : index
    %c0_3 = arith.constant 0 : index
    %2 = vector.load %arg2[%c0_2, %c0_3] : memref<1x128xf32, #tpu.memory_space<vmem>>, vector<1x128xf32>
    %c0_4 = arith.constant 0 : index
    %c0_5 = arith.constant 0 : index
    %3 = vector.load %arg3[%c0_4, %c0_5] : memref<1x128xf32, #tpu.memory_space<vmem>>, vector<1x128xf32>
    %cst = arith.constant dense<0.000000e+00> : vector<32xf32>
    %4 = vector.multi_reduction <add>, %1, %cst [1] : vector<32x128xf32> to vector<32xf32>
    %5 = vector.shape_cast %4 : vector<32xf32> to vector<32x1xf32>
    %cst_6 = arith.constant 1.280000e+02 : f32
    %6 = vector.broadcast %cst_6 : f32 to vector<32x1xf32>
    %7 = arith.divf %5, %6 : vector<32x1xf32>
    %8 = vector.broadcast %7 : vector<32x1xf32> to vector<32x128xf32>
    %9 = arith.subf %1, %8 : vector<32x128xf32>
    %10 = arith.mulf %9, %9 : vector<32x128xf32>
    %cst_7 = arith.constant dense<0.000000e+00> : vector<32xf32>
    %11 = vector.multi_reduction <add>, %10, %cst_7 [1] : vector<32x128xf32> to vector<32xf32>
    %12 = vector.shape_cast %11 : vector<32xf32> to vector<32x1xf32>
    %cst_8 = arith.constant 1.280000e+02 : f32
    %13 = vector.broadcast %cst_8 : f32 to vector<32x1xf32>
    %14 = arith.divf %12, %13 : vector<32x1xf32>
    %cst_9 = arith.constant 9.99999974E-6 : f32
    %15 = vector.broadcast %cst_9 : f32 to vector<32x1xf32>
    %16 = arith.addf %14, %15 : vector<32x1xf32>
    %17 = math.rsqrt %16 : vector<32x1xf32>
    %18 = vector.broadcast %7 : vector<32x1xf32> to vector<32x128xf32>
    %19 = arith.subf %1, %18 : vector<32x128xf32>
    %20 = vector.broadcast %17 : vector<32x1xf32> to vector<32x128xf32>
    %21 = arith.mulf %19, %20 : vector<32x128xf32>
    %22 = vector.broadcast %2 : vector<1x128xf32> to vector<32x128xf32>
    %23 = arith.mulf %21, %22 : vector<32x128xf32>
    %24 = vector.broadcast %3 : vector<1x128xf32> to vector<32x128xf32>
    %25 = arith.addf %23, %24 : vector<32x128xf32>
    %26 = arith.truncf %25 : vector<32x128xf32> to vector<32x128xbf16>
    %c0_10 = arith.constant 0 : index
    %c0_11 = arith.constant 0 : index
    %27 = vector.load %arg4[%c0_10, %c0_11] : memref<128x384xbf16, #tpu.memory_space<vmem>>, vector<128x384xbf16>
    %cst_12 = arith.constant dense<0.000000e+00> : vector<32x384xf32>
    %28 = tpu.matmul %26, %27, %cst_12 {dimension_numbers = #tpu.dot_dimension_numbers<[1], [0], [0], [1], [0, 0, 1, 1], [], []>} : vector<32x128xbf16>, vector<128x384xbf16>, vector<32x384xf32> -> vector<32x384xf32>
    %29 = arith.truncf %28 : vector<32x384xf32> to vector<32x384xbf16>
    %30 = tpu.iota {dimensions = array<i32: 0>} : vector<8x8xi32>
    %31 = tpu.iota {dimensions = array<i32: 1>} : vector<8x8xi32>
    %32 = arith.cmpi sge, %30, %31 : vector<8x8xi32>
    %33 = vector.shape_cast %32 : vector<8x8xi1> to vector<1x8x8xi1>
    %34 = vector.extract_strided_slice %29 {offsets = [0, 0], sizes = [32, 32], strides = [1, 1]} : vector<32x384xbf16> to vector<32x32xbf16>
    %35 = vector.shape_cast %34 : vector<32x32xbf16> to vector<4x8x32xbf16>
    %36 = vector.extract_strided_slice %29 {offsets = [0, 128], sizes = [32, 32], strides = [1, 1]} : vector<32x384xbf16> to vector<32x32xbf16>
    %37 = vector.shape_cast %36 : vector<32x32xbf16> to vector<4x8x32xbf16>
    %38 = vector.extract_strided_slice %29 {offsets = [0, 256], sizes = [32, 32], strides = [1, 1]} : vector<32x384xbf16> to vector<32x32xbf16>
    %39 = vector.shape_cast %38 : vector<32x32xbf16> to vector<4x8x32xbf16>
    "tpu.trace_start"() <{level = 10 : i32, message = "btd,bsd->bts"}> : () -> ()
    %cst_13 = arith.constant dense<0.000000e+00> : vector<4x8x8xf32>
    %40 = tpu.matmul %35, %37, %cst_13 {dimension_numbers = #tpu.dot_dimension_numbers<[2], [2], [1], [1], [0, 0, 0, 1, 1, 1], [0], [0]>} : vector<4x8x32xbf16>, vector<4x8x32xbf16>, vector<4x8x8xf32> -> vector<4x8x8xf32>
    %cst_14 = arith.constant -1.000000e+09 : f32
    "tpu.trace_stop"() : () -> ()
    %41 = vector.shape_cast %33 : vector<1x8x8xi1> to vector<1x8x8xi1>
    %42 = vector.broadcast %41 : vector<1x8x8xi1> to vector<4x8x8xi1>
    %43 = vector.broadcast %cst_14 : f32 to vector<4x8x8xf32>
    %44 = arith.select %42, %40, %43 : vector<4x8x8xi1>, vector<4x8x8xf32>
    %cst_15 = arith.constant dense<0xFF800000> : vector<4x8xf32>
    %45 = vector.multi_reduction <maximumf>, %44, %cst_15 [2] : vector<4x8x8xf32> to vector<4x8xf32>
    %46 = vector.shape_cast %45 : vector<4x8xf32> to vector<4x8x1xf32>
    %47 = vector.broadcast %46 : vector<4x8x1xf32> to vector<4x8x8xf32>
    %48 = arith.subf %44, %47 : vector<4x8x8xf32>
    %49 = math.exp %48 : vector<4x8x8xf32>
    %cst_16 = arith.constant dense<0.000000e+00> : vector<4x8xf32>
    %50 = vector.multi_reduction <add>, %49, %cst_16 [2] : vector<4x8x8xf32> to vector<4x8xf32>
    %51 = vector.shape_cast %50 : vector<4x8xf32> to vector<4x8x1xf32>
    %52 = tpu.reciprocal %51 {approx = true} : vector<4x8x1xf32> -> vector<4x8x1xf32>
    %53 = vector.broadcast %52 : vector<4x8x1xf32> to vector<4x8x8xf32>
    %54 = arith.mulf %49, %53 : vector<4x8x8xf32>
    %55 = arith.truncf %54 : vector<4x8x8xf32> to vector<4x8x8xbf16>
    "tpu.trace_start"() <{level = 10 : i32, message = "bts,bsd->btd"}> : () -> ()
    %cst_17 = arith.constant dense<0.000000e+00> : vector<4x8x32xf32>
    %56 = tpu.matmul %55, %39, %cst_17 {dimension_numbers = #tpu.dot_dimension_numbers<[2], [1], [1], [2], [0, 0, 0, 1, 1, 2], [0], [0]>} : vector<4x8x8xbf16>, vector<4x8x32xbf16>, vector<4x8x32xf32> -> vector<4x8x32xf32>
    "tpu.trace_stop"() : () -> ()
    %57 = vector.shape_cast %56 : vector<4x8x32xf32> to vector<32x32xf32>
    %58 = vector.extract_strided_slice %29 {offsets = [0, 32], sizes = [32, 32], strides = [1, 1]} : vector<32x384xbf16> to vector<32x32xbf16>
    %59 = vector.shape_cast %58 : vector<32x32xbf16> to vector<4x8x32xbf16>
    %60 = vector.extract_strided_slice %29 {offsets = [0, 160], sizes = [32, 32], strides = [1, 1]} : vector<32x384xbf16> to vector<32x32xbf16>
    %61 = vector.shape_cast %60 : vector<32x32xbf16> to vector<4x8x32xbf16>
    %62 = vector.extract_strided_slice %29 {offsets = [0, 288], sizes = [32, 32], strides = [1, 1]} : vector<32x384xbf16> to vector<32x32xbf16>
    %63 = vector.shape_cast %62 : vector<32x32xbf16> to vector<4x8x32xbf16>
    "tpu.trace_start"() <{level = 10 : i32, message = "btd,bsd->bts"}> : () -> ()
    %cst_18 = arith.constant dense<0.000000e+00> : vector<4x8x8xf32>
    %64 = tpu.matmul %59, %61, %cst_18 {dimension_numbers = #tpu.dot_dimension_numbers<[2], [2], [1], [1], [0, 0, 0, 1, 1, 1], [0], [0]>} : vector<4x8x32xbf16>, vector<4x8x32xbf16>, vector<4x8x8xf32> -> vector<4x8x8xf32>
    %cst_19 = arith.constant -1.000000e+09 : f32
    "tpu.trace_stop"() : () -> ()
    %65 = vector.shape_cast %33 : vector<1x8x8xi1> to vector<1x8x8xi1>
    %66 = vector.broadcast %65 : vector<1x8x8xi1> to vector<4x8x8xi1>
    %67 = vector.broadcast %cst_19 : f32 to vector<4x8x8xf32>
    %68 = arith.select %66, %64, %67 : vector<4x8x8xi1>, vector<4x8x8xf32>
    %cst_20 = arith.constant dense<0xFF800000> : vector<4x8xf32>
    %69 = vector.multi_reduction <maximumf>, %68, %cst_20 [2] : vector<4x8x8xf32> to vector<4x8xf32>
    %70 = vector.shape_cast %69 : vector<4x8xf32> to vector<4x8x1xf32>
    %71 = vector.broadcast %70 : vector<4x8x1xf32> to vector<4x8x8xf32>
    %72 = arith.subf %68, %71 : vector<4x8x8xf32>
    %73 = math.exp %72 : vector<4x8x8xf32>
    %cst_21 = arith.constant dense<0.000000e+00> : vector<4x8xf32>
    %74 = vector.multi_reduction <add>, %73, %cst_21 [2] : vector<4x8x8xf32> to vector<4x8xf32>
    %75 = vector.shape_cast %74 : vector<4x8xf32> to vector<4x8x1xf32>
    %76 = tpu.reciprocal %75 {approx = true} : vector<4x8x1xf32> -> vector<4x8x1xf32>
    %77 = vector.broadcast %76 : vector<4x8x1xf32> to vector<4x8x8xf32>
    %78 = arith.mulf %73, %77 : vector<4x8x8xf32>
    %79 = arith.truncf %78 : vector<4x8x8xf32> to vector<4x8x8xbf16>
    "tpu.trace_start"() <{level = 10 : i32, message = "bts,bsd->btd"}> : () -> ()
    %cst_22 = arith.constant dense<0.000000e+00> : vector<4x8x32xf32>
    %80 = tpu.matmul %79, %63, %cst_22 {dimension_numbers = #tpu.dot_dimension_numbers<[2], [1], [1], [2], [0, 0, 0, 1, 1, 2], [0], [0]>} : vector<4x8x8xbf16>, vector<4x8x32xbf16>, vector<4x8x32xf32> -> vector<4x8x32xf32>
    "tpu.trace_stop"() : () -> ()
    %81 = vector.shape_cast %80 : vector<4x8x32xf32> to vector<32x32xf32>
    %82 = vector.extract_strided_slice %29 {offsets = [0, 64], sizes = [32, 32], strides = [1, 1]} : vector<32x384xbf16> to vector<32x32xbf16>
    %83 = vector.shape_cast %82 : vector<32x32xbf16> to vector<4x8x32xbf16>
    %84 = vector.extract_strided_slice %29 {offsets = [0, 192], sizes = [32, 32], strides = [1, 1]} : vector<32x384xbf16> to vector<32x32xbf16>
    %85 = vector.shape_cast %84 : vector<32x32xbf16> to vector<4x8x32xbf16>
    %86 = vector.extract_strided_slice %29 {offsets = [0, 320], sizes = [32, 32], strides = [1, 1]} : vector<32x384xbf16> to vector<32x32xbf16>
    %87 = vector.shape_cast %86 : vector<32x32xbf16> to vector<4x8x32xbf16>
    "tpu.trace_start"() <{level = 10 : i32, message = "btd,bsd->bts"}> : () -> ()
    %cst_23 = arith.constant dense<0.000000e+00> : vector<4x8x8xf32>
    %88 = tpu.matmul %83, %85, %cst_23 {dimension_numbers = #tpu.dot_dimension_numbers<[2], [2], [1], [1], [0, 0, 0, 1, 1, 1], [0], [0]>} : vector<4x8x32xbf16>, vector<4x8x32xbf16>, vector<4x8x8xf32> -> vector<4x8x8xf32>
    %cst_24 = arith.constant -1.000000e+09 : f32
    "tpu.trace_stop"() : () -> ()
    %89 = vector.shape_cast %33 : vector<1x8x8xi1> to vector<1x8x8xi1>
    %90 = vector.broadcast %89 : vector<1x8x8xi1> to vector<4x8x8xi1>
    %91 = vector.broadcast %cst_24 : f32 to vector<4x8x8xf32>
    %92 = arith.select %90, %88, %91 : vector<4x8x8xi1>, vector<4x8x8xf32>
    %cst_25 = arith.constant dense<0xFF800000> : vector<4x8xf32>
    %93 = vector.multi_reduction <maximumf>, %92, %cst_25 [2] : vector<4x8x8xf32> to vector<4x8xf32>
    %94 = vector.shape_cast %93 : vector<4x8xf32> to vector<4x8x1xf32>
    %95 = vector.broadcast %94 : vector<4x8x1xf32> to vector<4x8x8xf32>
    %96 = arith.subf %92, %95 : vector<4x8x8xf32>
    %97 = math.exp %96 : vector<4x8x8xf32>
    %cst_26 = arith.constant dense<0.000000e+00> : vector<4x8xf32>
    %98 = vector.multi_reduction <add>, %97, %cst_26 [2] : vector<4x8x8xf32> to vector<4x8xf32>
    %99 = vector.shape_cast %98 : vector<4x8xf32> to vector<4x8x1xf32>
    %100 = tpu.reciprocal %99 {approx = true} : vector<4x8x1xf32> -> vector<4x8x1xf32>
    %101 = vector.broadcast %100 : vector<4x8x1xf32> to vector<4x8x8xf32>
    %102 = arith.mulf %97, %101 : vector<4x8x8xf32>
    %103 = arith.truncf %102 : vector<4x8x8xf32> to vector<4x8x8xbf16>
    "tpu.trace_start"() <{level = 10 : i32, message = "bts,bsd->btd"}> : () -> ()
    %cst_27 = arith.constant dense<0.000000e+00> : vector<4x8x32xf32>
    %104 = tpu.matmul %103, %87, %cst_27 {dimension_numbers = #tpu.dot_dimension_numbers<[2], [1], [1], [2], [0, 0, 0, 1, 1, 2], [0], [0]>} : vector<4x8x8xbf16>, vector<4x8x32xbf16>, vector<4x8x32xf32> -> vector<4x8x32xf32>
    "tpu.trace_stop"() : () -> ()
    %105 = vector.shape_cast %104 : vector<4x8x32xf32> to vector<32x32xf32>
    %106 = vector.extract_strided_slice %29 {offsets = [0, 96], sizes = [32, 32], strides = [1, 1]} : vector<32x384xbf16> to vector<32x32xbf16>
    %107 = vector.shape_cast %106 : vector<32x32xbf16> to vector<4x8x32xbf16>
    %108 = vector.extract_strided_slice %29 {offsets = [0, 224], sizes = [32, 32], strides = [1, 1]} : vector<32x384xbf16> to vector<32x32xbf16>
    %109 = vector.shape_cast %108 : vector<32x32xbf16> to vector<4x8x32xbf16>
    %110 = vector.extract_strided_slice %29 {offsets = [0, 352], sizes = [32, 32], strides = [1, 1]} : vector<32x384xbf16> to vector<32x32xbf16>
    %111 = vector.shape_cast %110 : vector<32x32xbf16> to vector<4x8x32xbf16>
    "tpu.trace_start"() <{level = 10 : i32, message = "btd,bsd->bts"}> : () -> ()
    %cst_28 = arith.constant dense<0.000000e+00> : vector<4x8x8xf32>
    %112 = tpu.matmul %107, %109, %cst_28 {dimension_numbers = #tpu.dot_dimension_numbers<[2], [2], [1], [1], [0, 0, 0, 1, 1, 1], [0], [0]>} : vector<4x8x32xbf16>, vector<4x8x32xbf16>, vector<4x8x8xf32> -> vector<4x8x8xf32>
    %cst_29 = arith.constant -1.000000e+09 : f32
    "tpu.trace_stop"() : () -> ()
    %113 = vector.shape_cast %33 : vector<1x8x8xi1> to vector<1x8x8xi1>
    %114 = vector.broadcast %113 : vector<1x8x8xi1> to vector<4x8x8xi1>
    %115 = vector.broadcast %cst_29 : f32 to vector<4x8x8xf32>
    %116 = arith.select %114, %112, %115 : vector<4x8x8xi1>, vector<4x8x8xf32>
    %cst_30 = arith.constant dense<0xFF800000> : vector<4x8xf32>
    %117 = vector.multi_reduction <maximumf>, %116, %cst_30 [2] : vector<4x8x8xf32> to vector<4x8xf32>
    %118 = vector.shape_cast %117 : vector<4x8xf32> to vector<4x8x1xf32>
    %119 = vector.broadcast %118 : vector<4x8x1xf32> to vector<4x8x8xf32>
    %120 = arith.subf %116, %119 : vector<4x8x8xf32>
    %121 = math.exp %120 : vector<4x8x8xf32>
    %cst_31 = arith.constant dense<0.000000e+00> : vector<4x8xf32>
    %122 = vector.multi_reduction <add>, %121, %cst_31 [2] : vector<4x8x8xf32> to vector<4x8xf32>
    %123 = vector.shape_cast %122 : vector<4x8xf32> to vector<4x8x1xf32>
    %124 = tpu.reciprocal %123 {approx = true} : vector<4x8x1xf32> -> vector<4x8x1xf32>
    %125 = vector.broadcast %124 : vector<4x8x1xf32> to vector<4x8x8xf32>
    %126 = arith.mulf %121, %125 : vector<4x8x8xf32>
    %127 = arith.truncf %126 : vector<4x8x8xf32> to vector<4x8x8xbf16>
    "tpu.trace_start"() <{level = 10 : i32, message = "bts,bsd->btd"}> : () -> ()
    %cst_32 = arith.constant dense<0.000000e+00> : vector<4x8x32xf32>
    %128 = tpu.matmul %127, %111, %cst_32 {dimension_numbers = #tpu.dot_dimension_numbers<[2], [1], [1], [2], [0, 0, 0, 1, 1, 2], [0], [0]>} : vector<4x8x8xbf16>, vector<4x8x32xbf16>, vector<4x8x32xf32> -> vector<4x8x32xf32>
    "tpu.trace_stop"() : () -> ()
    %129 = vector.shape_cast %128 : vector<4x8x32xf32> to vector<32x32xf32>
    %130 = tpu.concatenate %57, %81, %105, %129 in 1 : vector<32x32xf32>, vector<32x32xf32>, vector<32x32xf32>, vector<32x32xf32> -> vector<32x128xf32>
    %131 = arith.truncf %130 : vector<32x128xf32> to vector<32x128xbf16>
    %c0_33 = arith.constant 0 : index
    %c0_34 = arith.constant 0 : index
    %132 = vector.load %arg5[%c0_33, %c0_34] : memref<128x128xbf16, #tpu.memory_space<vmem>>, vector<128x128xbf16>
    %cst_35 = arith.constant dense<0.000000e+00> : vector<32x128xf32>
    %133 = tpu.matmul %131, %132, %cst_35 {dimension_numbers = #tpu.dot_dimension_numbers<[1], [0], [0], [1], [0, 0, 1, 1], [], []>} : vector<32x128xbf16>, vector<128x128xbf16>, vector<32x128xf32> -> vector<32x128xf32>
    %c0_36 = arith.constant 0 : index
    %c0_37 = arith.constant 0 : index
    %134 = vector.load %arg6[%c0_36, %c0_37] : memref<1x128xf32, #tpu.memory_space<vmem>>, vector<1x128xf32>
    %135 = vector.broadcast %134 : vector<1x128xf32> to vector<32x128xf32>
    %136 = arith.addf %133, %135 : vector<32x128xf32>
    %137 = arith.addf %1, %136 : vector<32x128xf32>
    %c0_38 = arith.constant 0 : index
    %c0_39 = arith.constant 0 : index
    %138 = vector.load %arg7[%c0_38, %c0_39] : memref<1x128xf32, #tpu.memory_space<vmem>>, vector<1x128xf32>
    %c0_40 = arith.constant 0 : index
    %c0_41 = arith.constant 0 : index
    %139 = vector.load %arg8[%c0_40, %c0_41] : memref<1x128xf32, #tpu.memory_space<vmem>>, vector<1x128xf32>
    %cst_42 = arith.constant dense<0.000000e+00> : vector<32xf32>
    %140 = vector.multi_reduction <add>, %137, %cst_42 [1] : vector<32x128xf32> to vector<32xf32>
    %141 = vector.shape_cast %140 : vector<32xf32> to vector<32x1xf32>
    %cst_43 = arith.constant 1.280000e+02 : f32
    %142 = vector.broadcast %cst_43 : f32 to vector<32x1xf32>
    %143 = arith.divf %141, %142 : vector<32x1xf32>
    %144 = vector.broadcast %143 : vector<32x1xf32> to vector<32x128xf32>
    %145 = arith.subf %137, %144 : vector<32x128xf32>
    %146 = arith.mulf %145, %145 : vector<32x128xf32>
    %cst_44 = arith.constant dense<0.000000e+00> : vector<32xf32>
    %147 = vector.multi_reduction <add>, %146, %cst_44 [1] : vector<32x128xf32> to vector<32xf32>
    %148 = vector.shape_cast %147 : vector<32xf32> to vector<32x1xf32>
    %cst_45 = arith.constant 1.280000e+02 : f32
    %149 = vector.broadcast %cst_45 : f32 to vector<32x1xf32>
    %150 = arith.divf %148, %149 : vector<32x1xf32>
    %cst_46 = arith.constant 9.99999974E-6 : f32
    %151 = vector.broadcast %cst_46 : f32 to vector<32x1xf32>
    %152 = arith.addf %150, %151 : vector<32x1xf32>
    %153 = math.rsqrt %152 : vector<32x1xf32>
    %154 = vector.broadcast %143 : vector<32x1xf32> to vector<32x128xf32>
    %155 = arith.subf %137, %154 : vector<32x128xf32>
    %156 = vector.broadcast %153 : vector<32x1xf32> to vector<32x128xf32>
    %157 = arith.mulf %155, %156 : vector<32x128xf32>
    %158 = vector.broadcast %138 : vector<1x128xf32> to vector<32x128xf32>
    %159 = arith.mulf %157, %158 : vector<32x128xf32>
    %160 = vector.broadcast %139 : vector<1x128xf32> to vector<32x128xf32>
    %161 = arith.addf %159, %160 : vector<32x128xf32>
    %162 = arith.truncf %161 : vector<32x128xf32> to vector<32x128xbf16>
    %c0_47 = arith.constant 0 : index
    %c0_48 = arith.constant 0 : index
    %163 = vector.load %arg9[%c0_47, %c0_48] : memref<128x512xbf16, #tpu.memory_space<vmem>>, vector<128x512xbf16>
    %cst_49 = arith.constant dense<0.000000e+00> : vector<32x512xf32>
    %164 = tpu.matmul %162, %163, %cst_49 {dimension_numbers = #tpu.dot_dimension_numbers<[1], [0], [0], [1], [0, 0, 1, 1], [], []>} : vector<32x128xbf16>, vector<128x512xbf16>, vector<32x512xf32> -> vector<32x512xf32>
    %c0_50 = arith.constant 0 : index
    %c0_51 = arith.constant 0 : index
    %165 = vector.load %arg10[%c0_50, %c0_51] : memref<1x512xf32, #tpu.memory_space<vmem>>, vector<1x512xf32>
    %166 = vector.broadcast %165 : vector<1x512xf32> to vector<32x512xf32>
    %167 = arith.addf %164, %166 : vector<32x512xf32>
    %cst_52 = arith.constant 0.000000e+00 : f32
    %168 = vector.broadcast %cst_52 : f32 to vector<32x512xf32>
    %169 = arith.maximumf %167, %168 : vector<32x512xf32>
    %170 = arith.truncf %169 : vector<32x512xf32> to vector<32x512xbf16>
    %c0_53 = arith.constant 0 : index
    %c0_54 = arith.constant 0 : index
    %171 = vector.load %arg11[%c0_53, %c0_54] : memref<512x128xbf16, #tpu.memory_space<vmem>>, vector<512x128xbf16>
    %cst_55 = arith.constant dense<0.000000e+00> : vector<32x128xf32>
    %172 = tpu.matmul %170, %171, %cst_55 {dimension_numbers = #tpu.dot_dimension_numbers<[1], [0], [0], [1], [0, 0, 1, 1], [], []>} : vector<32x512xbf16>, vector<512x128xbf16>, vector<32x128xf32> -> vector<32x128xf32>
    %c0_56 = arith.constant 0 : index
    %c0_57 = arith.constant 0 : index
    %173 = vector.load %arg12[%c0_56, %c0_57] : memref<1x128xf32, #tpu.memory_space<vmem>>, vector<1x128xf32>
    %174 = vector.broadcast %173 : vector<1x128xf32> to vector<32x128xf32>
    %175 = arith.addf %172, %174 : vector<32x128xf32>
    %176 = arith.addf %137, %175 : vector<32x128xf32>
    %177 = vector.shape_cast %176 : vector<32x128xf32> to vector<4x8x128xf32>
    %c0_58 = arith.constant 0 : index
    %c0_59 = arith.constant 0 : index
    %c0_60 = arith.constant 0 : index
    %178 = vector.load %arg13[%c0_58, %c0_59, %c0_60] : memref<4x8x128xf32, #tpu.memory_space<vmem>>, vector<4x8x128xf32>
    tpu.vector_store %arg13[%c0_58, %c0_59, %c0_60], %177 {strides = array<i32>} : memref<4x8x128xf32, #tpu.memory_space<vmem>>, vector<4x8x128xf32>,
    return
  }
  func.func @transform_0(%arg0: i32) -> (i32, i32, i32) {
    %c0_i32 = arith.constant 0 : i32
    %c0_i32_0 = arith.constant 0 : i32
    %c0_i32_1 = arith.constant 0 : i32
    return %arg0, %c0_i32, %c0_i32_0 : i32, i32, i32
  }
  func.func @transform_1(%arg0: i32) -> (i32, i32) {
    %c0_i32 = arith.constant 0 : i32
    %c0_i32_0 = arith.constant 0 : i32
    %c0_i32_1 = arith.constant 0 : i32
    return %c0_i32, %c0_i32_0 : i32, i32
  }
  func.func @transform_2(%arg0: i32) -> (i32, i32) {
    %c0_i32 = arith.constant 0 : i32
    %c0_i32_0 = arith.constant 0 : i32
    %c0_i32_1 = arith.constant 0 : i32
    return %c0_i32, %c0_i32_0 : i32, i32
  }
  func.func @transform_3(%arg0: i32) -> (i32, i32) {
    %c0_i32 = arith.constant 0 : i32
    %c0_i32_0 = arith.constant 0 : i32
    %c0_i32_1 = arith.constant 0 : i32
    return %c0_i32, %c0_i32_0 : i32, i32
  }
  func.func @transform_4(%arg0: i32) -> (i32, i32) {
    %c0_i32 = arith.constant 0 : i32
    %c0_i32_0 = arith.constant 0 : i32
    %c0_i32_1 = arith.constant 0 : i32
    return %c0_i32, %c0_i32_0 : i32, i32
  }
  func.func @transform_5(%arg0: i32) -> (i32, i32) {
    %c0_i32 = arith.constant 0 : i32
    %c0_i32_0 = arith.constant 0 : i32
    %c0_i32_1 = arith.constant 0 : i32
    return %c0_i32, %c0_i32_0 : i32, i32
  }
  func.func @transform_6(%arg0: i32) -> (i32, i32) {
    %c0_i32 = arith.constant 0 : i32
    %c0_i32_0 = arith.constant 0 : i32
    %c0_i32_1 = arith.constant 0 : i32
    return %c0_i32, %c0_i32_0 : i32, i32
  }
  func.func @transform_7(%arg0: i32) -> (i32, i32) {
    %c0_i32 = arith.constant 0 : i32
    %c0_i32_0 = arith.constant 0 : i32
    %c0_i32_1 = arith.constant 0 : i32
    return %c0_i32, %c0_i32_0 : i32, i32
  }
  func.func @transform_8(%arg0: i32) -> (i32, i32) {
    %c0_i32 = arith.constant 0 : i32
    %c0_i32_0 = arith.constant 0 : i32
    %c0_i32_1 = arith.constant 0 : i32
    return %c0_i32, %c0_i32_0 : i32, i32
  }
  func.func @transform_9(%arg0: i32) -> (i32, i32) {
    %c0_i32 = arith.constant 0 : i32
    %c0_i32_0 = arith.constant 0 : i32
    %c0_i32_1 = arith.constant 0 : i32
    return %c0_i32, %c0_i32_0 : i32, i32
  }
  func.func @transform_10(%arg0: i32) -> (i32, i32) {
    %c0_i32 = arith.constant 0 : i32
    %c0_i32_0 = arith.constant 0 : i32
    %c0_i32_1 = arith.constant 0 : i32
    return %c0_i32, %c0_i32_0 : i32, i32
  }
  func.func @transform_11(%arg0: i32) -> (i32, i32) {
    %c0_i32 = arith.constant 0 : i32
    %c0_i32_0 = arith.constant 0 : i32
    %c0_i32_1 = arith.constant 0 : i32
    return %c0_i32, %c0_i32_0 : i32, i32
  }
  func.func @transform_12(%arg0: i32) -> (i32, i32, i32) {
    %c0_i32 = arith.constant 0 : i32
    %c0_i32_0 = arith.constant 0 : i32
    %c0_i32_1 = arith.constant 0 : i32
    return %arg0, %c0_i32, %c0_i32_0 : i32, i32, i32
  }
}

</mosaic_0001>

<llo_original>
// kernel: tpu_custom_call.1
$region0: #{tpu_custom_call.1}
  #allocation0 [shape = 'u32[]', space=smem, size = 0x4, offset = 0x4, fixed_abs, tag = 'smem constant byte address 0x4 - core index']
  #allocation1 [shape = 'u32[144,128]{1,0:T(1,128)}', space=vmem, size = 0x12000, scoped, tag = 'internal scratch']
  %s0 = inlined_call_operand.hbm [shape: f32[4,8,128], index: 0, kind: input, shape index: {}]
  %s1 = inlined_call_operand.vmem [shape: f32[1,128], index: 1, kind: input, shape index: {}]
  %s2 = inlined_call_operand.vmem [shape: f32[1,128], index: 2, kind: input, shape index: {}]
  %s3 = inlined_call_operand.hbm [shape: bf16[128,384], index: 3, kind: input, shape index: {}]
  %s4 = inlined_call_operand.hbm [shape: bf16[128,128], index: 4, kind: input, shape index: {}]
  %s5 = inlined_call_operand.vmem [shape: f32[1,128], index: 5, kind: input, shape index: {}]
  %s6 = inlined_call_operand.vmem [shape: f32[1,128], index: 6, kind: input, shape index: {}]
  %s7 = inlined_call_operand.vmem [shape: f32[1,128], index: 7, kind: input, shape index: {}]
  %s8 = inlined_call_operand.hbm [shape: bf16[128,512], index: 8, kind: input, shape index: {}]
  %s9 = inlined_call_operand.vmem [shape: f32[1,512], index: 9, kind: input, shape index: {}]
  %s10 = inlined_call_operand.hbm [shape: bf16[512,128], index: 10, kind: input, shape index: {}]
  %s11 = inlined_call_operand.vmem [shape: f32[1,128], index: 11, kind: input, shape index: {}]
  %s12 = inlined_call_operand.hbm [shape: f32[4,8,128], index: 12, kind: output, shape index: {}]
  %s13 = sld [smem:[#allocation0]]
  $region78: #{tpu_custom_call.1} parent=0
    _
  %s15 = ssub.s32 1, %s13
  %s16 = scalar_select 0, %s15, %s13
  $region1: #{tpu_custom_call.1} parent=0
    #allocation2 [shape = 'u8[16384]{0}', space=vmem, size = 0x4000, scoped, tag = 'input window, operand 0, single buffered']
    #allocation3 [shape = 's32[1]{0}', space=sflag, size = 0x4, scoped, tag = 'scoped memory for tpu_custom_call.1']
    #allocation4 [shape = 's32[1]{0}', space=sflag, size = 0x4, scoped, tag = 'scoped memory for tpu_custom_call.1']
    #allocation5 [shape = 'u8[98304]{0}', space=vmem, size = 0x18000, scoped, tag = 'input window, operand 3, single buffered']
    #allocation6 [shape = 's32[1]{0}', space=sflag, size = 0x4, scoped, tag = 'scoped memory for tpu_custom_call.1']
    #allocation7 [shape = 'u8[32768]{0}', space=vmem, size = 0x8000, scoped, tag = 'input window, operand 4, single buffered']
    #allocation8 [shape = 'u8[131072]{0}', space=vmem, size = 0x20000, scoped, tag = 'input window, operand 8, single buffered']
    #allocation9 [shape = 's32[1]{0}', space=sflag, size = 0x4, scoped, tag = 'scoped memory for tpu_custom_call.1']
    #allocation10 [shape = 'u8[131072]{0}', space=vmem, size = 0x20000, scoped, tag = 'input window, operand 10, single buffered']
    #allocation11 [shape = 'u8[16384]{0}', space=vmem, size = 0x4000, scoped, tag = 'output window, operand 0, single buffered']
    %17 = vsyncpa [#allocation3], 0
    %18 = vsyncpa [#allocation6], 0
    %19 = vsyncpa [#allocation9], 0
    %20 = vsyncpa [#allocation4], 0
    // Predicated region
    $region2: #{tpu_custom_call.1} parent=1 // pred_check
      _
    $region3: #{tpu_custom_call.1} parent=1 // pred_check_branch
      %22 = sbr.rel (0) target = $region5
    $region4: #{tpu_custom_call.1} parent=1 // pred_region
      %s24 = ssub.s32 512, 512
      %25 = vsyncadd [#allocation3], %s24
      %s26 = sshll.u32 [#allocation2], 4
      %s27 = int_to_ptr.vmem [resolvable:$true] %s26
      %32 = dma.hbm_to_vmem [thread:$0]  %s0, 512, %s27, [#allocation3], 128, 128, 8
    $region5: #{tpu_custom_call.1} parent=1 // pred_fallthru
      _
    // Predicated region
    $region6: #{tpu_custom_call.1} parent=1 // pred_check
      _
    $region7: #{tpu_custom_call.1} parent=1 // pred_check_branch
      %34 = sbr.rel (0) target = $region9
    $region8: #{tpu_custom_call.1} parent=1 // pred_region
      _
    $region9: #{tpu_custom_call.1} parent=1 // pred_fallthru
      _
    // Predicated region
    $region10: #{tpu_custom_call.1} parent=1 // pred_check
      _
    $region11: #{tpu_custom_call.1} parent=1 // pred_check_branch
      %36 = sbr.rel (0) target = $region13
    $region12: #{tpu_custom_call.1} parent=1 // pred_region
      _
    $region13: #{tpu_custom_call.1} parent=1 // pred_fallthru
      _
    // Predicated region
    $region14: #{tpu_custom_call.1} parent=1 // pred_check
      _
    $region15: #{tpu_custom_call.1} parent=1 // pred_check_branch
      %38 = sbr.rel (0) target = $region17
    $region16: #{tpu_custom_call.1} parent=1 // pred_region
      %s40 = ssub.s32 3072, 3072
      %41 = vsyncadd [#allocation6], %s40
      %s42 = sshll.u32 [#allocation5], 4
      %s43 = int_to_ptr.vmem [resolvable:$true] %s42
      %48 = dma.hbm_to_vmem [thread:$0]  %s3, 3072, %s43, [#allocation6], 192, 192, 12
    $region17: #{tpu_custom_call.1} parent=1 // pred_fallthru
      _
    // Predicated region
    $region18: #{tpu_custom_call.1} parent=1 // pred_check
      _
    $region19: #{tpu_custom_call.1} parent=1 // pred_check_branch
      %50 = sbr.rel (0) target = $region21
    $region20: #{tpu_custom_call.1} parent=1 // pred_region
      %s52 = ssub.s32 1024, 1024
      %53 = vsyncadd [#allocation6], %s52
      %s54 = sshll.u32 [#allocation7], 4
      %s55 = int_to_ptr.vmem [resolvable:$true] %s54
      %60 = dma.hbm_to_vmem [thread:$0]  %s4, 1024, %s55, [#allocation6], 64, 64, 4
    $region21: #{tpu_custom_call.1} parent=1 // pred_fallthru
      _
    // Predicated region
    $region22: #{tpu_custom_call.1} parent=1 // pred_check
      _
    $region23: #{tpu_custom_call.1} parent=1 // pred_check_branch
      %62 = sbr.rel (0) target = $region25
    $region24: #{tpu_custom_call.1} parent=1 // pred_region
      _
    $region25: #{tpu_custom_call.1} parent=1 // pred_fallthru
      _
    // Predicated region
    $region26: #{tpu_custom_call.1} parent=1 // pred_check
      _
    $region27: #{tpu_custom_call.1} parent=1 // pred_check_branch
      %64 = sbr.rel (0) target = $region29
    $region28: #{tpu_custom_call.1} parent=1 // pred_region
      _
    $region29: #{tpu_custom_call.1} parent=1 // pred_fallthru
      _
    // Predicated region
    $region30: #{tpu_custom_call.1} parent=1 // pred_check
      _
    $region31: #{tpu_custom_call.1} parent=1 // pred_check_branch
      %66 = sbr.rel (0) target = $region33
    $region32: #{tpu_custom_call.1} parent=1 // pred_region
      _
    $region33: #{tpu_custom_call.1} parent=1 // pred_fallthru
      _
    // Predicated region
    $region34: #{tpu_custom_call.1} parent=1 // pred_check
      _
    $region35: #{tpu_custom_call.1} parent=1 // pred_check_branch
      %68 = sbr.rel (0) target = $region37
    $region36: #{tpu_custom_call.1} parent=1 // pred_region
      %s70 = ssub.s32 4096, 4096
      %71 = vsyncadd [#allocation9], %s70
      %s72 = sshll.u32 [#allocation8], 4
      %s73 = int_to_ptr.vmem [resolvable:$true] %s72
      %78 = dma.hbm_to_vmem [thread:$0]  %s8, 4096, %s73, [#allocation9], 256, 256, 16
    $region37: #{tpu_custom_call.1} parent=1 // pred_fallthru
      _
    // Predicated region
    $region38: #{tpu_custom_call.1} parent=1 // pred_check
      _
    $region39: #{tpu_custom_call.1} parent=1 // pred_check_branch
      %80 = sbr.rel (0) target = $region41
    $region40: #{tpu_custom_call.1} parent=1 // pred_region
      _
    $region41: #{tpu_custom_call.1} parent=1 // pred_fallthru
      _
    // Predicated region
    $region42: #{tpu_custom_call.1} parent=1 // pred_check
      _
    $region43: #{tpu_custom_call.1} parent=1 // pred_check_branch
      %82 = sbr.rel (0) target = $region45
    $region44: #{tpu_custom_call.1} parent=1 // pred_region
      %s84 = ssub.s32 4096, 4096
      %85 = vsyncadd [#allocation9], %s84
      %s86 = sshll.u32 [#allocation10], 4
      %s87 = int_to_ptr.vmem [resolvable:$true] %s86
      %92 = dma.hbm_to_vmem [thread:$0]  %s10, 4096, %s87, [#allocation9], 64, 64, 4
    $region45: #{tpu_custom_call.1} parent=1 // pred_fallthru
      _
    // Predicated region
    $region46: #{tpu_custom_call.1} parent=1 // pred_check
      _
    $region47: #{tpu_custom_call.1} parent=1 // pred_check_branch
      %94 = sbr.rel (0) target = $region49
    $region48: #{tpu_custom_call.1} parent=1 // pred_region
      _
    $region49: #{tpu_custom_call.1} parent=1 // pred_fallthru
      _
    // Predicated region
    $region50: #{tpu_custom_call.1} parent=1 // pred_check
      _
    $region51: #{tpu_custom_call.1} parent=1 // pred_check_branch
      %96 = sbr.rel (0) target = $region53
    $region52: #{tpu_custom_call.1} parent=1 // pred_region
      %97 = dma.done [#allocation3], 512
    $region53: #{tpu_custom_call.1} parent=1 // pred_fallthru
      _
    // Predicated region
    $region54: #{tpu_custom_call.1} parent=1 // pred_check
      _
    $region55: #{tpu_custom_call.1} parent=1 // pred_check_branch
      %99 = sbr.rel (0) target = $region57
    $region56: #{tpu_custom_call.1} parent=1 // pred_region
      %100 = dma.done [#allocation6], 3072
    $region57: #{tpu_custom_call.1} parent=1 // pred_fallthru
      _
    // Predicated region
    $region58: #{tpu_custom_call.1} parent=1 // pred_check
      _
    $region59: #{tpu_custom_call.1} parent=1 // pred_check_branch
      %102 = sbr.rel (0) target = $region61
    $region60: #{tpu_custom_call.1} parent=1 // pred_region
      %103 = dma.done [#allocation6], 1024
    $region61: #{tpu_custom_call.1} parent=1 // pred_fallthru
      _
    // Predicated region
    $region62: #{tpu_custom_call.1} parent=1 // pred_check
      _
    $region63: #{tpu_custom_call.1} parent=1 // pred_check_branch
      %105 = sbr.rel (0) target = $region65
    $region64: #{tpu_custom_call.1} parent=1 // pred_region
      %106 = dma.done [#allocation9], 4096
    $region65: #{tpu_custom_call.1} parent=1 // pred_fallthru
      _
    // Predicated region
    $region66: #{tpu_custom_call.1} parent=1 // pred_check
      _
    $region67: #{tpu_custom_call.1} parent=1 // pred_check_branch
      %108 = sbr.rel (0) target = $region69
    $region68: #{tpu_custom_call.1} parent=1 // pred_region
      %109 = dma.done [#allocation9], 4096
    $region69: #{tpu_custom_call.1} parent=1 // pred_fallthru
      _
    %v111 = vld [vmem:[#allocation2] sm:$0xff]
    %v112 = vld [vmem:[#allocation2 + $0x8] sm:$0xff]
    %v113 = vld [vmem:[#allocation2 + $0x10] sm:$0xff]
    %v114 = vld [vmem:[#allocation2 + $0x18] sm:$0xff]
    %v115 = vld [vmem:[%s1] sm:$0x1]
    %v116 = vld [vmem:[%s2] sm:$0x1]
    %117 = vadd.xlane.f32.xlu0 %v111
    %v118 = vpop.xlane.xlu0 %117
    %119 = vadd.xlane.f32.xlu0 %v112
    %v120 = vpop.xlane.xlu0 %119
    %121 = vadd.xlane.f32.xlu0 %v113
    %v122 = vpop.xlane.xlu0 %121
    %123 = vadd.xlane.f32.xlu0 %v114
    %v124 = vpop.xlane.xlu0 %123
    %v125 = vrcp.pop 128.0
    %v126 = vmul.f32 %v118, %v125
    %v127 = vmul.f32 %v120, %v125
    %v128 = vmul.f32 %v122, %v125
    %v129 = vmul.f32 %v124, %v125
    %v130 = vsub.f32 %v111, %v126
    %v131 = vsub.f32 %v112, %v127
    %v132 = vsub.f32 %v113, %v128
    %v133 = vsub.f32 %v114, %v129
    %v134 = vmul.f32 %v130, %v130
    %v135 = vmul.f32 %v131, %v131
    %v136 = vmul.f32 %v132, %v132
    %v137 = vmul.f32 %v133, %v133
    %138 = vadd.xlane.f32.xlu0 %v134
    %v139 = vpop.xlane.xlu0 %138
    %140 = vadd.xlane.f32.xlu0 %v135
    %v141 = vpop.xlane.xlu0 %140
    %142 = vadd.xlane.f32.xlu0 %v136
    %v143 = vpop.xlane.xlu0 %142
    %144 = vadd.xlane.f32.xlu0 %v137
    %v145 = vpop.xlane.xlu0 %144
    %v146 = vmul.f32 %v139, %v125
    %v147 = vmul.f32 %v141, %v125
    %v148 = vmul.f32 %v143, %v125
    %v149 = vmul.f32 %v145, %v125
    %v150 = vadd.f32 %v146, 1e-05
    %v151 = vadd.f32 %v147, 1e-05
    %v152 = vadd.f32 %v148, 1e-05
    %v153 = vadd.f32 %v149, 1e-05
    %v154 = vrsqrt.pop %v150
    %v155 = vrsqrt.pop %v151
    %v156 = vrsqrt.pop %v152
    %v157 = vrsqrt.pop %v153
    %v158 = vmul.f32 %v130, %v154
    %v159 = vmul.f32 %v131, %v155
    %v160 = vmul.f32 %v132, %v156
    %v161 = vmul.f32 %v133, %v157
    %v163 = vlaneseq
    %v164 = vshrl.u32 %v163, 7
    %v165 = vsub.s32 0, %v164
    %v166 = vrot.slane %v115, %v165
    %v168 = vmul.f32 %v158, %v166
    %v169 = vmul.f32 %v159, %v166
    %v170 = vmul.f32 %v160, %v166
    %v171 = vmul.f32 %v161, %v166
    %v173 = vlaneseq
    %v174 = vshrl.u32 %v173, 7
    %v175 = vsub.s32 0, %v174
    %v176 = vrot.slane %v116, %v175
    %v178 = vadd.f32 %v168, %v176
    %v179 = vadd.f32 %v169, %v176
    %v180 = vadd.f32 %v170, %v176
    %v181 = vadd.f32 %v171, %v176
    %v182 = vpack.c.bf16 %v179, %v178
    %v183 = vpack.c.bf16 %v181, %v180
    %v184 = vld [vmem:[#allocation5] sm:$0xff]
    %v185 = vld [vmem:[#allocation5 + $0x8] sm:$0xf]
    %v186 = vld [vmem:[#allocation5 + $0xc] sm:$0xff]
    %v187 = vld [vmem:[#allocation5 + $0x14] sm:$0xf]
    %v188 = vld [vmem:[#allocation5 + $0x18] sm:$0xff]
    %v189 = vld [vmem:[#allocation5 + $0x20] sm:$0xf]
    %v190 = vld [vmem:[#allocation5 + $0x24] sm:$0xff]
    %v191 = vld [vmem:[#allocation5 + $0x2c] sm:$0xf]
    %v192 = vld [vmem:[#allocation5 + $0x30] sm:$0xff]
    %v193 = vld [vmem:[#allocation5 + $0x38] sm:$0xf]
    %v194 = vld [vmem:[#allocation5 + $0x3c] sm:$0xff]
    %v195 = vld [vmem:[#allocation5 + $0x44] sm:$0xf]
    %v196 = vld [vmem:[#allocation5 + $0x48] sm:$0xff]
    %v197 = vld [vmem:[#allocation5 + $0x50] sm:$0xf]
    %v198 = vld [vmem:[#allocation5 + $0x54] sm:$0xff]
    %v199 = vld [vmem:[#allocation5 + $0x5c] sm:$0xf]
    %v200 = vld [vmem:[#allocation5 + $0x60] sm:$0xff]
    %v201 = vld [vmem:[#allocation5 + $0x68] sm:$0xf]
    %v202 = vld [vmem:[#allocation5 + $0x6c] sm:$0xff]
    %v203 = vld [vmem:[#allocation5 + $0x74] sm:$0xf]
    %v204 = vld [vmem:[#allocation5 + $0x78] sm:$0xff]
    %v205 = vld [vmem:[#allocation5 + $0x80] sm:$0xf]
    %v206 = vld [vmem:[#allocation5 + $0x84] sm:$0xff]
    %v207 = vld [vmem:[#allocation5 + $0x8c] sm:$0xf]
    %v208 = vld [vmem:[#allocation5 + $0x90] sm:$0xff]
    %v209 = vld [vmem:[#allocation5 + $0x98] sm:$0xf]
    %v210 = vld [vmem:[#allocation5 + $0x9c] sm:$0xff]
    %v211 = vld [vmem:[#allocation5 + $0xa4] sm:$0xf]
    %v212 = vld [vmem:[#allocation5 + $0xa8] sm:$0xff]
    %v213 = vld [vmem:[#allocation5 + $0xb0] sm:$0xf]
    %v214 = vld [vmem:[#allocation5 + $0xb4] sm:$0xff]
    %v215 = vld [vmem:[#allocation5 + $0xbc] sm:$0xf]
    %v248 = vunpack.c.l.b16 %v184
    %v249 = vunpack.c.h.b16 %v184
    %v250 = vunpack.c.l.b16 %v185
    %v251 = vunpack.c.l.b16 %v186
    %v252 = vunpack.c.h.b16 %v186
    %v253 = vunpack.c.l.b16 %v187
    %v254 = vunpack.c.l.b16 %v188
    %v255 = vunpack.c.h.b16 %v188
    %v256 = vunpack.c.l.b16 %v189
    %v257 = vunpack.c.l.b16 %v190
    %v258 = vunpack.c.h.b16 %v190
    %v259 = vunpack.c.l.b16 %v191
    %v260 = vunpack.c.l.b16 %v192
    %v261 = vunpack.c.h.b16 %v192
    %v262 = vunpack.c.l.b16 %v193
    %v263 = vunpack.c.l.b16 %v194
    %v264 = vunpack.c.h.b16 %v194
    %v265 = vunpack.c.l.b16 %v195
    %v266 = vunpack.c.l.b16 %v196
    %v267 = vunpack.c.h.b16 %v196
    %v268 = vunpack.c.l.b16 %v197
    %v269 = vunpack.c.l.b16 %v198
    %v270 = vunpack.c.h.b16 %v198
    %v271 = vunpack.c.l.b16 %v199
    %v272 = vunpack.c.l.b16 %v200
    %v273 = vunpack.c.h.b16 %v200
    %v274 = vunpack.c.l.b16 %v201
    %v275 = vunpack.c.l.b16 %v202
    %v276 = vunpack.c.h.b16 %v202
    %v277 = vunpack.c.l.b16 %v203
    %v278 = vunpack.c.l.b16 %v204
    %v279 = vunpack.c.h.b16 %v204
    %v280 = vunpack.c.l.b16 %v205
    %v281 = vunpack.c.l.b16 %v206
    %v282 = vunpack.c.h.b16 %v206
    %v283 = vunpack.c.l.b16 %v207
    %v284 = vunpack.c.l.b16 %v208
    %v285 = vunpack.c.h.b16 %v208
    %v286 = vunpack.c.l.b16 %v209
    %v287 = vunpack.c.l.b16 %v210
    %v288 = vunpack.c.h.b16 %v210
    %v289 = vunpack.c.l.b16 %v211
    %v290 = vunpack.c.l.b16 %v212
    %v291 = vunpack.c.h.b16 %v212
    %v292 = vunpack.c.l.b16 %v213
    %v293 = vunpack.c.l.b16 %v214
    %v294 = vunpack.c.h.b16 %v214
    %v295 = vunpack.c.l.b16 %v215
    %v296 = vpack.c.b16 %v251, %v248
    %v297 = vpack.c.b16 %v252, %v249
    %v298 = vpack.c.b16 %v253, %v250
    %v299 = vpack.c.b16 %v257, %v254
    %v300 = vpack.c.b16 %v258, %v255
    %v301 = vpack.c.b16 %v259, %v256
    %v302 = vpack.c.b16 %v263, %v260
    %v303 = vpack.c.b16 %v264, %v261
    %v304 = vpack.c.b16 %v265, %v262
    %v305 = vpack.c.b16 %v269, %v266
    %v306 = vpack.c.b16 %v270, %v267
    %v307 = vpack.c.b16 %v271, %v268
    %v308 = vpack.c.b16 %v275, %v272
    %v309 = vpack.c.b16 %v276, %v273
    %v310 = vpack.c.b16 %v277, %v274
    %v311 = vpack.c.b16 %v281, %v278
    %v312 = vpack.c.b16 %v282, %v279
    %v313 = vpack.c.b16 %v283, %v280
    %v314 = vpack.c.b16 %v287, %v284
    %v315 = vpack.c.b16 %v288, %v285
    %v316 = vpack.c.b16 %v289, %v286
    %v317 = vpack.c.b16 %v293, %v290
    %v318 = vpack.c.b16 %v294, %v291
    %v319 = vpack.c.b16 %v295, %v292
    %344 = vmatprep.subr.bf16.mxu0 %v297
    %345 = vmatpush1.bf16.msra.mxu0 %v296
    %346 = vmatprep.subr.bf16.mxu0 %v300
    %347 = vmatpush1.bf16.msra.mxu0 %v299
    %348 = vmatprep.subr.bf16.mxu0 %v303
    %349 = vmatpush1.bf16.msra.mxu0 %v302
    %350 = vmatprep.subr.bf16.mxu0 %v306
    %351 = vmatpush1.bf16.msra.mxu0 %v305
    %352 = vmatprep.subr.bf16.mxu0 %v309
    %353 = vmatpush1.bf16.msra.mxu0 %v308
    %354 = vmatprep.subr.bf16.mxu0 %v312
    %355 = vmatpush1.bf16.msra.mxu0 %v311
    %356 = vmatprep.subr.bf16.mxu0 %v315
    %357 = vmatpush1.bf16.msra.mxu0 %v314
    %358 = vmatprep.subr.bf16.mxu0 %v318
    %359 = vmatpush1.bf16.msra.mxu0 %v317
    %360 = vmatprep.subr.bf16.mxu0 0
    %361 = vmatpush1.bf16.msra.mxu0 0
    %362 = vmatprep.subr.bf16.mxu0 0
    %363 = vmatpush1.bf16.msra.mxu0 0
    %364 = vmatprep.subr.bf16.mxu0 0
    %365 = vmatpush1.bf16.msra.mxu0 0
    %366 = vmatprep.subr.bf16.mxu0 0
    %367 = vmatpush1.bf16.msra.mxu0 0
    %368 = vmatprep.subr.bf16.mxu0 0
    %369 = vmatpush1.bf16.msra.mxu0 0
    %370 = vmatprep.subr.bf16.mxu0 0
    %371 = vmatpush1.bf16.msra.mxu0 0
    %372 = vmatprep.subr.bf16.mxu0 0
    %373 = vmatpush1.bf16.msra.mxu0 0
    %374 = vmatprep.subr.bf16.mxu0 0
    %375 = vmatpush1.bf16.msra.mxu0 0
    %376 = vmatprep.mubr.bf16.mxu0 0
    %377 = vmatmul.mubr.bf16.gmra.mrb[0].mxu0 %v182
    %v378 = vpop.f32.mrb[0].mxu0
    %v379 = vadd.f32 0.0, %v378
    %v380 = vpop.f32.mrb[0].mxu0
    %v381 = vadd.f32 0.0, %v380
    %v382 = vpop.f32.mrb[0].mxu0
    %v383 = vadd.f32 0.0, %v382
    %v384 = vpop.f32.mrb[0].mxu0
    %v385 = vadd.f32 0.0, %v384
    %386 = vmatprep.mubr.bf16.mxu0 0
    %387 = vmatmul.mubr.bf16.gmra.mrb[0].mxu0 %v183
    %v388 = vpop.f32.mrb[0].mxu0
    %v389 = vadd.f32 0.0, %v388
    %v390 = vpop.f32.mrb[0].mxu0
    %v391 = vadd.f32 0.0, %v390
    %v392 = vpop.f32.mrb[0].mxu0
    %v393 = vadd.f32 0.0, %v392
    %v394 = vpop.f32.mrb[0].mxu0
    %v395 = vadd.f32 0.0, %v394
    %396 = vdwg.mxu0
    %397 = vmatprep.subr.bf16.mxu0 0
    %398 = vmatpush1.bf16.msra.mxu0 %v298
    %399 = vmatprep.subr.bf16.mxu0 0
    %400 = vmatpush1.bf16.msra.mxu0 %v301
    %401 = vmatprep.subr.bf16.mxu0 0
    %402 = vmatpush1.bf16.msra.mxu0 %v304
    %403 = vmatprep.subr.bf16.mxu0 0
    %404 = vmatpush1.bf16.msra.mxu0 %v307
    %405 = vmatprep.subr.bf16.mxu0 0
    %406 = vmatpush1.bf16.msra.mxu0 %v310
    %407 = vmatprep.subr.bf16.mxu0 0
    %408 = vmatpush1.bf16.msra.mxu0 %v313
    %409 = vmatprep.subr.bf16.mxu0 0
    %410 = vmatpush1.bf16.msra.mxu0 %v316
    %411 = vmatprep.subr.bf16.mxu0 0
    %412 = vmatpush1.bf16.msra.mxu0 %v319
    %413 = vmatprep.subr.bf16.mxu0 0
    %414 = vmatpush1.bf16.msra.mxu0 0
    %415 = vmatprep.subr.bf16.mxu0 0
    %416 = vmatpush1.bf16.msra.mxu0 0
    %417 = vmatprep.subr.bf16.mxu0 0
    %418 = vmatpush1.bf16.msra.mxu0 0
    %419 = vmatprep.subr.bf16.mxu0 0
    %420 = vmatpush1.bf16.msra.mxu0 0
    %421 = vmatprep.subr.bf16.mxu0 0
    %422 = vmatpush1.bf16.msra.mxu0 0
    %423 = vmatprep.subr.bf16.mxu0 0
    %424 = vmatpush1.bf16.msra.mxu0 0
    %425 = vmatprep.subr.bf16.mxu0 0
    %426 = vmatpush1.bf16.msra.mxu0 0
    %427 = vmatprep.subr.bf16.mxu0 0
    %428 = vmatpush1.bf16.msra.mxu0 0
    %429 = vmatprep.mubr.bf16.mxu0 0
    %430 = vmatmul.mubr.bf16.gmra.mrb[0].mxu0 %v182
    %v431 = vpop.f32.mrb[0].mxu0
    %v432 = vadd.f32 0.0, %v431
    %v433 = vpop.f32.mrb[0].mxu0
    %v434 = vpop.f32.mrb[0].mxu0
    %v435 = vadd.f32 0.0, %v434
    %v436 = vpop.f32.mrb[0].mxu0
    %437 = vmatprep.mubr.bf16.mxu0 0
    %438 = vmatmul.mubr.bf16.gmra.mrb[0].mxu0 %v183
    %v439 = vpop.f32.mrb[0].mxu0
    %v440 = vadd.f32 0.0, %v439
    %v441 = vpop.f32.mrb[0].mxu0
    %v442 = vpop.f32.mrb[0].mxu0
    %v443 = vadd.f32 0.0, %v442
    %v444 = vpop.f32.mrb[0].mxu0
    %445 = vdwg.mxu0
    %v446 = vpack.c.bf16 %v383, %v379
    %v447 = vpack.c.bf16 %v385, %v381
    %v448 = vpack.c.bf16 %v435, %v432
    %v449 = vpack.c.bf16 %v393, %v389
    %v450 = vpack.c.bf16 %v395, %v391
    %v451 = vpack.c.bf16 %v443, %v440
    %v452 = vlaneseq
    %v453 = vshrl.u32 %v452, 7
    %v454 = vlaneseq
    %v455 = vand.u32 %v454, 127
    %vm456 = vcmp.ge.s32.totalorder %v453, %v455
    %v459 = vunpack.c.l.b16 %v446
    %v460 = vunpack.c.h.b16 %v446
    %v461 = vunpack.c.l.b16 %v449
    %v462 = vunpack.c.h.b16 %v449
    %v463 = vpack.c.b16 %v459, %v459
    %v464 = vpack.c.b16 %v460, %v460
    %v465 = vpack.c.b16 %v461, %v461
    %v466 = vpack.c.b16 %v462, %v462
    %v469 = vunpack.c.l.b16 %v447
    %v470 = vunpack.c.h.b16 %v447
    %v471 = vunpack.c.l.b16 %v450
    %v472 = vunpack.c.h.b16 %v450
    %v473 = vpack.c.b16 %v469, %v469
    %v474 = vpack.c.b16 %v470, %v470
    %v475 = vpack.c.b16 %v471, %v471
    %v476 = vpack.c.b16 %v472, %v472
    %v479 = vunpack.c.l.b16 %v448
    %v480 = vunpack.c.h.b16 %v448
    %v481 = vunpack.c.l.b16 %v451
    %v482 = vunpack.c.h.b16 %v451
    %v483 = vpack.c.b16 %v479, %v479
    %v484 = vpack.c.b16 %v480, %v480
    %v485 = vpack.c.b16 %v481, %v481
    %v486 = vpack.c.b16 %v482, %v482
    %vm487 = vcmask 261120
    %v489 = vsel %vm487, %v463, 0
    %v492 = vsel %vm487, %v473, 0
    %494 = vmatprep.subr.bf16.mxu0 0
    %495 = vmatpush1.bf16.xpose.msra.mxu0 %v492
    %496 = vmatprep.subr.bf16.mxu0 0
    %497 = vmatpush1.bf16.xpose.msra.mxu0 0
    %498 = vmatprep.subr.bf16.mxu0 0
    %499 = vmatpush1.bf16.xpose.msra.mxu0 0
    %500 = vmatprep.subr.bf16.mxu0 0
    %501 = vmatpush1.bf16.xpose.msra.mxu0 0
    %502 = vmatprep.subr.bf16.mxu0 0
    %503 = vmatpush1.bf16.xpose.msra.mxu0 0
    %504 = vmatprep.subr.bf16.mxu0 0
    %505 = vmatpush1.bf16.xpose.msra.mxu0 0
    %506 = vmatprep.subr.bf16.mxu0 0
    %507 = vmatpush1.bf16.xpose.msra.mxu0 0
    %508 = vmatprep.subr.bf16.mxu0 0
    %509 = vmatpush1.bf16.xpose.msra.mxu0 0
    %510 = vmatprep.subr.bf16.mxu0 0
    %511 = vmatpush1.bf16.xpose.msra.mxu0 0
    %512 = vmatprep.subr.bf16.mxu0 0
    %513 = vmatpush1.bf16.xpose.msra.mxu0 0
    %514 = vmatprep.subr.bf16.mxu0 0
    %515 = vmatpush1.bf16.xpose.msra.mxu0 0
    %516 = vmatprep.subr.bf16.mxu0 0
    %517 = vmatpush1.bf16.xpose.msra.mxu0 0
    %518 = vmatprep.subr.bf16.mxu0 0
    %519 = vmatpush1.bf16.xpose.msra.mxu0 0
    %520 = vmatprep.subr.bf16.mxu0 0
    %521 = vmatpush1.bf16.xpose.msra.mxu0 0
    %522 = vmatprep.subr.bf16.mxu0 0
    %523 = vmatpush1.bf16.xpose.msra.mxu0 0
    %524 = vmatprep.subr.bf16.mxu0 0
    %525 = vmatpush1.bf16.xpose.msra.mxu0 0
    %526 = vmatprep.mubr.bf16.mxu0 0
    %527 = vmatmul.mubr.bf16.gmra.mrb[0].mxu0 %v489
    %v528 = vpop.f32.mrb[0].mxu0
    %v529 = vadd.f32 0.0, %v528
    %v530 = vpop.f32.mrb[0].mxu0
    %v531 = vpop.f32.mrb[0].mxu0
    %v532 = vpop.f32.mrb[0].mxu0
    %533 = vdwg.mxu0
    %v535 = vsel %vm487, %v464, 0
    %v538 = vsel %vm487, %v474, 0
    %540 = vmatprep.subr.bf16.mxu0 0
    %541 = vmatpush1.bf16.xpose.msra.mxu0 %v538
    %542 = vmatprep.subr.bf16.mxu0 0
    %543 = vmatpush1.bf16.xpose.msra.mxu0 0
    %544 = vmatprep.subr.bf16.mxu0 0
    %545 = vmatpush1.bf16.xpose.msra.mxu0 0
    %546 = vmatprep.subr.bf16.mxu0 0
    %547 = vmatpush1.bf16.xpose.msra.mxu0 0
    %548 = vmatprep.subr.bf16.mxu0 0
    %549 = vmatpush1.bf16.xpose.msra.mxu0 0
    %550 = vmatprep.subr.bf16.mxu0 0
    %551 = vmatpush1.bf16.xpose.msra.mxu0 0
    %552 = vmatprep.subr.bf16.mxu0 0
    %553 = vmatpush1.bf16.xpose.msra.mxu0 0
    %554 = vmatprep.subr.bf16.mxu0 0
    %555 = vmatpush1.bf16.xpose.msra.mxu0 0
    %556 = vmatprep.subr.bf16.mxu0 0
    %557 = vmatpush1.bf16.xpose.msra.mxu0 0
    %558 = vmatprep.subr.bf16.mxu0 0
    %559 = vmatpush1.bf16.xpose.msra.mxu0 0
    %560 = vmatprep.subr.bf16.mxu0 0
    %561 = vmatpush1.bf16.xpose.msra.mxu0 0
    %562 = vmatprep.subr.bf16.mxu0 0
    %563 = vmatpush1.bf16.xpose.msra.mxu0 0
    %564 = vmatprep.subr.bf16.mxu0 0
    %565 = vmatpush1.bf16.xpose.msra.mxu0 0
    %566 = vmatprep.subr.bf16.mxu0 0
    %567 = vmatpush1.bf16.xpose.msra.mxu0 0
    %568 = vmatprep.subr.bf16.mxu0 0
    %569 = vmatpush1.bf16.xpose.msra.mxu0 0
    %570 = vmatprep.subr.bf16.mxu0 0
    %571 = vmatpush1.bf16.xpose.msra.mxu0 0
    %572 = vmatprep.mubr.bf16.mxu0 0
    %573 = vmatmul.mubr.bf16.gmra.mrb[0].mxu0 %v535
    %v574 = vpop.f32.mrb[0].mxu0
    %v575 = vadd.f32 0.0, %v574
    %v576 = vpop.f32.mrb[0].mxu0
    %v577 = vpop.f32.mrb[0].mxu0
    %v578 = vpop.f32.mrb[0].mxu0
    %579 = vdwg.mxu0
    %v581 = vsel %vm487, %v465, 0
    %v584 = vsel %vm487, %v475, 0
    %586 = vmatprep.subr.bf16.mxu0 0
    %587 = vmatpush1.bf16.xpose.msra.mxu0 %v584
    %588 = vmatprep.subr.bf16.mxu0 0
    %589 = vmatpush1.bf16.xpose.msra.mxu0 0
    %590 = vmatprep.subr.bf16.mxu0 0
    %591 = vmatpush1.bf16.xpose.msra.mxu0 0
    %592 = vmatprep.subr.bf16.mxu0 0
    %593 = vmatpush1.bf16.xpose.msra.mxu0 0
    %594 = vmatprep.subr.bf16.mxu0 0
    %595 = vmatpush1.bf16.xpose.msra.mxu0 0
    %596 = vmatprep.subr.bf16.mxu0 0
    %597 = vmatpush1.bf16.xpose.msra.mxu0 0
    %598 = vmatprep.subr.bf16.mxu0 0
    %599 = vmatpush1.bf16.xpose.msra.mxu0 0
    %600 = vmatprep.subr.bf16.mxu0 0
    %601 = vmatpush1.bf16.xpose.msra.mxu0 0
    %602 = vmatprep.subr.bf16.mxu0 0
    %603 = vmatpush1.bf16.xpose.msra.mxu0 0
    %604 = vmatprep.subr.bf16.mxu0 0
    %605 = vmatpush1.bf16.xpose.msra.mxu0 0
    %606 = vmatprep.subr.bf16.mxu0 0
    %607 = vmatpush1.bf16.xpose.msra.mxu0 0
    %608 = vmatprep.subr.bf16.mxu0 0
    %609 = vmatpush1.bf16.xpose.msra.mxu0 0
    %610 = vmatprep.subr.bf16.mxu0 0
    %611 = vmatpush1.bf16.xpose.msra.mxu0 0
    %612 = vmatprep.subr.bf16.mxu0 0
    %613 = vmatpush1.bf16.xpose.msra.mxu0 0
    %614 = vmatprep.subr.bf16.mxu0 0
    %615 = vmatpush1.bf16.xpose.msra.mxu0 0
    %616 = vmatprep.subr.bf16.mxu0 0
    %617 = vmatpush1.bf16.xpose.msra.mxu0 0
    %618 = vmatprep.mubr.bf16.mxu0 0
    %619 = vmatmul.mubr.bf16.gmra.mrb[0].mxu0 %v581
    %v620 = vpop.f32.mrb[0].mxu0
    %v621 = vadd.f32 0.0, %v620
    %v622 = vpop.f32.mrb[0].mxu0
    %v623 = vpop.f32.mrb[0].mxu0
    %v624 = vpop.f32.mrb[0].mxu0
    %625 = vdwg.mxu0
    %v627 = vsel %vm487, %v466, 0
    %v630 = vsel %vm487, %v476, 0
    %632 = vmatprep.subr.bf16.mxu0 0
    %633 = vmatpush1.bf16.xpose.msra.mxu0 %v630
    %634 = vmatprep.subr.bf16.mxu0 0
    %635 = vmatpush1.bf16.xpose.msra.mxu0 0
    %636 = vmatprep.subr.bf16.mxu0 0
    %637 = vmatpush1.bf16.xpose.msra.mxu0 0
    %638 = vmatprep.subr.bf16.mxu0 0
    %639 = vmatpush1.bf16.xpose.msra.mxu0 0
    %640 = vmatprep.subr.bf16.mxu0 0
    %641 = vmatpush1.bf16.xpose.msra.mxu0 0
    %642 = vmatprep.subr.bf16.mxu0 0
    %643 = vmatpush1.bf16.xpose.msra.mxu0 0
    %644 = vmatprep.subr.bf16.mxu0 0
    %645 = vmatpush1.bf16.xpose.msra.mxu0 0
    %646 = vmatprep.subr.bf16.mxu0 0
    %647 = vmatpush1.bf16.xpose.msra.mxu0 0
    %648 = vmatprep.subr.bf16.mxu0 0
    %649 = vmatpush1.bf16.xpose.msra.mxu0 0
    %650 = vmatprep.subr.bf16.mxu0 0
    %651 = vmatpush1.bf16.xpose.msra.mxu0 0
    %652 = vmatprep.subr.bf16.mxu0 0
    %653 = vmatpush1.bf16.xpose.msra.mxu0 0
    %654 = vmatprep.subr.bf16.mxu0 0
    %655 = vmatpush1.bf16.xpose.msra.mxu0 0
    %656 = vmatprep.subr.bf16.mxu0 0
    %657 = vmatpush1.bf16.xpose.msra.mxu0 0
    %658 = vmatprep.subr.bf16.mxu0 0
    %659 = vmatpush1.bf16.xpose.msra.mxu0 0
    %660 = vmatprep.subr.bf16.mxu0 0
    %661 = vmatpush1.bf16.xpose.msra.mxu0 0
    %662 = vmatprep.subr.bf16.mxu0 0
    %663 = vmatpush1.bf16.xpose.msra.mxu0 0
    %664 = vmatprep.mubr.bf16.mxu0 0
    %665 = vmatmul.mubr.bf16.gmra.mrb[0].mxu0 %v627
    %v666 = vpop.f32.mrb[0].mxu0
    %v667 = vadd.f32 0.0, %v666
    %v668 = vpop.f32.mrb[0].mxu0
    %v669 = vpop.f32.mrb[0].mxu0
    %v670 = vpop.f32.mrb[0].mxu0
    %671 = vdwg.mxu0
    %v672 = vsel %vm456, 1, 0
    %vm673 = vcmp.eq.s32.totalorder %v672, 1
    %v674 = vsel %vm673, %v529, -1e+09
    %v675 = vsel %vm673, %v575, -1e+09
    %v676 = vsel %vm673, %v621, -1e+09
    %v677 = vsel %vm673, %v667, -1e+09
    %vm678 = vcmask 64512
    %v679 = vsel %vm678, %v674, -inf
    %680 = vmax.xlane.f32.xlu0 %v679
    %v681 = vpop.xlane.xlu0 %680
    %v682 = vsel %vm678, %v675, -inf
    %683 = vmax.xlane.f32.xlu0 %v682
    %v684 = vpop.xlane.xlu0 %683
    %v685 = vsel %vm678, %v676, -inf
    %686 = vmax.xlane.f32.xlu0 %v685
    %v687 = vpop.xlane.xlu0 %686
    %v688 = vsel %vm678, %v677, -inf
    %689 = vmax.xlane.f32.xlu0 %v688
    %v690 = vpop.xlane.xlu0 %689
    %v691 = vsub.f32 %v674, %v681
    %v692 = vsub.f32 %v675, %v684
    %v693 = vsub.f32 %v676, %v687
    %v694 = vsub.f32 %v677, %v690
    %v695 = vmul.f32 %v691, 1.442695
    %v696 = vpow.pop %v695
    %v697 = vmul.f32 %v692, 1.442695
    %v698 = vpow.pop %v697
    %v699 = vmul.f32 %v693, 1.442695
    %v700 = vpow.pop %v699
    %v701 = vmul.f32 %v694, 1.442695
    %v702 = vpow.pop %v701
    %v703 = vsel %vm678, %v696, 0.0
    %704 = vadd.xlane.f32.xlu0 %v703
    %v705 = vpop.xlane.xlu0 %704
    %v706 = vsel %vm678, %v698, 0.0
    %707 = vadd.xlane.f32.xlu0 %v706
    %v708 = vpop.xlane.xlu0 %707
    %v709 = vsel %vm678, %v700, 0.0
    %710 = vadd.xlane.f32.xlu0 %v709
    %v711 = vpop.xlane.xlu0 %710
    %v712 = vsel %vm678, %v702, 0.0
    %713 = vadd.xlane.f32.xlu0 %v712
    %v714 = vpop.xlane.xlu0 %713
    %v715 = vrcp.pop %v705
    %v716 = vrcp.pop %v708
    %v717 = vrcp.pop %v711
    %v718 = vrcp.pop %v714
    %v719 = vmul.f32 %v696, %v715
    %v720 = vmul.f32 %v698, %v716
    %v721 = vmul.f32 %v700, %v717
    %v722 = vmul.f32 %v702, %v718
    %v723 = vpack.c.bf16 %v719, %v719
    %v724 = vpack.c.bf16 %v720, %v720
    %v725 = vpack.c.bf16 %v721, %v721
    %v726 = vpack.c.bf16 %v722, %v722
    %v728 = vsel %vm678, %v723, 0
    %vm730 = vcmask 1043456
    %v732 = vsel %vm730, %v483, 0
    %734 = vmatprep.subr.bf16.mxu0 0
    %735 = vmatpush1.bf16.msra.mxu0 %v732
    %736 = vmatprep.subr.bf16.mxu0 0
    %737 = vmatpush1.bf16.msra.mxu0 0
    %738 = vmatprep.subr.bf16.mxu0 0
    %739 = vmatpush1.bf16.msra.mxu0 0
    %740 = vmatprep.subr.bf16.mxu0 0
    %741 = vmatpush1.bf16.msra.mxu0 0
    %742 = vmatprep.subr.bf16.mxu0 0
    %743 = vmatpush1.bf16.msra.mxu0 0
    %744 = vmatprep.subr.bf16.mxu0 0
    %745 = vmatpush1.bf16.msra.mxu0 0
    %746 = vmatprep.subr.bf16.mxu0 0
    %747 = vmatpush1.bf16.msra.mxu0 0
    %748 = vmatprep.subr.bf16.mxu0 0
    %749 = vmatpush1.bf16.msra.mxu0 0
    %750 = vmatprep.subr.bf16.mxu0 0
    %751 = vmatpush1.bf16.msra.mxu0 0
    %752 = vmatprep.subr.bf16.mxu0 0
    %753 = vmatpush1.bf16.msra.mxu0 0
    %754 = vmatprep.subr.bf16.mxu0 0
    %755 = vmatpush1.bf16.msra.mxu0 0
    %756 = vmatprep.subr.bf16.mxu0 0
    %757 = vmatpush1.bf16.msra.mxu0 0
    %758 = vmatprep.subr.bf16.mxu0 0
    %759 = vmatpush1.bf16.msra.mxu0 0
    %760 = vmatprep.subr.bf16.mxu0 0
    %761 = vmatpush1.bf16.msra.mxu0 0
    %762 = vmatprep.subr.bf16.mxu0 0
    %763 = vmatpush1.bf16.msra.mxu0 0
    %764 = vmatprep.subr.bf16.mxu0 0
    %765 = vmatpush1.bf16.msra.mxu0 0
    %766 = vmatprep.mubr.bf16.mxu0 0
    %767 = vmatmul.mubr.bf16.gmra.mrb[0].mxu0 %v728
    %v768 = vpop.f32.mrb[0].mxu0
    %v769 = vadd.f32 0.0, %v768
    %v770 = vpop.f32.mrb[0].mxu0
    %v771 = vpop.f32.mrb[0].mxu0
    %v772 = vpop.f32.mrb[0].mxu0
    %773 = vdwg.mxu0
    %v775 = vsel %vm678, %v724, 0
    %v778 = vsel %vm730, %v484, 0
    %780 = vmatprep.subr.bf16.mxu0 0
    %781 = vmatpush1.bf16.msra.mxu0 %v778
    %782 = vmatprep.subr.bf16.mxu0 0
    %783 = vmatpush1.bf16.msra.mxu0 0
    %784 = vmatprep.subr.bf16.mxu0 0
    %785 = vmatpush1.bf16.msra.mxu0 0
    %786 = vmatprep.subr.bf16.mxu0 0
    %787 = vmatpush1.bf16.msra.mxu0 0
    %788 = vmatprep.subr.bf16.mxu0 0
    %789 = vmatpush1.bf16.msra.mxu0 0
    %790 = vmatprep.subr.bf16.mxu0 0
    %791 = vmatpush1.bf16.msra.mxu0 0
    %792 = vmatprep.subr.bf16.mxu0 0
    %793 = vmatpush1.bf16.msra.mxu0 0
    %794 = vmatprep.subr.bf16.mxu0 0
    %795 = vmatpush1.bf16.msra.mxu0 0
    %796 = vmatprep.subr.bf16.mxu0 0
    %797 = vmatpush1.bf16.msra.mxu0 0
    %798 = vmatprep.subr.bf16.mxu0 0
    %799 = vmatpush1.bf16.msra.mxu0 0
    %800 = vmatprep.subr.bf16.mxu0 0
    %801 = vmatpush1.bf16.msra.mxu0 0
    %802 = vmatprep.subr.bf16.mxu0 0
    %803 = vmatpush1.bf16.msra.mxu0 0
    %804 = vmatprep.subr.bf16.mxu0 0
    %805 = vmatpush1.bf16.msra.mxu0 0
    %806 = vmatprep.subr.bf16.mxu0 0
    %807 = vmatpush1.bf16.msra.mxu0 0
    %808 = vmatprep.subr.bf16.mxu0 0
    %809 = vmatpush1.bf16.msra.mxu0 0
    %810 = vmatprep.subr.bf16.mxu0 0
    %811 = vmatpush1.bf16.msra.mxu0 0
    %812 = vmatprep.mubr.bf16.mxu0 0
    %813 = vmatmul.mubr.bf16.gmra.mrb[0].mxu0 %v775
    %v814 = vpop.f32.mrb[0].mxu0
    %v815 = vadd.f32 0.0, %v814
    %v816 = vpop.f32.mrb[0].mxu0
    %v817 = vpop.f32.mrb[0].mxu0
    %v818 = vpop.f32.mrb[0].mxu0
    %819 = vdwg.mxu0
    %v821 = vsel %vm678, %v725, 0
    %v824 = vsel %vm730, %v485, 0
    %826 = vmatprep.subr.bf16.mxu0 0
    %827 = vmatpush1.bf16.msra.mxu0 %v824
    %828 = vmatprep.subr.bf16.mxu0 0
    %829 = vmatpush1.bf16.msra.mxu0 0
    %830 = vmatprep.subr.bf16.mxu0 0
    %831 = vmatpush1.bf16.msra.mxu0 0
    %832 = vmatprep.subr.bf16.mxu0 0
    %833 = vmatpush1.bf16.msra.mxu0 0
    %834 = vmatprep.subr.bf16.mxu0 0
    %835 = vmatpush1.bf16.msra.mxu0 0
    %836 = vmatprep.subr.bf16.mxu0 0
    %837 = vmatpush1.bf16.msra.mxu0 0
    %838 = vmatprep.subr.bf16.mxu0 0
    %839 = vmatpush1.bf16.msra.mxu0 0
    %840 = vmatprep.subr.bf16.mxu0 0
    %841 = vmatpush1.bf16.msra.mxu0 0
    %842 = vmatprep.subr.bf16.mxu0 0
    %843 = vmatpush1.bf16.msra.mxu0 0
    %844 = vmatprep.subr.bf16.mxu0 0
    %845 = vmatpush1.bf16.msra.mxu0 0
    %846 = vmatprep.subr.bf16.mxu0 0
    %847 = vmatpush1.bf16.msra.mxu0 0
    %848 = vmatprep.subr.bf16.mxu0 0
    %849 = vmatpush1.bf16.msra.mxu0 0
    %850 = vmatprep.subr.bf16.mxu0 0
    %851 = vmatpush1.bf16.msra.mxu0 0
    %852 = vmatprep.subr.bf16.mxu0 0
    %853 = vmatpush1.bf16.msra.mxu0 0
    %854 = vmatprep.subr.bf16.mxu0 0
    %855 = vmatpush1.bf16.msra.mxu0 0
    %856 = vmatprep.subr.bf16.mxu0 0
    %857 = vmatpush1.bf16.msra.mxu0 0
    %858 = vmatprep.mubr.bf16.mxu0 0
    %859 = vmatmul.mubr.bf16.gmra.mrb[0].mxu0 %v821
    %v860 = vpop.f32.mrb[0].mxu0
    %v861 = vadd.f32 0.0, %v860
    %v862 = vpop.f32.mrb[0].mxu0
    %v863 = vpop.f32.mrb[0].mxu0
    %v864 = vpop.f32.mrb[0].mxu0
    %865 = vdwg.mxu0
    %v867 = vsel %vm678, %v726, 0
    %v870 = vsel %vm730, %v486, 0
    %872 = vmatprep.subr.bf16.mxu0 0
    %873 = vmatpush1.bf16.msra.mxu0 %v870
    %874 = vmatprep.subr.bf16.mxu0 0
    %875 = vmatpush1.bf16.msra.mxu0 0
    %876 = vmatprep.subr.bf16.mxu0 0
    %877 = vmatpush1.bf16.msra.mxu0 0
    %878 = vmatprep.subr.bf16.mxu0 0
    %879 = vmatpush1.bf16.msra.mxu0 0
    %880 = vmatprep.subr.bf16.mxu0 0
    %881 = vmatpush1.bf16.msra.mxu0 0
    %882 = vmatprep.subr.bf16.mxu0 0
    %883 = vmatpush1.bf16.msra.mxu0 0
    %884 = vmatprep.subr.bf16.mxu0 0
    %885 = vmatpush1.bf16.msra.mxu0 0
    %886 = vmatprep.subr.bf16.mxu0 0
    %887 = vmatpush1.bf16.msra.mxu0 0
    %888 = vmatprep.subr.bf16.mxu0 0
    %889 = vmatpush1.bf16.msra.mxu0 0
    %890 = vmatprep.subr.bf16.mxu0 0
    %891 = vmatpush1.bf16.msra.mxu0 0
    %892 = vmatprep.subr.bf16.mxu0 0
    %893 = vmatpush1.bf16.msra.mxu0 0
    %894 = vmatprep.subr.bf16.mxu0 0
    %895 = vmatpush1.bf16.msra.mxu0 0
    %896 = vmatprep.subr.bf16.mxu0 0
    %897 = vmatpush1.bf16.msra.mxu0 0
    %898 = vmatprep.subr.bf16.mxu0 0
    %899 = vmatpush1.bf16.msra.mxu0 0
    %900 = vmatprep.subr.bf16.mxu0 0
    %901 = vmatpush1.bf16.msra.mxu0 0
    %902 = vmatprep.subr.bf16.mxu0 0
    %903 = vmatpush1.bf16.msra.mxu0 0
    %904 = vmatprep.mubr.bf16.mxu0 0
    %905 = vmatmul.mubr.bf16.gmra.mrb[0].mxu0 %v867
    %v906 = vpop.f32.mrb[0].mxu0
    %v907 = vadd.f32 0.0, %v906
    %v908 = vpop.f32.mrb[0].mxu0
    %v909 = vpop.f32.mrb[0].mxu0
    %v910 = vpop.f32.mrb[0].mxu0
    %911 = vdwg.mxu0
    %912 = vrot.lane.b32.xlu0 %v463, 96
    %v913 = vpop.permute.xlu0 %912
    %914 = vrot.lane.b32.xlu0 %v473, 96
    %v915 = vpop.permute.xlu0 %914
    %v917 = vsel %vm487, %v913, 0
    %v920 = vsel %vm487, %v915, 0
    %922 = vmatprep.subr.bf16.mxu0 0
    %923 = vmatpush1.bf16.xpose.msra.mxu0 %v920
    %924 = vmatprep.subr.bf16.mxu0 0
    %925 = vmatpush1.bf16.xpose.msra.mxu0 0
    %926 = vmatprep.subr.bf16.mxu0 0
    %927 = vmatpush1.bf16.xpose.msra.mxu0 0
    %928 = vmatprep.subr.bf16.mxu0 0
    %929 = vmatpush1.bf16.xpose.msra.mxu0 0
    %930 = vmatprep.subr.bf16.mxu0 0
    %931 = vmatpush1.bf16.xpose.msra.mxu0 0
    %932 = vmatprep.subr.bf16.mxu0 0
    %933 = vmatpush1.bf16.xpose.msra.mxu0 0
    %934 = vmatprep.subr.bf16.mxu0 0
    %935 = vmatpush1.bf16.xpose.msra.mxu0 0
    %936 = vmatprep.subr.bf16.mxu0 0
    %937 = vmatpush1.bf16.xpose.msra.mxu0 0
    %938 = vmatprep.subr.bf16.mxu0 0
    %939 = vmatpush1.bf16.xpose.msra.mxu0 0
    %940 = vmatprep.subr.bf16.mxu0 0
    %941 = vmatpush1.bf16.xpose.msra.mxu0 0
    %942 = vmatprep.subr.bf16.mxu0 0
    %943 = vmatpush1.bf16.xpose.msra.mxu0 0
    %944 = vmatprep.subr.bf16.mxu0 0
    %945 = vmatpush1.bf16.xpose.msra.mxu0 0
    %946 = vmatprep.subr.bf16.mxu0 0
    %947 = vmatpush1.bf16.xpose.msra.mxu0 0
    %948 = vmatprep.subr.bf16.mxu0 0
    %949 = vmatpush1.bf16.xpose.msra.mxu0 0
    %950 = vmatprep.subr.bf16.mxu0 0
    %951 = vmatpush1.bf16.xpose.msra.mxu0 0
    %952 = vmatprep.subr.bf16.mxu0 0
    %953 = vmatpush1.bf16.xpose.msra.mxu0 0
    %954 = vmatprep.mubr.bf16.mxu0 0
    %955 = vmatmul.mubr.bf16.gmra.mrb[0].mxu0 %v917
    %v956 = vpop.f32.mrb[0].mxu0
    %v957 = vadd.f32 0.0, %v956
    %v958 = vpop.f32.mrb[0].mxu0
    %v959 = vpop.f32.mrb[0].mxu0
    %v960 = vpop.f32.mrb[0].mxu0
    %961 = vdwg.mxu0
    %962 = vrot.lane.b32.xlu0 %v464, 96
    %v963 = vpop.permute.xlu0 %962
    %964 = vrot.lane.b32.xlu0 %v474, 96
    %v965 = vpop.permute.xlu0 %964
    %v967 = vsel %vm487, %v963, 0
    %v970 = vsel %vm487, %v965, 0
    %972 = vmatprep.subr.bf16.mxu0 0
    %973 = vmatpush1.bf16.xpose.msra.mxu0 %v970
    %974 = vmatprep.subr.bf16.mxu0 0
    %975 = vmatpush1.bf16.xpose.msra.mxu0 0
    %976 = vmatprep.subr.bf16.mxu0 0
    %977 = vmatpush1.bf16.xpose.msra.mxu0 0
    %978 = vmatprep.subr.bf16.mxu0 0
    %979 = vmatpush1.bf16.xpose.msra.mxu0 0
    %980 = vmatprep.subr.bf16.mxu0 0
    %981 = vmatpush1.bf16.xpose.msra.mxu0 0
    %982 = vmatprep.subr.bf16.mxu0 0
    %983 = vmatpush1.bf16.xpose.msra.mxu0 0
    %984 = vmatprep.subr.bf16.mxu0 0
    %985 = vmatpush1.bf16.xpose.msra.mxu0 0
    %986 = vmatprep.subr.bf16.mxu0 0
    %987 = vmatpush1.bf16.xpose.msra.mxu0 0
    %988 = vmatprep.subr.bf16.mxu0 0
    %989 = vmatpush1.bf16.xpose.msra.mxu0 0
    %990 = vmatprep.subr.bf16.mxu0 0
    %991 = vmatpush1.bf16.xpose.msra.mxu0 0
    %992 = vmatprep.subr.bf16.mxu0 0
    %993 = vmatpush1.bf16.xpose.msra.mxu0 0
    %994 = vmatprep.subr.bf16.mxu0 0
    %995 = vmatpush1.bf16.xpose.msra.mxu0 0
    %996 = vmatprep.subr.bf16.mxu0 0
    %997 = vmatpush1.bf16.xpose.msra.mxu0 0
    %998 = vmatprep.subr.bf16.mxu0 0
    %999 = vmatpush1.bf16.xpose.msra.mxu0 0
    %1000 = vmatprep.subr.bf16.mxu0 0
    %1001 = vmatpush1.bf16.xpose.msra.mxu0 0
    %1002 = vmatprep.subr.bf16.mxu0 0
    %1003 = vmatpush1.bf16.xpose.msra.mxu0 0
    %1004 = vmatprep.mubr.bf16.mxu0 0
    %1005 = vmatmul.mubr.bf16.gmra.mrb[0].mxu0 %v967
    %v1006 = vpop.f32.mrb[0].mxu0
    %v1007 = vadd.f32 0.0, %v1006
    %v1008 = vpop.f32.mrb[0].mxu0
    %v1009 = vpop.f32.mrb[0].mxu0
    %v1010 = vpop.f32.mrb[0].mxu0
    %1011 = vdwg.mxu0
    %1012 = vrot.lane.b32.xlu0 %v465, 96
    %v1013 = vpop.permute.xlu0 %1012
    %1014 = vrot.lane.b32.xlu0 %v475, 96
    %v1015 = vpop.permute.xlu0 %1014
    %v1017 = vsel %vm487, %v1013, 0
    %v1020 = vsel %vm487, %v1015, 0
    %1022 = vmatprep.subr.bf16.mxu0 0
    %1023 = vmatpush1.bf16.xpose.msra.mxu0 %v1020
    %1024 = vmatprep.subr.bf16.mxu0 0
    %1025 = vmatpush1.bf16.xpose.msra.mxu0 0
    %1026 = vmatprep.subr.bf16.mxu0 0
    %1027 = vmatpush1.bf16.xpose.msra.mxu0 0
    %1028 = vmatprep.subr.bf16.mxu0 0
    %1029 = vmatpush1.bf16.xpose.msra.mxu0 0
    %1030 = vmatprep.subr.bf16.mxu0 0
    %1031 = vmatpush1.bf16.xpose.msra.mxu0 0
    %1032 = vmatprep.subr.bf16.mxu0 0
    %1033 = vmatpush1.bf16.xpose.msra.mxu0 0
    %1034 = vmatprep.subr.bf16.mxu0 0
    %1035 = vmatpush1.bf16.xpose.msra.mxu0 0
    %1036 = vmatprep.subr.bf16.mxu0 0
    %1037 = vmatpush1.bf16.xpose.msra.mxu0 0
    %1038 = vmatprep.subr.bf16.mxu0 0
    %1039 = vmatpush1.bf16.xpose.msra.mxu0 0
    %1040 = vmatprep.subr.bf16.mxu0 0
    %1041 = vmatpush1.bf16.xpose.msra.mxu0 0
    %1042 = vmatprep.subr.bf16.mxu0 0
    %1043 = vmatpush1.bf16.xpose.msra.mxu0 0
    %1044 = vmatprep.subr.bf16.mxu0 0
    %1045 = vmatpush1.bf16.xpose.msra.mxu0 0
    %1046 = vmatprep.subr.bf16.mxu0 0
    %1047 = vmatpush1.bf16.xpose.msra.mxu0 0
    %1048 = vmatprep.subr.bf16.mxu0 0
    %1049 = vmatpush1.bf16.xpose.msra.mxu0 0
    %1050 = vmatprep.subr.bf16.mxu0 0
    %1051 = vmatpush1.bf16.xpose.msra.mxu0 0
    %1052 = vmatprep.subr.bf16.mxu0 0
    %1053 = vmatpush1.bf16.xpose.msra.mxu0 0
    %1054 = vmatprep.mubr.bf16.mxu0 0
    %1055 = vmatmul.mubr.bf16.gmra.mrb[0].mxu0 %v1017
    %v1056 = vpop.f32.mrb[0].mxu0
    %v1057 = vadd.f32 0.0, %v1056
    %v1058 = vpop.f32.mrb[0].mxu0
    %v1059 = vpop.f32.mrb[0].mxu0
    %v1060 = vpop.f32.mrb[0].mxu0
    %1061 = vdwg.mxu0
    %1062 = vrot.lane.b32.xlu0 %v466, 96
    %v1063 = vpop.permute.xlu0 %1062
    %1064 = vrot.lane.b32.xlu0 %v476, 96
    %v1065 = vpop.permute.xlu0 %1064
    %v1067 = vsel %vm487, %v1063, 0
    %v1070 = vsel %vm487, %v1065, 0
    %1072 = vmatprep.subr.bf16.mxu0 0
    %1073 = vmatpush1.bf16.xpose.msra.mxu0 %v1070
    %1074 = vmatprep.subr.bf16.mxu0 0
    %1075 = vmatpush1.bf16.xpose.msra.mxu0 0
    %1076 = vmatprep.subr.bf16.mxu0 0
    %1077 = vmatpush1.bf16.xpose.msra.mxu0 0
    %1078 = vmatprep.subr.bf16.mxu0 0
    %1079 = vmatpush1.bf16.xpose.msra.mxu0 0
    %1080 = vmatprep.subr.bf16.mxu0 0
    %1081 = vmatpush1.bf16.xpose.msra.mxu0 0
    %1082 = vmatprep.subr.bf16.mxu0 0
    %1083 = vmatpush1.bf16.xpose.msra.mxu0 0
    %1084 = vmatprep.subr.bf16.mxu0 0
    %1085 = vmatpush1.bf16.xpose.msra.mxu0 0
    %1086 = vmatprep.subr.bf16.mxu0 0
    %1087 = vmatpush1.bf16.xpose.msra.mxu0 0
    %1088 = vmatprep.subr.bf16.mxu0 0
    %1089 = vmatpush1.bf16.xpose.msra.mxu0 0
    %1090 = vmatprep.subr.bf16.mxu0 0
    %1091 = vmatpush1.bf16.xpose.msra.mxu0 0
    %1092 = vmatprep.subr.bf16.mxu0 0
    %1093 = vmatpush1.bf16.xpose.msra.mxu0 0
    %1094 = vmatprep.subr.bf16.mxu0 0
    %1095 = vmatpush1.bf16.xpose.msra.mxu0 0
    %1096 = vmatprep.subr.bf16.mxu0 0
    %1097 = vmatpush1.bf16.xpose.msra.mxu0 0
    %1098 = vmatprep.subr.bf16.mxu0 0
    %1099 = vmatpush1.bf16.xpose.msra.mxu0 0
    %1100 = vmatprep.subr.bf16.mxu0 0
    %1101 = vmatpush1.bf16.xpose.msra.mxu0 0
    %1102 = vmatprep.subr.bf16.mxu0 0
    %1103 = vmatpush1.bf16.xpose.msra.mxu0 0
    %1104 = vmatprep.mubr.bf16.mxu0 0
    %1105 = vmatmul.mubr.bf16.gmra.mrb[0].mxu0 %v1067
    %v1106 = vpop.f32.mrb[0].mxu0
    %v1107 = vadd.f32 0.0, %v1106
    %v1108 = vpop.f32.mrb[0].mxu0
    %v1109 = vpop.f32.mrb[0].mxu0
    %v1110 = vpop.f32.mrb[0].mxu0
    %1111 = vdwg.mxu0
    %v1112 = vsel %vm673, %v957, -1e+09
    %v1113 = vsel %vm673, %v1007, -1e+09
    %v1114 = vsel %vm673, %v1057, -1e+09
    %v1115 = vsel %vm673, %v1107, -1e+09
    %v1116 = vsel %vm678, %v1112, -inf
    %1117 = vmax.xlane.f32.xlu0 %v1116
    %v1118 = vpop.xlane.xlu0 %1117
    %v1119 = vsel %vm678, %v1113, -inf
    %1120 = vmax.xlane.f32.xlu0 %v1119
    %v1121 = vpop.xlane.xlu0 %1120
    %v1122 = vsel %vm678, %v1114, -inf
    %1123 = vmax.xlane.f32.xlu0 %v1122
    %v1124 = vpop.xlane.xlu0 %1123
    %v1125 = vsel %vm678, %v1115, -inf
    %1126 = vmax.xlane.f32.xlu0 %v1125
    %v1127 = vpop.xlane.xlu0 %1126
    %v1128 = vsub.f32 %v1112, %v1118
    %v1129 = vsub.f32 %v1113, %v1121
    %v1130 = vsub.f32 %v1114, %v1124
    %v1131 = vsub.f32 %v1115, %v1127
    %v1132 = vmul.f32 %v1128, 1.442695
    %v1133 = vpow.pop %v1132
    %v1134 = vmul.f32 %v1129, 1.442695
    %v1135 = vpow.pop %v1134
    %v1136 = vmul.f32 %v1130, 1.442695
    %v1137 = vpow.pop %v1136
    %v1138 = vmul.f32 %v1131, 1.442695
    %v1139 = vpow.pop %v1138
    %v1140 = vsel %vm678, %v1133, 0.0
    %1141 = vadd.xlane.f32.xlu0 %v1140
    %v1142 = vpop.xlane.xlu0 %1141
    %v1143 = vsel %vm678, %v1135, 0.0
    %1144 = vadd.xlane.f32.xlu0 %v1143
    %v1145 = vpop.xlane.xlu0 %1144
    %v1146 = vsel %vm678, %v1137, 0.0
    %1147 = vadd.xlane.f32.xlu0 %v1146
    %v1148 = vpop.xlane.xlu0 %1147
    %v1149 = vsel %vm678, %v1139, 0.0
    %1150 = vadd.xlane.f32.xlu0 %v1149
    %v1151 = vpop.xlane.xlu0 %1150
    %v1152 = vrcp.pop %v1142
    %v1153 = vrcp.pop %v1145
    %v1154 = vrcp.pop %v1148
    %v1155 = vrcp.pop %v1151
    %v1156 = vmul.f32 %v1133, %v1152
    %v1157 = vmul.f32 %v1135, %v1153
    %v1158 = vmul.f32 %v1137, %v1154
    %v1159 = vmul.f32 %v1139, %v1155
    %v1160 = vpack.c.bf16 %v1156, %v1156
    %v1161 = vpack.c.bf16 %v1157, %v1157
    %v1162 = vpack.c.bf16 %v1158, %v1158
    %v1163 = vpack.c.bf16 %v1159, %v1159
    %1164 = vrot.lane.b32.xlu0 %v483, 96
    %v1165 = vpop.permute.xlu0 %1164
    %v1167 = vsel %vm678, %v1160, 0
    %v1170 = vsel %vm730, %v1165, 0
    %1172 = vmatprep.subr.bf16.mxu0 0
    %1173 = vmatpush1.bf16.msra.mxu0 %v1170
    %1174 = vmatprep.subr.bf16.mxu0 0
    %1175 = vmatpush1.bf16.msra.mxu0 0
    %1176 = vmatprep.subr.bf16.mxu0 0
    %1177 = vmatpush1.bf16.msra.mxu0 0
    %1178 = vmatprep.subr.bf16.mxu0 0
    %1179 = vmatpush1.bf16.msra.mxu0 0
    %1180 = vmatprep.subr.bf16.mxu0 0
    %1181 = vmatpush1.bf16.msra.mxu0 0
    %1182 = vmatprep.subr.bf16.mxu0 0
    %1183 = vmatpush1.bf16.msra.mxu0 0
    %1184 = vmatprep.subr.bf16.mxu0 0
    %1185 = vmatpush1.bf16.msra.mxu0 0
    %1186 = vmatprep.subr.bf16.mxu0 0
    %1187 = vmatpush1.bf16.msra.mxu0 0
    %1188 = vmatprep.subr.bf16.mxu0 0
    %1189 = vmatpush1.bf16.msra.mxu0 0
    %1190 = vmatprep.subr.bf16.mxu0 0
    %1191 = vmatpush1.bf16.msra.mxu0 0
    %1192 = vmatprep.subr.bf16.mxu0 0
    %1193 = vmatpush1.bf16.msra.mxu0 0
    %1194 = vmatprep.subr.bf16.mxu0 0
    %1195 = vmatpush1.bf16.msra.mxu0 0
    %1196 = vmatprep.subr.bf16.mxu0 0
    %1197 = vmatpush1.bf16.msra.mxu0 0
    %1198 = vmatprep.subr.bf16.mxu0 0
    %1199 = vmatpush1.bf16.msra.mxu0 0
    %1200 = vmatprep.subr.bf16.mxu0 0
    %1201 = vmatpush1.bf16.msra.mxu0 0
    %1202 = vmatprep.subr.bf16.mxu0 0
    %1203 = vmatpush1.bf16.msra.mxu0 0
    %1204 = vmatprep.mubr.bf16.mxu0 0
    %1205 = vmatmul.mubr.bf16.gmra.mrb[0].mxu0 %v1167
    %v1206 = vpop.f32.mrb[0].mxu0
    %v1207 = vadd.f32 0.0, %v1206
    %v1208 = vpop.f32.mrb[0].mxu0
    %v1209 = vpop.f32.mrb[0].mxu0
    %v1210 = vpop.f32.mrb[0].mxu0
    %1211 = vdwg.mxu0
    %1212 = vrot.lane.b32.xlu0 %v484, 96
    %v1213 = vpop.permute.xlu0 %1212
    %v1215 = vsel %vm678, %v1161, 0
    %v1218 = vsel %vm730, %v1213, 0
    %1220 = vmatprep.subr.bf16.mxu0 0
    %1221 = vmatpush1.bf16.msra.mxu0 %v1218
    %1222 = vmatprep.subr.bf16.mxu0 0
    %1223 = vmatpush1.bf16.msra.mxu0 0
    %1224 = vmatprep.subr.bf16.mxu0 0
    %1225 = vmatpush1.bf16.msra.mxu0 0
    %1226 = vmatprep.subr.bf16.mxu0 0
    %1227 = vmatpush1.bf16.msra.mxu0 0
    %1228 = vmatprep.subr.bf16.mxu0 0
    %1229 = vmatpush1.bf16.msra.mxu0 0
    %1230 = vmatprep.subr.bf16.mxu0 0
    %1231 = vmatpush1.bf16.msra.mxu0 0
    %1232 = vmatprep.subr.bf16.mxu0 0
    %1233 = vmatpush1.bf16.msra.mxu0 0
    %1234 = vmatprep.subr.bf16.mxu0 0
    %1235 = vmatpush1.bf16.msra.mxu0 0
    %1236 = vmatprep.subr.bf16.mxu0 0
    %1237 = vmatpush1.bf16.msra.mxu0 0
    %1238 = vmatprep.subr.bf16.mxu0 0
    %1239 = vmatpush1.bf16.msra.mxu0 0
    %1240 = vmatprep.subr.bf16.mxu0 0
    %1241 = vmatpush1.bf16.msra.mxu0 0
    %1242 = vmatprep.subr.bf16.mxu0 0
    %1243 = vmatpush1.bf16.msra.mxu0 0
    %1244 = vmatprep.subr.bf16.mxu0 0
    %1245 = vmatpush1.bf16.msra.mxu0 0
    %1246 = vmatprep.subr.bf16.mxu0 0
    %1247 = vmatpush1.bf16.msra.mxu0 0
    %1248 = vmatprep.subr.bf16.mxu0 0
    %1249 = vmatpush1.bf16.msra.mxu0 0
    %1250 = vmatprep.subr.bf16.mxu0 0
    %1251 = vmatpush1.bf16.msra.mxu0 0
    %1252 = vmatprep.mubr.bf16.mxu0 0
    %1253 = vmatmul.mubr.bf16.gmra.mrb[0].mxu0 %v1215
    %v1254 = vpop.f32.mrb[0].mxu0
    %v1255 = vadd.f32 0.0, %v1254
    %v1256 = vpop.f32.mrb[0].mxu0
    %v1257 = vpop.f32.mrb[0].mxu0
    %v1258 = vpop.f32.mrb[0].mxu0
    %1259 = vdwg.mxu0
    %1260 = vrot.lane.b32.xlu0 %v485, 96
    %v1261 = vpop.permute.xlu0 %1260
    %v1263 = vsel %vm678, %v1162, 0
    %v1266 = vsel %vm730, %v1261, 0
    %1268 = vmatprep.subr.bf16.mxu0 0
    %1269 = vmatpush1.bf16.msra.mxu0 %v1266
    %1270 = vmatprep.subr.bf16.mxu0 0
    %1271 = vmatpush1.bf16.msra.mxu0 0
    %1272 = vmatprep.subr.bf16.mxu0 0
    %1273 = vmatpush1.bf16.msra.mxu0 0
    %1274 = vmatprep.subr.bf16.mxu0 0
    %1275 = vmatpush1.bf16.msra.mxu0 0
    %1276 = vmatprep.subr.bf16.mxu0 0
    %1277 = vmatpush1.bf16.msra.mxu0 0
    %1278 = vmatprep.subr.bf16.mxu0 0
    %1279 = vmatpush1.bf16.msra.mxu0 0
    %1280 = vmatprep.subr.bf16.mxu0 0
    %1281 = vmatpush1.bf16.msra.mxu0 0
    %1282 = vmatprep.subr.bf16.mxu0 0
    %1283 = vmatpush1.bf16.msra.mxu0 0
    %1284 = vmatprep.subr.bf16.mxu0 0
    %1285 = vmatpush1.bf16.msra.mxu0 0
    %1286 = vmatprep.subr.bf16.mxu0 0
    %1287 = vmatpush1.bf16.msra.mxu0 0
    %1288 = vmatprep.subr.bf16.mxu0 0
    %1289 = vmatpush1.bf16.msra.mxu0 0
    %1290 = vmatprep.subr.bf16.mxu0 0
    %1291 = vmatpush1.bf16.msra.mxu0 0
    %1292 = vmatprep.subr.bf16.mxu0 0
    %1293 = vmatpush1.bf16.msra.mxu0 0
    %1294 = vmatprep.subr.bf16.mxu0 0
    %1295 = vmatpush1.bf16.msra.mxu0 0
    %1296 = vmatprep.subr.bf16.mxu0 0
    %1297 = vmatpush1.bf16.msra.mxu0 0
    %1298 = vmatprep.subr.bf16.mxu0 0
    %1299 = vmatpush1.bf16.msra.mxu0 0
    %1300 = vmatprep.mubr.bf16.mxu0 0
    %1301 = vmatmul.mubr.bf16.gmra.mrb[0].mxu0 %v1263
    %v1302 = vpop.f32.mrb[0].mxu0
    %v1303 = vadd.f32 0.0, %v1302
    %v1304 = vpop.f32.mrb[0].mxu0
    %v1305 = vpop.f32.mrb[0].mxu0
    %v1306 = vpop.f32.mrb[0].mxu0
    %1307 = vdwg.mxu0
    %1308 = vrot.lane.b32.xlu0 %v486, 96
    %v1309 = vpop.permute.xlu0 %1308
    %v1311 = vsel %vm678, %v1163, 0
    %v1314 = vsel %vm730, %v1309, 0
    %1316 = vmatprep.subr.bf16.mxu0 0
    %1317 = vmatpush1.bf16.msra.mxu0 %v1314
    %1318 = vmatprep.subr.bf16.mxu0 0
    %1319 = vmatpush1.bf16.msra.mxu0 0
    %1320 = vmatprep.subr.bf16.mxu0 0
    %1321 = vmatpush1.bf16.msra.mxu0 0
    %1322 = vmatprep.subr.bf16.mxu0 0
    %1323 = vmatpush1.bf16.msra.mxu0 0
    %1324 = vmatprep.subr.bf16.mxu0 0
    %1325 = vmatpush1.bf16.msra.mxu0 0
    %1326 = vmatprep.subr.bf16.mxu0 0
    %1327 = vmatpush1.bf16.msra.mxu0 0
    %1328 = vmatprep.subr.bf16.mxu0 0
    %1329 = vmatpush1.bf16.msra.mxu0 0
    %1330 = vmatprep.subr.bf16.mxu0 0
    %1331 = vmatpush1.bf16.msra.mxu0 0
    %1332 = vmatprep.subr.bf16.mxu0 0
    %1333 = vmatpush1.bf16.msra.mxu0 0
    %1334 = vmatprep.subr.bf16.mxu0 0
    %1335 = vmatpush1.bf16.msra.mxu0 0
    %1336 = vmatprep.subr.bf16.mxu0 0
    %1337 = vmatpush1.bf16.msra.mxu0 0
    %1338 = vmatprep.subr.bf16.mxu0 0
    %1339 = vmatpush1.bf16.msra.mxu0 0
    %1340 = vmatprep.subr.bf16.mxu0 0
    %1341 = vmatpush1.bf16.msra.mxu0 0
    %1342 = vmatprep.subr.bf16.mxu0 0
    %1343 = vmatpush1.bf16.msra.mxu0 0
    %1344 = vmatprep.subr.bf16.mxu0 0
    %1345 = vmatpush1.bf16.msra.mxu0 0
    %1346 = vmatprep.subr.bf16.mxu0 0
    %1347 = vmatpush1.bf16.msra.mxu0 0
    %1348 = vmatprep.mubr.bf16.mxu0 0
    %1349 = vmatmul.mubr.bf16.gmra.mrb[0].mxu0 %v1311
    %v1350 = vpop.f32.mrb[0].mxu0
    %v1351 = vadd.f32 0.0, %v1350
    %v1352 = vpop.f32.mrb[0].mxu0
    %v1353 = vpop.f32.mrb[0].mxu0
    %v1354 = vpop.f32.mrb[0].mxu0
    %1355 = vdwg.mxu0
    %1356 = vrot.lane.b32.xlu0 %v463, 64
    %v1357 = vpop.permute.xlu0 %1356
    %1358 = vrot.lane.b32.xlu0 %v473, 64
    %v1359 = vpop.permute.xlu0 %1358
    %v1361 = vsel %vm487, %v1357, 0
    %v1364 = vsel %vm487, %v1359, 0
    %1366 = vmatprep.subr.bf16.mxu0 0
    %1367 = vmatpush1.bf16.xpose.msra.mxu0 %v1364
    %1368 = vmatprep.subr.bf16.mxu0 0
    %1369 = vmatpush1.bf16.xpose.msra.mxu0 0
    %1370 = vmatprep.subr.bf16.mxu0 0
    %1371 = vmatpush1.bf16.xpose.msra.mxu0 0
    %1372 = vmatprep.subr.bf16.mxu0 0
    %1373 = vmatpush1.bf16.xpose.msra.mxu0 0
    %1374 = vmatprep.subr.bf16.mxu0 0
    %1375 = vmatpush1.bf16.xpose.msra.mxu0 0
    %1376 = vmatprep.subr.bf16.mxu0 0
    %1377 = vmatpush1.bf16.xpose.msra.mxu0 0
    %1378 = vmatprep.subr.bf16.mxu0 0
    %1379 = vmatpush1.bf16.xpose.msra.mxu0 0
    %1380 = vmatprep.subr.bf16.mxu0 0
    %1381 = vmatpush1.bf16.xpose.msra.mxu0 0
    %1382 = vmatprep.subr.bf16.mxu0 0
    %1383 = vmatpush1.bf16.xpose.msra.mxu0 0
    %1384 = vmatprep.subr.bf16.mxu0 0
    %1385 = vmatpush1.bf16.xpose.msra.mxu0 0
    %1386 = vmatprep.subr.bf16.mxu0 0
    %1387 = vmatpush1.bf16.xpose.msra.mxu0 0
    %1388 = vmatprep.subr.bf16.mxu0 0
    %1389 = vmatpush1.bf16.xpose.msra.mxu0 0
    %1390 = vmatprep.subr.bf16.mxu0 0
    %1391 = vmatpush1.bf16.xpose.msra.mxu0 0
    %1392 = vmatprep.subr.bf16.mxu0 0
    %1393 = vmatpush1.bf16.xpose.msra.mxu0 0
    %1394 = vmatprep.subr.bf16.mxu0 0
    %1395 = vmatpush1.bf16.xpose.msra.mxu0 0
    %1396 = vmatprep.subr.bf16.mxu0 0
    %1397 = vmatpush1.bf16.xpose.msra.mxu0 0
    %1398 = vmatprep.mubr.bf16.mxu0 0
    %1399 = vmatmul.mubr.bf16.gmra.mrb[0].mxu0 %v1361
    %v1400 = vpop.f32.mrb[0].mxu0
    %v1401 = vadd.f32 0.0, %v1400
    %v1402 = vpop.f32.mrb[0].mxu0
    %v1403 = vpop.f32.mrb[0].mxu0
    %v1404 = vpop.f32.mrb[0].mxu0
    %1405 = vdwg.mxu0
    %1406 = vrot.lane.b32.xlu0 %v464, 64
    %v1407 = vpop.permute.xlu0 %1406
    %1408 = vrot.lane.b32.xlu0 %v474, 64
    %v1409 = vpop.permute.xlu0 %1408
    %v1411 = vsel %vm487, %v1407, 0
    %v1414 = vsel %vm487, %v1409, 0
    %1416 = vmatprep.subr.bf16.mxu0 0
    %1417 = vmatpush1.bf16.xpose.msra.mxu0 %v1414
    %1418 = vmatprep.subr.bf16.mxu0 0
    %1419 = vmatpush1.bf16.xpose.msra.mxu0 0
    %1420 = vmatprep.subr.bf16.mxu0 0
    %1421 = vmatpush1.bf16.xpose.msra.mxu0 0
    %1422 = vmatprep.subr.bf16.mxu0 0
    %1423 = vmatpush1.bf16.xpose.msra.mxu0 0
    %1424 = vmatprep.subr.bf16.mxu0 0
    %1425 = vmatpush1.bf16.xpose.msra.mxu0 0
    %1426 = vmatprep.subr.bf16.mxu0 0
    %1427 = vmatpush1.bf16.xpose.msra.mxu0 0
    %1428 = vmatprep.subr.bf16.mxu0 0
    %1429 = vmatpush1.bf16.xpose.msra.mxu0 0
    %1430 = vmatprep.subr.bf16.mxu0 0
    %1431 = vmatpush1.bf16.xpose.msra.mxu0 0
    %1432 = vmatprep.subr.bf16.mxu0 0
    %1433 = vmatpush1.bf16.xpose.msra.mxu0 0
    %1434 = vmatprep.subr.bf16.mxu0 0
    %1435 = vmatpush1.bf16.xpose.msra.mxu0 0
    %1436 = vmatprep.subr.bf16.mxu0 0
    %1437 = vmatpush1.bf16.xpose.msra.mxu0 0
    %1438 = vmatprep.subr.bf16.mxu0 0
    %1439 = vmatpush1.bf16.xpose.msra.mxu0 0
    %1440 = vmatprep.subr.bf16.mxu0 0
    %1441 = vmatpush1.bf16.xpose.msra.mxu0 0
    %1442 = vmatprep.subr.bf16.mxu0 0
    %1443 = vmatpush1.bf16.xpose.msra.mxu0 0
    %1444 = vmatprep.subr.bf16.mxu0 0
    %1445 = vmatpush1.bf16.xpose.msra.mxu0 0
    %1446 = vmatprep.subr.bf16.mxu0 0
    %1447 = vmatpush1.bf16.xpose.msra.mxu0 0
    %1448 = vmatprep.mubr.bf16.mxu0 0
    %1449 = vmatmul.mubr.bf16.gmra.mrb[0].mxu0 %v1411
    %v1450 = vpop.f32.mrb[0].mxu0
    %v1451 = vadd.f32 0.0, %v1450
    %v1452 = vpop.f32.mrb[0].mxu0
    %v1453 = vpop.f32.mrb[0].mxu0
    %v1454 = vpop.f32.mrb[0].mxu0
    %1455 = vdwg.mxu0
    %1456 = vrot.lane.b32.xlu0 %v465, 64
    %v1457 = vpop.permute.xlu0 %1456
    %1458 = vrot.lane.b32.xlu0 %v475, 64
    %v1459 = vpop.permute.xlu0 %1458
    %v1461 = vsel %vm487, %v1457, 0
    %v1464 = vsel %vm487, %v1459, 0
    %1466 = vmatprep.subr.bf16.mxu0 0
    %1467 = vmatpush1.bf16.xpose.msra.mxu0 %v1464
    %1468 = vmatprep.subr.bf16.mxu0 0
    %1469 = vmatpush1.bf16.xpose.msra.mxu0 0
    %1470 = vmatprep.subr.bf16.mxu0 0
    %1471 = vmatpush1.bf16.xpose.msra.mxu0 0
    %1472 = vmatprep.subr.bf16.mxu0 0
    %1473 = vmatpush1.bf16.xpose.msra.mxu0 0
    %1474 = vmatprep.subr.bf16.mxu0 0
    %1475 = vmatpush1.bf16.xpose.msra.mxu0 0
    %1476 = vmatprep.subr.bf16.mxu0 0
    %1477 = vmatpush1.bf16.xpose.msra.mxu0 0
    %1478 = vmatprep.subr.bf16.mxu0 0
    %1479 = vmatpush1.bf16.xpose.msra.mxu0 0
    %1480 = vmatprep.subr.bf16.mxu0 0
    %1481 = vmatpush1.bf16.xpose.msra.mxu0 0
    %1482 = vmatprep.subr.bf16.mxu0 0
    %1483 = vmatpush1.bf16.xpose.msra.mxu0 0
    %1484 = vmatprep.subr.bf16.mxu0 0
    %1485 = vmatpush1.bf16.xpose.msra.mxu0 0
    %1486 = vmatprep.subr.bf16.mxu0 0
    %1487 = vmatpush1.bf16.xpose.msra.mxu0 0
    %1488 = vmatprep.subr.bf16.mxu0 0
    %1489 = vmatpush1.bf16.xpose.msra.mxu0 0
    %1490 = vmatprep.subr.bf16.mxu0 0
    %1491 = vmatpush1.bf16.xpose.msra.mxu0 0
    %1492 = vmatprep.subr.bf16.mxu0 0
    %1493 = vmatpush1.bf16.xpose.msra.mxu0 0
    %1494 = vmatprep.subr.bf16.mxu0 0
    %1495 = vmatpush1.bf16.xpose.msra.mxu0 0
    %1496 = vmatprep.subr.bf16.mxu0 0
    %1497 = vmatpush1.bf16.xpose.msra.mxu0 0
    %1498 = vmatprep.mubr.bf16.mxu0 0
    %1499 = vmatmul.mubr.bf16.gmra.mrb[0].mxu0 %v1461
    %v1500 = vpop.f32.mrb[0].mxu0
    %v1501 = vadd.f32 0.0, %v1500
    %v1502 = vpop.f32.mrb[0].mxu0
    %v1503 = vpop.f32.mrb[0].mxu0
    %v1504 = vpop.f32.mrb[0].mxu0
    %1505 = vdwg.mxu0
    %1506 = vrot.lane.b32.xlu0 %v466, 64
    %v1507 = vpop.permute.xlu0 %1506
    %1508 = vrot.lane.b32.xlu0 %v476, 64
    %v1509 = vpop.permute.xlu0 %1508
    %v1511 = vsel %vm487, %v1507, 0
    %v1514 = vsel %vm487, %v1509, 0
    %1516 = vmatprep.subr.bf16.mxu0 0
    %1517 = vmatpush1.bf16.xpose.msra.mxu0 %v1514
    %1518 = vmatprep.subr.bf16.mxu0 0
    %1519 = vmatpush1.bf16.xpose.msra.mxu0 0
    %1520 = vmatprep.subr.bf16.mxu0 0
    %1521 = vmatpush1.bf16.xpose.msra.mxu0 0
    %1522 = vmatprep.subr.bf16.mxu0 0
    %1523 = vmatpush1.bf16.xpose.msra.mxu0 0
    %1524 = vmatprep.subr.bf16.mxu0 0
    %1525 = vmatpush1.bf16.xpose.msra.mxu0 0
    %1526 = vmatprep.subr.bf16.mxu0 0
    %1527 = vmatpush1.bf16.xpose.msra.mxu0 0
    %1528 = vmatprep.subr.bf16.mxu0 0
    %1529 = vmatpush1.bf16.xpose.msra.mxu0 0
    %1530 = vmatprep.subr.bf16.mxu0 0
    %1531 = vmatpush1.bf16.xpose.msra.mxu0 0
    %1532 = vmatprep.subr.bf16.mxu0 0
    %1533 = vmatpush1.bf16.xpose.msra.mxu0 0
    %1534 = vmatprep.subr.bf16.mxu0 0
    %1535 = vmatpush1.bf16.xpose.msra.mxu0 0
    %1536 = vmatprep.subr.bf16.mxu0 0
    %1537 = vmatpush1.bf16.xpose.msra.mxu0 0
    %1538 = vmatprep.subr.bf16.mxu0 0
    %1539 = vmatpush1.bf16.xpose.msra.mxu0 0
    %1540 = vmatprep.subr.bf16.mxu0 0
    %1541 = vmatpush1.bf16.xpose.msra.mxu0 0
    %1542 = vmatprep.subr.bf16.mxu0 0
    %1543 = vmatpush1.bf16.xpose.msra.mxu0 0
    %1544 = vmatprep.subr.bf16.mxu0 0
    %1545 = vmatpush1.bf16.xpose.msra.mxu0 0
    %1546 = vmatprep.subr.bf16.mxu0 0
    %1547 = vmatpush1.bf16.xpose.msra.mxu0 0
    %1548 = vmatprep.mubr.bf16.mxu0 0
    %1549 = vmatmul.mubr.bf16.gmra.mrb[0].mxu0 %v1511
    %v1550 = vpop.f32.mrb[0].mxu0
    %v1551 = vadd.f32 0.0, %v1550
    %v1552 = vpop.f32.mrb[0].mxu0
    %v1553 = vpop.f32.mrb[0].mxu0
    %v1554 = vpop.f32.mrb[0].mxu0
    %1555 = vdwg.mxu0
    %v1556 = vsel %vm673, %v1401, -1e+09
    %v1557 = vsel %vm673, %v1451, -1e+09
    %v1558 = vsel %vm673, %v1501, -1e+09
    %v1559 = vsel %vm673, %v1551, -1e+09
    %v1560 = vsel %vm678, %v1556, -inf
    %1561 = vmax.xlane.f32.xlu0 %v1560
    %v1562 = vpop.xlane.xlu0 %1561
    %v1563 = vsel %vm678, %v1557, -inf
    %1564 = vmax.xlane.f32.xlu0 %v1563
    %v1565 = vpop.xlane.xlu0 %1564
    %v1566 = vsel %vm678, %v1558, -inf
    %1567 = vmax.xlane.f32.xlu0 %v1566
    %v1568 = vpop.xlane.xlu0 %1567
    %v1569 = vsel %vm678, %v1559, -inf
    %1570 = vmax.xlane.f32.xlu0 %v1569
    %v1571 = vpop.xlane.xlu0 %1570
    %v1572 = vsub.f32 %v1556, %v1562
    %v1573 = vsub.f32 %v1557, %v1565
    %v1574 = vsub.f32 %v1558, %v1568
    %v1575 = vsub.f32 %v1559, %v1571
    %v1576 = vmul.f32 %v1572, 1.442695
    %v1577 = vpow.pop %v1576
    %v1578 = vmul.f32 %v1573, 1.442695
    %v1579 = vpow.pop %v1578
    %v1580 = vmul.f32 %v1574, 1.442695
    %v1581 = vpow.pop %v1580
    %v1582 = vmul.f32 %v1575, 1.442695
    %v1583 = vpow.pop %v1582
    %v1584 = vsel %vm678, %v1577, 0.0
    %1585 = vadd.xlane.f32.xlu0 %v1584
    %v1586 = vpop.xlane.xlu0 %1585
    %v1587 = vsel %vm678, %v1579, 0.0
    %1588 = vadd.xlane.f32.xlu0 %v1587
    %v1589 = vpop.xlane.xlu0 %1588
    %v1590 = vsel %vm678, %v1581, 0.0
    %1591 = vadd.xlane.f32.xlu0 %v1590
    %v1592 = vpop.xlane.xlu0 %1591
    %v1593 = vsel %vm678, %v1583, 0.0
    %1594 = vadd.xlane.f32.xlu0 %v1593
    %v1595 = vpop.xlane.xlu0 %1594
    %v1596 = vrcp.pop %v1586
    %v1597 = vrcp.pop %v1589
    %v1598 = vrcp.pop %v1592
    %v1599 = vrcp.pop %v1595
    %v1600 = vmul.f32 %v1577, %v1596
    %v1601 = vmul.f32 %v1579, %v1597
    %v1602 = vmul.f32 %v1581, %v1598
    %v1603 = vmul.f32 %v1583, %v1599
    %v1604 = vpack.c.bf16 %v1600, %v1600
    %v1605 = vpack.c.bf16 %v1601, %v1601
    %v1606 = vpack.c.bf16 %v1602, %v1602
    %v1607 = vpack.c.bf16 %v1603, %v1603
    %1608 = vrot.lane.b32.xlu0 %v483, 64
    %v1609 = vpop.permute.xlu0 %1608
    %v1611 = vsel %vm678, %v1604, 0
    %v1614 = vsel %vm730, %v1609, 0
    %1616 = vmatprep.subr.bf16.mxu0 0
    %1617 = vmatpush1.bf16.msra.mxu0 %v1614
    %1618 = vmatprep.subr.bf16.mxu0 0
    %1619 = vmatpush1.bf16.msra.mxu0 0
    %1620 = vmatprep.subr.bf16.mxu0 0
    %1621 = vmatpush1.bf16.msra.mxu0 0
    %1622 = vmatprep.subr.bf16.mxu0 0
    %1623 = vmatpush1.bf16.msra.mxu0 0
    %1624 = vmatprep.subr.bf16.mxu0 0
    %1625 = vmatpush1.bf16.msra.mxu0 0
    %1626 = vmatprep.subr.bf16.mxu0 0
    %1627 = vmatpush1.bf16.msra.mxu0 0
    %1628 = vmatprep.subr.bf16.mxu0 0
    %1629 = vmatpush1.bf16.msra.mxu0 0
    %1630 = vmatprep.subr.bf16.mxu0 0
    %1631 = vmatpush1.bf16.msra.mxu0 0
    %1632 = vmatprep.subr.bf16.mxu0 0
    %1633 = vmatpush1.bf16.msra.mxu0 0
    %1634 = vmatprep.subr.bf16.mxu0 0
    %1635 = vmatpush1.bf16.msra.mxu0 0
    %1636 = vmatprep.subr.bf16.mxu0 0
    %1637 = vmatpush1.bf16.msra.mxu0 0
    %1638 = vmatprep.subr.bf16.mxu0 0
    %1639 = vmatpush1.bf16.msra.mxu0 0
    %1640 = vmatprep.subr.bf16.mxu0 0
    %1641 = vmatpush1.bf16.msra.mxu0 0
    %1642 = vmatprep.subr.bf16.mxu0 0
    %1643 = vmatpush1.bf16.msra.mxu0 0
    %1644 = vmatprep.subr.bf16.mxu0 0
    %1645 = vmatpush1.bf16.msra.mxu0 0
    %1646 = vmatprep.subr.bf16.mxu0 0
    %1647 = vmatpush1.bf16.msra.mxu0 0
    %1648 = vmatprep.mubr.bf16.mxu0 0
    %1649 = vmatmul.mubr.bf16.gmra.mrb[0].mxu0 %v1611
    %v1650 = vpop.f32.mrb[0].mxu0
    %v1651 = vadd.f32 0.0, %v1650
    %v1652 = vpop.f32.mrb[0].mxu0
    %v1653 = vpop.f32.mrb[0].mxu0
    %v1654 = vpop.f32.mrb[0].mxu0
    %1655 = vdwg.mxu0
    %1656 = vrot.lane.b32.xlu0 %v484, 64
    %v1657 = vpop.permute.xlu0 %1656
    %v1659 = vsel %vm678, %v1605, 0
    %v1662 = vsel %vm730, %v1657, 0
    %1664 = vmatprep.subr.bf16.mxu0 0
    %1665 = vmatpush1.bf16.msra.mxu0 %v1662
    %1666 = vmatprep.subr.bf16.mxu0 0
    %1667 = vmatpush1.bf16.msra.mxu0 0
    %1668 = vmatprep.subr.bf16.mxu0 0
    %1669 = vmatpush1.bf16.msra.mxu0 0
    %1670 = vmatprep.subr.bf16.mxu0 0
    %1671 = vmatpush1.bf16.msra.mxu0 0
    %1672 = vmatprep.subr.bf16.mxu0 0
    %1673 = vmatpush1.bf16.msra.mxu0 0
    %1674 = vmatprep.subr.bf16.mxu0 0
    %1675 = vmatpush1.bf16.msra.mxu0 0
    %1676 = vmatprep.subr.bf16.mxu0 0
    %1677 = vmatpush1.bf16.msra.mxu0 0
    %1678 = vmatprep.subr.bf16.mxu0 0
    %1679 = vmatpush1.bf16.msra.mxu0 0
    %1680 = vmatprep.subr.bf16.mxu0 0
    %1681 = vmatpush1.bf16.msra.mxu0 0
    %1682 = vmatprep.subr.bf16.mxu0 0
    %1683 = vmatpush1.bf16.msra.mxu0 0
    %1684 = vmatprep.subr.bf16.mxu0 0
    %1685 = vmatpush1.bf16.msra.mxu0 0
    %1686 = vmatprep.subr.bf16.mxu0 0
    %1687 = vmatpush1.bf16.msra.mxu0 0
    %1688 = vmatprep.subr.bf16.mxu0 0
    %1689 = vmatpush1.bf16.msra.mxu0 0
    %1690 = vmatprep.subr.bf16.mxu0 0
    %1691 = vmatpush1.bf16.msra.mxu0 0
    %1692 = vmatprep.subr.bf16.mxu0 0
    %1693 = vmatpush1.bf16.msra.mxu0 0
    %1694 = vmatprep.subr.bf16.mxu0 0
    %1695 = vmatpush1.bf16.msra.mxu0 0
    %1696 = vmatprep.mubr.bf16.mxu0 0
    %1697 = vmatmul.mubr.bf16.gmra.mrb[0].mxu0 %v1659
    %v1698 = vpop.f32.mrb[0].mxu0
    %v1699 = vadd.f32 0.0, %v1698
    %v1700 = vpop.f32.mrb[0].mxu0
    %v1701 = vpop.f32.mrb[0].mxu0
    %v1702 = vpop.f32.mrb[0].mxu0
    %1703 = vdwg.mxu0
    %1704 = vrot.lane.b32.xlu0 %v485, 64
    %v1705 = vpop.permute.xlu0 %1704
    %v1707 = vsel %vm678, %v1606, 0
    %v1710 = vsel %vm730, %v1705, 0
    %1712 = vmatprep.subr.bf16.mxu0 0
    %1713 = vmatpush1.bf16.msra.mxu0 %v1710
    %1714 = vmatprep.subr.bf16.mxu0 0
    %1715 = vmatpush1.bf16.msra.mxu0 0
    %1716 = vmatprep.subr.bf16.mxu0 0
    %1717 = vmatpush1.bf16.msra.mxu0 0
    %1718 = vmatprep.subr.bf16.mxu0 0
    %1719 = vmatpush1.bf16.msra.mxu0 0
    %1720 = vmatprep.subr.bf16.mxu0 0
    %1721 = vmatpush1.bf16.msra.mxu0 0
    %1722 = vmatprep.subr.bf16.mxu0 0
    %1723 = vmatpush1.bf16.msra.mxu0 0
    %1724 = vmatprep.subr.bf16.mxu0 0
    %1725 = vmatpush1.bf16.msra.mxu0 0
    %1726 = vmatprep.subr.bf16.mxu0 0
    %1727 = vmatpush1.bf16.msra.mxu0 0
    %1728 = vmatprep.subr.bf16.mxu0 0
    %1729 = vmatpush1.bf16.msra.mxu0 0
    %1730 = vmatprep.subr.bf16.mxu0 0
    %1731 = vmatpush1.bf16.msra.mxu0 0
    %1732 = vmatprep.subr.bf16.mxu0 0
    %1733 = vmatpush1.bf16.msra.mxu0 0
    %1734 = vmatprep.subr.bf16.mxu0 0
    %1735 = vmatpush1.bf16.msra.mxu0 0
    %1736 = vmatprep.subr.bf16.mxu0 0
    %1737 = vmatpush1.bf16.msra.mxu0 0
    %1738 = vmatprep.subr.bf16.mxu0 0
    %1739 = vmatpush1.bf16.msra.mxu0 0
    %1740 = vmatprep.subr.bf16.mxu0 0
    %1741 = vmatpush1.bf16.msra.mxu0 0
    %1742 = vmatprep.subr.bf16.mxu0 0
    %1743 = vmatpush1.bf16.msra.mxu0 0
    %1744 = vmatprep.mubr.bf16.mxu0 0
    %1745 = vmatmul.mubr.bf16.gmra.mrb[0].mxu0 %v1707
    %v1746 = vpop.f32.mrb[0].mxu0
    %v1747 = vadd.f32 0.0, %v1746
    %v1748 = vpop.f32.mrb[0].mxu0
    %v1749 = vpop.f32.mrb[0].mxu0
    %v1750 = vpop.f32.mrb[0].mxu0
    %1751 = vdwg.mxu0
    %1752 = vrot.lane.b32.xlu0 %v486, 64
    %v1753 = vpop.permute.xlu0 %1752
    %v1755 = vsel %vm678, %v1607, 0
    %v1758 = vsel %vm730, %v1753, 0
    %1760 = vmatprep.subr.bf16.mxu0 0
    %1761 = vmatpush1.bf16.msra.mxu0 %v1758
    %1762 = vmatprep.subr.bf16.mxu0 0
    %1763 = vmatpush1.bf16.msra.mxu0 0
    %1764 = vmatprep.subr.bf16.mxu0 0
    %1765 = vmatpush1.bf16.msra.mxu0 0
    %1766 = vmatprep.subr.bf16.mxu0 0
    %1767 = vmatpush1.bf16.msra.mxu0 0
    %1768 = vmatprep.subr.bf16.mxu0 0
    %1769 = vmatpush1.bf16.msra.mxu0 0
    %1770 = vmatprep.subr.bf16.mxu0 0
    %1771 = vmatpush1.bf16.msra.mxu0 0
    %1772 = vmatprep.subr.bf16.mxu0 0
    %1773 = vmatpush1.bf16.msra.mxu0 0
    %1774 = vmatprep.subr.bf16.mxu0 0
    %1775 = vmatpush1.bf16.msra.mxu0 0
    %1776 = vmatprep.subr.bf16.mxu0 0
    %1777 = vmatpush1.bf16.msra.mxu0 0
    %1778 = vmatprep.subr.bf16.mxu0 0
    %1779 = vmatpush1.bf16.msra.mxu0 0
    %1780 = vmatprep.subr.bf16.mxu0 0
    %1781 = vmatpush1.bf16.msra.mxu0 0
    %1782 = vmatprep.subr.bf16.mxu0 0
    %1783 = vmatpush1.bf16.msra.mxu0 0
    %1784 = vmatprep.subr.bf16.mxu0 0
    %1785 = vmatpush1.bf16.msra.mxu0 0
    %1786 = vmatprep.subr.bf16.mxu0 0
    %1787 = vmatpush1.bf16.msra.mxu0 0
    %1788 = vmatprep.subr.bf16.mxu0 0
    %1789 = vmatpush1.bf16.msra.mxu0 0
    %1790 = vmatprep.subr.bf16.mxu0 0
    %1791 = vmatpush1.bf16.msra.mxu0 0
    %1792 = vmatprep.mubr.bf16.mxu0 0
    %1793 = vmatmul.mubr.bf16.gmra.mrb[0].mxu0 %v1755
    %v1794 = vpop.f32.mrb[0].mxu0
    %v1795 = vadd.f32 0.0, %v1794
    %v1796 = vpop.f32.mrb[0].mxu0
    %v1797 = vpop.f32.mrb[0].mxu0
    %v1798 = vpop.f32.mrb[0].mxu0
    %1799 = vdwg.mxu0
    %1800 = vrot.lane.b32.xlu0 %v463, 32
    %v1801 = vpop.permute.xlu0 %1800
    %1802 = vrot.lane.b32.xlu0 %v473, 32
    %v1803 = vpop.permute.xlu0 %1802
    %v1805 = vsel %vm487, %v1801, 0
    %v1808 = vsel %vm487, %v1803, 0
    %1810 = vmatprep.subr.bf16.mxu0 0
    %1811 = vmatpush1.bf16.xpose.msra.mxu0 %v1808
    %1812 = vmatprep.subr.bf16.mxu0 0
    %1813 = vmatpush1.bf16.xpose.msra.mxu0 0
    %1814 = vmatprep.subr.bf16.mxu0 0
    %1815 = vmatpush1.bf16.xpose.msra.mxu0 0
    %1816 = vmatprep.subr.bf16.mxu0 0
    %1817 = vmatpush1.bf16.xpose.msra.mxu0 0
    %1818 = vmatprep.subr.bf16.mxu0 0
    %1819 = vmatpush1.bf16.xpose.msra.mxu0 0
    %1820 = vmatprep.subr.bf16.mxu0 0
    %1821 = vmatpush1.bf16.xpose.msra.mxu0 0
    %1822 = vmatprep.subr.bf16.mxu0 0
    %1823 = vmatpush1.bf16.xpose.msra.mxu0 0
    %1824 = vmatprep.subr.bf16.mxu0 0
    %1825 = vmatpush1.bf16.xpose.msra.mxu0 0
    %1826 = vmatprep.subr.bf16.mxu0 0
    %1827 = vmatpush1.bf16.xpose.msra.mxu0 0
    %1828 = vmatprep.subr.bf16.mxu0 0
    %1829 = vmatpush1.bf16.xpose.msra.mxu0 0
    %1830 = vmatprep.subr.bf16.mxu0 0
    %1831 = vmatpush1.bf16.xpose.msra.mxu0 0
    %1832 = vmatprep.subr.bf16.mxu0 0
    %1833 = vmatpush1.bf16.xpose.msra.mxu0 0
    %1834 = vmatprep.subr.bf16.mxu0 0
    %1835 = vmatpush1.bf16.xpose.msra.mxu0 0
    %1836 = vmatprep.subr.bf16.mxu0 0
    %1837 = vmatpush1.bf16.xpose.msra.mxu0 0
    %1838 = vmatprep.subr.bf16.mxu0 0
    %1839 = vmatpush1.bf16.xpose.msra.mxu0 0
    %1840 = vmatprep.subr.bf16.mxu0 0
    %1841 = vmatpush1.bf16.xpose.msra.mxu0 0
    %1842 = vmatprep.mubr.bf16.mxu0 0
    %1843 = vmatmul.mubr.bf16.gmra.mrb[0].mxu0 %v1805
    %v1844 = vpop.f32.mrb[0].mxu0
    %v1845 = vadd.f32 0.0, %v1844
    %v1846 = vpop.f32.mrb[0].mxu0
    %v1847 = vpop.f32.mrb[0].mxu0
    %v1848 = vpop.f32.mrb[0].mxu0
    %1849 = vdwg.mxu0
    %1850 = vrot.lane.b32.xlu0 %v464, 32
    %v1851 = vpop.permute.xlu0 %1850
    %1852 = vrot.lane.b32.xlu0 %v474, 32
    %v1853 = vpop.permute.xlu0 %1852
    %v1855 = vsel %vm487, %v1851, 0
    %v1858 = vsel %vm487, %v1853, 0
    %1860 = vmatprep.subr.bf16.mxu0 0
    %1861 = vmatpush1.bf16.xpose.msra.mxu0 %v1858
    %1862 = vmatprep.subr.bf16.mxu0 0
    %1863 = vmatpush1.bf16.xpose.msra.mxu0 0
    %1864 = vmatprep.subr.bf16.mxu0 0
    %1865 = vmatpush1.bf16.xpose.msra.mxu0 0
    %1866 = vmatprep.subr.bf16.mxu0 0
    %1867 = vmatpush1.bf16.xpose.msra.mxu0 0
    %1868 = vmatprep.subr.bf16.mxu0 0
    %1869 = vmatpush1.bf16.xpose.msra.mxu0 0
    %1870 = vmatprep.subr.bf16.mxu0 0
    %1871 = vmatpush1.bf16.xpose.msra.mxu0 0
    %1872 = vmatprep.subr.bf16.mxu0 0
    %1873 = vmatpush1.bf16.xpose.msra.mxu0 0
    %1874 = vmatprep.subr.bf16.mxu0 0
    %1875 = vmatpush1.bf16.xpose.msra.mxu0 0
    %1876 = vmatprep.subr.bf16.mxu0 0
    %1877 = vmatpush1.bf16.xpose.msra.mxu0 0
    %1878 = vmatprep.subr.bf16.mxu0 0
    %1879 = vmatpush1.bf16.xpose.msra.mxu0 0
    %1880 = vmatprep.subr.bf16.mxu0 0
    %1881 = vmatpush1.bf16.xpose.msra.mxu0 0
    %1882 = vmatprep.subr.bf16.mxu0 0
    %1883 = vmatpush1.bf16.xpose.msra.mxu0 0
    %1884 = vmatprep.subr.bf16.mxu0 0
    %1885 = vmatpush1.bf16.xpose.msra.mxu0 0
    %1886 = vmatprep.subr.bf16.mxu0 0
    %1887 = vmatpush1.bf16.xpose.msra.mxu0 0
    %1888 = vmatprep.subr.bf16.mxu0 0
    %1889 = vmatpush1.bf16.xpose.msra.mxu0 0
    %1890 = vmatprep.subr.bf16.mxu0 0
    %1891 = vmatpush1.bf16.xpose.msra.mxu0 0
    %1892 = vmatprep.mubr.bf16.mxu0 0
    %1893 = vmatmul.mubr.bf16.gmra.mrb[0].mxu0 %v1855
    %v1894 = vpop.f32.mrb[0].mxu0
    %v1895 = vadd.f32 0.0, %v1894
    %v1896 = vpop.f32.mrb[0].mxu0
    %v1897 = vpop.f32.mrb[0].mxu0
    %v1898 = vpop.f32.mrb[0].mxu0
    %1899 = vdwg.mxu0
    %1900 = vrot.lane.b32.xlu0 %v465, 32
    %v1901 = vpop.permute.xlu0 %1900
    %1902 = vrot.lane.b32.xlu0 %v475, 32
    %v1903 = vpop.permute.xlu0 %1902
    %v1905 = vsel %vm487, %v1901, 0
    %v1908 = vsel %vm487, %v1903, 0
    %1910 = vmatprep.subr.bf16.mxu0 0
    %1911 = vmatpush1.bf16.xpose.msra.mxu0 %v1908
    %1912 = vmatprep.subr.bf16.mxu0 0
    %1913 = vmatpush1.bf16.xpose.msra.mxu0 0
    %1914 = vmatprep.subr.bf16.mxu0 0
    %1915 = vmatpush1.bf16.xpose.msra.mxu0 0
    %1916 = vmatprep.subr.bf16.mxu0 0
    %1917 = vmatpush1.bf16.xpose.msra.mxu0 0
    %1918 = vmatprep.subr.bf16.mxu0 0
    %1919 = vmatpush1.bf16.xpose.msra.mxu0 0
    %1920 = vmatprep.subr.bf16.mxu0 0
    %1921 = vmatpush1.bf16.xpose.msra.mxu0 0
    %1922 = vmatprep.subr.bf16.mxu0 0
    %1923 = vmatpush1.bf16.xpose.msra.mxu0 0
    %1924 = vmatprep.subr.bf16.mxu0 0
    %1925 = vmatpush1.bf16.xpose.msra.mxu0 0
    %1926 = vmatprep.subr.bf16.mxu0 0
    %1927 = vmatpush1.bf16.xpose.msra.mxu0 0
    %1928 = vmatprep.subr.bf16.mxu0 0
    %1929 = vmatpush1.bf16.xpose.msra.mxu0 0
    %1930 = vmatprep.subr.bf16.mxu0 0
    %1931 = vmatpush1.bf16.xpose.msra.mxu0 0
    %1932 = vmatprep.subr.bf16.mxu0 0
    %1933 = vmatpush1.bf16.xpose.msra.mxu0 0
    %1934 = vmatprep.subr.bf16.mxu0 0
    %1935 = vmatpush1.bf16.xpose.msra.mxu0 0
    %1936 = vmatprep.subr.bf16.mxu0 0
    %1937 = vmatpush1.bf16.xpose.msra.mxu0 0
    %1938 = vmatprep.subr.bf16.mxu0 0
    %1939 = vmatpush1.bf16.xpose.msra.mxu0 0
    %1940 = vmatprep.subr.bf16.mxu0 0
    %1941 = vmatpush1.bf16.xpose.msra.mxu0 0
    %1942 = vmatprep.mubr.bf16.mxu0 0
    %1943 = vmatmul.mubr.bf16.gmra.mrb[0].mxu0 %v1905
    %v1944 = vpop.f32.mrb[0].mxu0
    %v1945 = vadd.f32 0.0, %v1944
    %v1946 = vpop.f32.mrb[0].mxu0
    %v1947 = vpop.f32.mrb[0].mxu0
    %v1948 = vpop.f32.mrb[0].mxu0
    %1949 = vdwg.mxu0
    %1950 = vrot.lane.b32.xlu0 %v466, 32
    %v1951 = vpop.permute.xlu0 %1950
    %1952 = vrot.lane.b32.xlu0 %v476, 32
    %v1953 = vpop.permute.xlu0 %1952
    %v1955 = vsel %vm487, %v1951, 0
    %v1958 = vsel %vm487, %v1953, 0
    %1960 = vmatprep.subr.bf16.mxu0 0
    %1961 = vmatpush1.bf16.xpose.msra.mxu0 %v1958
    %1962 = vmatprep.subr.bf16.mxu0 0
    %1963 = vmatpush1.bf16.xpose.msra.mxu0 0
    %1964 = vmatprep.subr.bf16.mxu0 0
    %1965 = vmatpush1.bf16.xpose.msra.mxu0 0
    %1966 = vmatprep.subr.bf16.mxu0 0
    %1967 = vmatpush1.bf16.xpose.msra.mxu0 0
    %1968 = vmatprep.subr.bf16.mxu0 0
    %1969 = vmatpush1.bf16.xpose.msra.mxu0 0
    %1970 = vmatprep.subr.bf16.mxu0 0
    %1971 = vmatpush1.bf16.xpose.msra.mxu0 0
    %1972 = vmatprep.subr.bf16.mxu0 0
    %1973 = vmatpush1.bf16.xpose.msra.mxu0 0
    %1974 = vmatprep.subr.bf16.mxu0 0
    %1975 = vmatpush1.bf16.xpose.msra.mxu0 0
    %1976 = vmatprep.subr.bf16.mxu0 0
    %1977 = vmatpush1.bf16.xpose.msra.mxu0 0
    %1978 = vmatprep.subr.bf16.mxu0 0
    %1979 = vmatpush1.bf16.xpose.msra.mxu0 0
    %1980 = vmatprep.subr.bf16.mxu0 0
    %1981 = vmatpush1.bf16.xpose.msra.mxu0 0
    %1982 = vmatprep.subr.bf16.mxu0 0
    %1983 = vmatpush1.bf16.xpose.msra.mxu0 0
    %1984 = vmatprep.subr.bf16.mxu0 0
    %1985 = vmatpush1.bf16.xpose.msra.mxu0 0
    %1986 = vmatprep.subr.bf16.mxu0 0
    %1987 = vmatpush1.bf16.xpose.msra.mxu0 0
    %1988 = vmatprep.subr.bf16.mxu0 0
    %1989 = vmatpush1.bf16.xpose.msra.mxu0 0
    %1990 = vmatprep.subr.bf16.mxu0 0
    %1991 = vmatpush1.bf16.xpose.msra.mxu0 0
    %1992 = vmatprep.mubr.bf16.mxu0 0
    %1993 = vmatmul.mubr.bf16.gmra.mrb[0].mxu0 %v1955
    %v1994 = vpop.f32.mrb[0].mxu0
    %v1995 = vadd.f32 0.0, %v1994
    %v1996 = vpop.f32.mrb[0].mxu0
    %v1997 = vpop.f32.mrb[0].mxu0
    %v1998 = vpop.f32.mrb[0].mxu0
    %1999 = vdwg.mxu0
    %v2000 = vsel %vm673, %v1845, -1e+09
    %v2001 = vsel %vm673, %v1895, -1e+09
    %v2002 = vsel %vm673, %v1945, -1e+09
    %v2003 = vsel %vm673, %v1995, -1e+09
    %v2004 = vsel %vm678, %v2000, -inf
    %2005 = vmax.xlane.f32.xlu0 %v2004
    %v2006 = vpop.xlane.xlu0 %2005
    %v2007 = vsel %vm678, %v2001, -inf
    %2008 = vmax.xlane.f32.xlu0 %v2007
    %v2009 = vpop.xlane.xlu0 %2008
    %v2010 = vsel %vm678, %v2002, -inf
    %2011 = vmax.xlane.f32.xlu0 %v2010
    %v2012 = vpop.xlane.xlu0 %2011
    %v2013 = vsel %vm678, %v2003, -inf
    %2014 = vmax.xlane.f32.xlu0 %v2013
    %v2015 = vpop.xlane.xlu0 %2014
    %v2016 = vsub.f32 %v2000, %v2006
    %v2017 = vsub.f32 %v2001, %v2009
    %v2018 = vsub.f32 %v2002, %v2012
    %v2019 = vsub.f32 %v2003, %v2015
    %v2020 = vmul.f32 %v2016, 1.442695
    %v2021 = vpow.pop %v2020
    %v2022 = vmul.f32 %v2017, 1.442695
    %v2023 = vpow.pop %v2022
    %v2024 = vmul.f32 %v2018, 1.442695
    %v2025 = vpow.pop %v2024
    %v2026 = vmul.f32 %v2019, 1.442695
    %v2027 = vpow.pop %v2026
    %v2028 = vsel %vm678, %v2021, 0.0
    %2029 = vadd.xlane.f32.xlu0 %v2028
    %v2030 = vpop.xlane.xlu0 %2029
    %v2031 = vsel %vm678, %v2023, 0.0
    %2032 = vadd.xlane.f32.xlu0 %v2031
    %v2033 = vpop.xlane.xlu0 %2032
    %v2034 = vsel %vm678, %v2025, 0.0
    %2035 = vadd.xlane.f32.xlu0 %v2034
    %v2036 = vpop.xlane.xlu0 %2035
    %v2037 = vsel %vm678, %v2027, 0.0
    %2038 = vadd.xlane.f32.xlu0 %v2037
    %v2039 = vpop.xlane.xlu0 %2038
    %v2040 = vrcp.pop %v2030
    %v2041 = vrcp.pop %v2033
    %v2042 = vrcp.pop %v2036
    %v2043 = vrcp.pop %v2039
    %v2044 = vmul.f32 %v2021, %v2040
    %v2045 = vmul.f32 %v2023, %v2041
    %v2046 = vmul.f32 %v2025, %v2042
    %v2047 = vmul.f32 %v2027, %v2043
    %v2048 = vpack.c.bf16 %v2044, %v2044
    %v2049 = vpack.c.bf16 %v2045, %v2045
    %v2050 = vpack.c.bf16 %v2046, %v2046
    %v2051 = vpack.c.bf16 %v2047, %v2047
    %2052 = vrot.lane.b32.xlu0 %v483, 32
    %v2053 = vpop.permute.xlu0 %2052
    %v2055 = vsel %vm678, %v2048, 0
    %v2058 = vsel %vm730, %v2053, 0
    %2060 = vmatprep.subr.bf16.mxu0 0
    %2061 = vmatpush1.bf16.msra.mxu0 %v2058
    %2062 = vmatprep.subr.bf16.mxu0 0
    %2063 = vmatpush1.bf16.msra.mxu0 0
    %2064 = vmatprep.subr.bf16.mxu0 0
    %2065 = vmatpush1.bf16.msra.mxu0 0
    %2066 = vmatprep.subr.bf16.mxu0 0
    %2067 = vmatpush1.bf16.msra.mxu0 0
    %2068 = vmatprep.subr.bf16.mxu0 0
    %2069 = vmatpush1.bf16.msra.mxu0 0
    %2070 = vmatprep.subr.bf16.mxu0 0
    %2071 = vmatpush1.bf16.msra.mxu0 0
    %2072 = vmatprep.subr.bf16.mxu0 0
    %2073 = vmatpush1.bf16.msra.mxu0 0
    %2074 = vmatprep.subr.bf16.mxu0 0
    %2075 = vmatpush1.bf16.msra.mxu0 0
    %2076 = vmatprep.subr.bf16.mxu0 0
    %2077 = vmatpush1.bf16.msra.mxu0 0
    %2078 = vmatprep.subr.bf16.mxu0 0
    %2079 = vmatpush1.bf16.msra.mxu0 0
    %2080 = vmatprep.subr.bf16.mxu0 0
    %2081 = vmatpush1.bf16.msra.mxu0 0
    %2082 = vmatprep.subr.bf16.mxu0 0
    %2083 = vmatpush1.bf16.msra.mxu0 0
    %2084 = vmatprep.subr.bf16.mxu0 0
    %2085 = vmatpush1.bf16.msra.mxu0 0
    %2086 = vmatprep.subr.bf16.mxu0 0
    %2087 = vmatpush1.bf16.msra.mxu0 0
    %2088 = vmatprep.subr.bf16.mxu0 0
    %2089 = vmatpush1.bf16.msra.mxu0 0
    %2090 = vmatprep.subr.bf16.mxu0 0
    %2091 = vmatpush1.bf16.msra.mxu0 0
    %2092 = vmatprep.mubr.bf16.mxu0 0
    %2093 = vmatmul.mubr.bf16.gmra.mrb[0].mxu0 %v2055
    %v2094 = vpop.f32.mrb[0].mxu0
    %v2095 = vadd.f32 0.0, %v2094
    %v2096 = vpop.f32.mrb[0].mxu0
    %v2097 = vpop.f32.mrb[0].mxu0
    %v2098 = vpop.f32.mrb[0].mxu0
    %2099 = vdwg.mxu0
    %2100 = vrot.lane.b32.xlu0 %v484, 32
    %v2101 = vpop.permute.xlu0 %2100
    %v2103 = vsel %vm678, %v2049, 0
    %v2106 = vsel %vm730, %v2101, 0
    %2108 = vmatprep.subr.bf16.mxu0 0
    %2109 = vmatpush1.bf16.msra.mxu0 %v2106
    %2110 = vmatprep.subr.bf16.mxu0 0
    %2111 = vmatpush1.bf16.msra.mxu0 0
    %2112 = vmatprep.subr.bf16.mxu0 0
    %2113 = vmatpush1.bf16.msra.mxu0 0
    %2114 = vmatprep.subr.bf16.mxu0 0
    %2115 = vmatpush1.bf16.msra.mxu0 0
    %2116 = vmatprep.subr.bf16.mxu0 0
    %2117 = vmatpush1.bf16.msra.mxu0 0
    %2118 = vmatprep.subr.bf16.mxu0 0
    %2119 = vmatpush1.bf16.msra.mxu0 0
    %2120 = vmatprep.subr.bf16.mxu0 0
    %2121 = vmatpush1.bf16.msra.mxu0 0
    %2122 = vmatprep.subr.bf16.mxu0 0
    %2123 = vmatpush1.bf16.msra.mxu0 0
    %2124 = vmatprep.subr.bf16.mxu0 0
    %2125 = vmatpush1.bf16.msra.mxu0 0
    %2126 = vmatprep.subr.bf16.mxu0 0
    %2127 = vmatpush1.bf16.msra.mxu0 0
    %2128 = vmatprep.subr.bf16.mxu0 0
    %2129 = vmatpush1.bf16.msra.mxu0 0
    %2130 = vmatprep.subr.bf16.mxu0 0
    %2131 = vmatpush1.bf16.msra.mxu0 0
    %2132 = vmatprep.subr.bf16.mxu0 0
    %2133 = vmatpush1.bf16.msra.mxu0 0
    %2134 = vmatprep.subr.bf16.mxu0 0
    %2135 = vmatpush1.bf16.msra.mxu0 0
    %2136 = vmatprep.subr.bf16.mxu0 0
    %2137 = vmatpush1.bf16.msra.mxu0 0
    %2138 = vmatprep.subr.bf16.mxu0 0
    %2139 = vmatpush1.bf16.msra.mxu0 0
    %2140 = vmatprep.mubr.bf16.mxu0 0
    %2141 = vmatmul.mubr.bf16.gmra.mrb[0].mxu0 %v2103
    %v2142 = vpop.f32.mrb[0].mxu0
    %v2143 = vadd.f32 0.0, %v2142
    %v2144 = vpop.f32.mrb[0].mxu0
    %v2145 = vpop.f32.mrb[0].mxu0
    %v2146 = vpop.f32.mrb[0].mxu0
    %2147 = vdwg.mxu0
    %2148 = vrot.lane.b32.xlu0 %v485, 32
    %v2149 = vpop.permute.xlu0 %2148
    %v2151 = vsel %vm678, %v2050, 0
    %v2154 = vsel %vm730, %v2149, 0
    %2156 = vmatprep.subr.bf16.mxu0 0
    %2157 = vmatpush1.bf16.msra.mxu0 %v2154
    %2158 = vmatprep.subr.bf16.mxu0 0
    %2159 = vmatpush1.bf16.msra.mxu0 0
    %2160 = vmatprep.subr.bf16.mxu0 0
    %2161 = vmatpush1.bf16.msra.mxu0 0
    %2162 = vmatprep.subr.bf16.mxu0 0
    %2163 = vmatpush1.bf16.msra.mxu0 0
    %2164 = vmatprep.subr.bf16.mxu0 0
    %2165 = vmatpush1.bf16.msra.mxu0 0
    %2166 = vmatprep.subr.bf16.mxu0 0
    %2167 = vmatpush1.bf16.msra.mxu0 0
    %2168 = vmatprep.subr.bf16.mxu0 0
    %2169 = vmatpush1.bf16.msra.mxu0 0
    %2170 = vmatprep.subr.bf16.mxu0 0
    %2171 = vmatpush1.bf16.msra.mxu0 0
    %2172 = vmatprep.subr.bf16.mxu0 0
    %2173 = vmatpush1.bf16.msra.mxu0 0
    %2174 = vmatprep.subr.bf16.mxu0 0
    %2175 = vmatpush1.bf16.msra.mxu0 0
    %2176 = vmatprep.subr.bf16.mxu0 0
    %2177 = vmatpush1.bf16.msra.mxu0 0
    %2178 = vmatprep.subr.bf16.mxu0 0
    %2179 = vmatpush1.bf16.msra.mxu0 0
    %2180 = vmatprep.subr.bf16.mxu0 0
    %2181 = vmatpush1.bf16.msra.mxu0 0
    %2182 = vmatprep.subr.bf16.mxu0 0
    %2183 = vmatpush1.bf16.msra.mxu0 0
    %2184 = vmatprep.subr.bf16.mxu0 0
    %2185 = vmatpush1.bf16.msra.mxu0 0
    %2186 = vmatprep.subr.bf16.mxu0 0
    %2187 = vmatpush1.bf16.msra.mxu0 0
    %2188 = vmatprep.mubr.bf16.mxu0 0
    %2189 = vmatmul.mubr.bf16.gmra.mrb[0].mxu0 %v2151
    %v2190 = vpop.f32.mrb[0].mxu0
    %v2191 = vadd.f32 0.0, %v2190
    %v2192 = vpop.f32.mrb[0].mxu0
    %v2193 = vpop.f32.mrb[0].mxu0
    %v2194 = vpop.f32.mrb[0].mxu0
    %2195 = vdwg.mxu0
    %2196 = vrot.lane.b32.xlu0 %v486, 32
    %v2197 = vpop.permute.xlu0 %2196
    %v2199 = vsel %vm678, %v2051, 0
    %v2202 = vsel %vm730, %v2197, 0
    %2204 = vmatprep.subr.bf16.mxu0 0
    %2205 = vmatpush1.bf16.msra.mxu0 %v2202
    %2206 = vmatprep.subr.bf16.mxu0 0
    %2207 = vmatpush1.bf16.msra.mxu0 0
    %2208 = vmatprep.subr.bf16.mxu0 0
    %2209 = vmatpush1.bf16.msra.mxu0 0
    %2210 = vmatprep.subr.bf16.mxu0 0
    %2211 = vmatpush1.bf16.msra.mxu0 0
    %2212 = vmatprep.subr.bf16.mxu0 0
    %2213 = vmatpush1.bf16.msra.mxu0 0
    %2214 = vmatprep.subr.bf16.mxu0 0
    %2215 = vmatpush1.bf16.msra.mxu0 0
    %2216 = vmatprep.subr.bf16.mxu0 0
    %2217 = vmatpush1.bf16.msra.mxu0 0
    %2218 = vmatprep.subr.bf16.mxu0 0
    %2219 = vmatpush1.bf16.msra.mxu0 0
    %2220 = vmatprep.subr.bf16.mxu0 0
    %2221 = vmatpush1.bf16.msra.mxu0 0
    %2222 = vmatprep.subr.bf16.mxu0 0
    %2223 = vmatpush1.bf16.msra.mxu0 0
    %2224 = vmatprep.subr.bf16.mxu0 0
    %2225 = vmatpush1.bf16.msra.mxu0 0
    %2226 = vmatprep.subr.bf16.mxu0 0
    %2227 = vmatpush1.bf16.msra.mxu0 0
    %2228 = vmatprep.subr.bf16.mxu0 0
    %2229 = vmatpush1.bf16.msra.mxu0 0
    %2230 = vmatprep.subr.bf16.mxu0 0
    %2231 = vmatpush1.bf16.msra.mxu0 0
    %2232 = vmatprep.subr.bf16.mxu0 0
    %2233 = vmatpush1.bf16.msra.mxu0 0
    %2234 = vmatprep.subr.bf16.mxu0 0
    %2235 = vmatpush1.bf16.msra.mxu0 0
    %2236 = vmatprep.mubr.bf16.mxu0 0
    %2237 = vmatmul.mubr.bf16.gmra.mrb[0].mxu0 %v2199
    %v2238 = vpop.f32.mrb[0].mxu0
    %v2239 = vadd.f32 0.0, %v2238
    %v2240 = vpop.f32.mrb[0].mxu0
    %v2241 = vpop.f32.mrb[0].mxu0
    %v2242 = vpop.f32.mrb[0].mxu0
    %2243 = vdwg.mxu0
    %2248 = vrot.lane.b32.xlu0 %v1207, 32
    %v2249 = vpop.permute.xlu0 %2248
    %2250 = vrot.lane.b32.xlu0 %v1255, 32
    %v2251 = vpop.permute.xlu0 %2250
    %2252 = vrot.lane.b32.xlu0 %v1303, 32
    %v2253 = vpop.permute.xlu0 %2252
    %2254 = vrot.lane.b32.xlu0 %v1351, 32
    %v2255 = vpop.permute.xlu0 %2254
    %2264 = vrot.lane.b32.xlu0 %v1651, 64
    %v2265 = vpop.permute.xlu0 %2264
    %2266 = vrot.lane.b32.xlu0 %v1699, 64
    %v2267 = vpop.permute.xlu0 %2266
    %2268 = vrot.lane.b32.xlu0 %v1747, 64
    %v2269 = vpop.permute.xlu0 %2268
    %2270 = vrot.lane.b32.xlu0 %v1795, 64
    %v2271 = vpop.permute.xlu0 %2270
    %2280 = vrot.lane.b32.xlu0 %v2095, 96
    %v2281 = vpop.permute.xlu0 %2280
    %2282 = vrot.lane.b32.xlu0 %v2143, 96
    %v2283 = vpop.permute.xlu0 %2282
    %2284 = vrot.lane.b32.xlu0 %v2191, 96
    %v2285 = vpop.permute.xlu0 %2284
    %2286 = vrot.lane.b32.xlu0 %v2239, 96
    %v2287 = vpop.permute.xlu0 %2286
    %v2292 = vsel %vm487, %v769, %v2249
    %v2293 = vsel %vm487, %v815, %v2251
    %v2294 = vsel %vm487, %v861, %v2253
    %v2295 = vsel %vm487, %v907, %v2255
    %vm2296 = vcmask 523264
    %v2297 = vsel %vm2296, %v2292, %v2265
    %v2298 = vsel %vm2296, %v2293, %v2267
    %v2299 = vsel %vm2296, %v2294, %v2269
    %v2300 = vsel %vm2296, %v2295, %v2271
    %vm2301 = vcmask 785408
    %v2302 = vsel %vm2301, %v2297, %v2281
    %v2303 = vsel %vm2301, %v2298, %v2283
    %v2304 = vsel %vm2301, %v2299, %v2285
    %v2305 = vsel %vm2301, %v2300, %v2287
    %v2306 = vpack.c.bf16 %v2303, %v2302
    %v2307 = vpack.c.bf16 %v2305, %v2304
    %v2308 = vld [vmem:[#allocation7] sm:$0xf]
    %v2309 = vld [vmem:[#allocation7 + $0x4] sm:$0xf]
    %v2310 = vld [vmem:[#allocation7 + $0x8] sm:$0xf]
    %v2311 = vld [vmem:[#allocation7 + $0xc] sm:$0xf]
    %v2312 = vld [vmem:[#allocation7 + $0x10] sm:$0xf]
    %v2313 = vld [vmem:[#allocation7 + $0x14] sm:$0xf]
    %v2314 = vld [vmem:[#allocation7 + $0x18] sm:$0xf]
    %v2315 = vld [vmem:[#allocation7 + $0x1c] sm:$0xf]
    %v2316 = vld [vmem:[#allocation7 + $0x20] sm:$0xf]
    %v2317 = vld [vmem:[#allocation7 + $0x24] sm:$0xf]
    %v2318 = vld [vmem:[#allocation7 + $0x28] sm:$0xf]
    %v2319 = vld [vmem:[#allocation7 + $0x2c] sm:$0xf]
    %v2320 = vld [vmem:[#allocation7 + $0x30] sm:$0xf]
    %v2321 = vld [vmem:[#allocation7 + $0x34] sm:$0xf]
    %v2322 = vld [vmem:[#allocation7 + $0x38] sm:$0xf]
    %v2323 = vld [vmem:[#allocation7 + $0x3c] sm:$0xf]
    %v2324 = vld [vmem:[%s5] sm:$0x1]
    %v2326 = vlaneseq
    %v2327 = vshrl.u32 %v2326, 7
    %v2328 = vsub.s32 0, %v2327
    %v2329 = vrot.slane %v2324, %v2328
    %v2347 = vunpack.c.l.b16 %v2308
    %v2348 = vunpack.c.l.b16 %v2309
    %v2349 = vunpack.c.l.b16 %v2310
    %v2350 = vunpack.c.l.b16 %v2311
    %v2351 = vunpack.c.l.b16 %v2312
    %v2352 = vunpack.c.l.b16 %v2313
    %v2353 = vunpack.c.l.b16 %v2314
    %v2354 = vunpack.c.l.b16 %v2315
    %v2355 = vunpack.c.l.b16 %v2316
    %v2356 = vunpack.c.l.b16 %v2317
    %v2357 = vunpack.c.l.b16 %v2318
    %v2358 = vunpack.c.l.b16 %v2319
    %v2359 = vunpack.c.l.b16 %v2320
    %v2360 = vunpack.c.l.b16 %v2321
    %v2361 = vunpack.c.l.b16 %v2322
    %v2362 = vunpack.c.l.b16 %v2323
    %v2363 = vpack.c.b16 %v2348, %v2347
    %v2364 = vpack.c.b16 %v2350, %v2349
    %v2365 = vpack.c.b16 %v2352, %v2351
    %v2366 = vpack.c.b16 %v2354, %v2353
    %v2367 = vpack.c.b16 %v2356, %v2355
    %v2368 = vpack.c.b16 %v2358, %v2357
    %v2369 = vpack.c.b16 %v2360, %v2359
    %v2370 = vpack.c.b16 %v2362, %v2361
    %2379 = vmatprep.subr.bf16.mxu0 0
    %2380 = vmatpush1.bf16.msra.mxu0 %v2363
    %2381 = vmatprep.subr.bf16.mxu0 0
    %2382 = vmatpush1.bf16.msra.mxu0 %v2364
    %2383 = vmatprep.subr.bf16.mxu0 0
    %2384 = vmatpush1.bf16.msra.mxu0 %v2365
    %2385 = vmatprep.subr.bf16.mxu0 0
    %2386 = vmatpush1.bf16.msra.mxu0 %v2366
    %2387 = vmatprep.subr.bf16.mxu0 0
    %2388 = vmatpush1.bf16.msra.mxu0 %v2367
    %2389 = vmatprep.subr.bf16.mxu0 0
    %2390 = vmatpush1.bf16.msra.mxu0 %v2368
    %2391 = vmatprep.subr.bf16.mxu0 0
    %2392 = vmatpush1.bf16.msra.mxu0 %v2369
    %2393 = vmatprep.subr.bf16.mxu0 0
    %2394 = vmatpush1.bf16.msra.mxu0 %v2370
    %2395 = vmatprep.subr.bf16.mxu0 0
    %2396 = vmatpush1.bf16.msra.mxu0 0
    %2397 = vmatprep.subr.bf16.mxu0 0
    %2398 = vmatpush1.bf16.msra.mxu0 0
    %2399 = vmatprep.subr.bf16.mxu0 0
    %2400 = vmatpush1.bf16.msra.mxu0 0
    %2401 = vmatprep.subr.bf16.mxu0 0
    %2402 = vmatpush1.bf16.msra.mxu0 0
    %2403 = vmatprep.subr.bf16.mxu0 0
    %2404 = vmatpush1.bf16.msra.mxu0 0
    %2405 = vmatprep.subr.bf16.mxu0 0
    %2406 = vmatpush1.bf16.msra.mxu0 0
    %2407 = vmatprep.subr.bf16.mxu0 0
    %2408 = vmatpush1.bf16.msra.mxu0 0
    %2409 = vmatprep.subr.bf16.mxu0 0
    %2410 = vmatpush1.bf16.msra.mxu0 0
    %2411 = vmatprep.mubr.bf16.mxu0 0
    %2412 = vmatmul.mubr.bf16.gmra.mrb[0].mxu0 %v2306
    %v2413 = vpop.f32.mrb[0].mxu0
    %v2414 = vadd.f32 %v2329, %v2413
    %v2415 = vpop.f32.mrb[0].mxu0
    %v2416 = vpop.f32.mrb[0].mxu0
    %v2417 = vadd.f32 %v2329, %v2416
    %v2418 = vpop.f32.mrb[0].mxu0
    %2419 = vmatprep.mubr.bf16.mxu0 0
    %2420 = vmatmul.mubr.bf16.gmra.mrb[0].mxu0 %v2307
    %v2421 = vpop.f32.mrb[0].mxu0
    %v2422 = vadd.f32 %v2329, %v2421
    %v2423 = vpop.f32.mrb[0].mxu0
    %v2424 = vpop.f32.mrb[0].mxu0
    %v2425 = vadd.f32 %v2329, %v2424
    %v2426 = vpop.f32.mrb[0].mxu0
    %2427 = vdwg.mxu0
    %v2428 = vadd.f32 %v111, %v2414
    %v2429 = vadd.f32 %v112, %v2417
    %v2430 = vadd.f32 %v113, %v2422
    %v2431 = vadd.f32 %v114, %v2425
    %v2432 = vld [vmem:[%s6] sm:$0x1]
    %v2433 = vld [vmem:[%s7] sm:$0x1]
    %2434 = vadd.xlane.f32.xlu0 %v2428
    %v2435 = vpop.xlane.xlu0 %2434
    %2436 = vadd.xlane.f32.xlu0 %v2429
    %v2437 = vpop.xlane.xlu0 %2436
    %2438 = vadd.xlane.f32.xlu0 %v2430
    %v2439 = vpop.xlane.xlu0 %2438
    %2440 = vadd.xlane.f32.xlu0 %v2431
    %v2441 = vpop.xlane.xlu0 %2440
    %v2442 = vmul.f32 %v2435, %v125
    %v2443 = vmul.f32 %v2437, %v125
    %v2444 = vmul.f32 %v2439, %v125
    %v2445 = vmul.f32 %v2441, %v125
    %v2446 = vsub.f32 %v2428, %v2442
    %v2447 = vsub.f32 %v2429, %v2443
    %v2448 = vsub.f32 %v2430, %v2444
    %v2449 = vsub.f32 %v2431, %v2445
    %v2450 = vmul.f32 %v2446, %v2446
    %v2451 = vmul.f32 %v2447, %v2447
    %v2452 = vmul.f32 %v2448, %v2448
    %v2453 = vmul.f32 %v2449, %v2449
    %2454 = vadd.xlane.f32.xlu0 %v2450
    %v2455 = vpop.xlane.xlu0 %2454
    %2456 = vadd.xlane.f32.xlu0 %v2451
    %v2457 = vpop.xlane.xlu0 %2456
    %2458 = vadd.xlane.f32.xlu0 %v2452
    %v2459 = vpop.xlane.xlu0 %2458
    %2460 = vadd.xlane.f32.xlu0 %v2453
    %v2461 = vpop.xlane.xlu0 %2460
    %v2462 = vmul.f32 %v2455, %v125
    %v2463 = vmul.f32 %v2457, %v125
    %v2464 = vmul.f32 %v2459, %v125
    %v2465 = vmul.f32 %v2461, %v125
    %v2466 = vadd.f32 %v2462, 1e-05
    %v2467 = vadd.f32 %v2463, 1e-05
    %v2468 = vadd.f32 %v2464, 1e-05
    %v2469 = vadd.f32 %v2465, 1e-05
    %v2470 = vrsqrt.pop %v2466
    %v2471 = vrsqrt.pop %v2467
    %v2472 = vrsqrt.pop %v2468
    %v2473 = vrsqrt.pop %v2469
    %v2474 = vmul.f32 %v2446, %v2470
    %v2475 = vmul.f32 %v2447, %v2471
    %v2476 = vmul.f32 %v2448, %v2472
    %v2477 = vmul.f32 %v2449, %v2473
    %v2479 = vlaneseq
    %v2480 = vshrl.u32 %v2479, 7
    %v2481 = vsub.s32 0, %v2480
    %v2482 = vrot.slane %v2432, %v2481
    %v2484 = vmul.f32 %v2474, %v2482
    %v2485 = vmul.f32 %v2475, %v2482
    %v2486 = vmul.f32 %v2476, %v2482
    %v2487 = vmul.f32 %v2477, %v2482
    %v2489 = vlaneseq
    %v2490 = vshrl.u32 %v2489, 7
    %v2491 = vsub.s32 0, %v2490
    %v2492 = vrot.slane %v2433, %v2491
    %v2494 = vadd.f32 %v2484, %v2492
    %v2495 = vadd.f32 %v2485, %v2492
    %v2496 = vadd.f32 %v2486, %v2492
    %v2497 = vadd.f32 %v2487, %v2492
    %v2498 = vpack.c.bf16 %v2495, %v2494
    %v2499 = vpack.c.bf16 %v2497, %v2496
    %v2500 = vld [vmem:[#allocation8] sm:$0xff]
    %v2501 = vld [vmem:[#allocation8 + $0x8] sm:$0xff]
    %v2502 = vld [vmem:[#allocation8 + $0x10] sm:$0xff]
    %v2503 = vld [vmem:[#allocation8 + $0x18] sm:$0xff]
    %v2504 = vld [vmem:[#allocation8 + $0x20] sm:$0xff]
    %v2505 = vld [vmem:[#allocation8 + $0x28] sm:$0xff]
    %v2506 = vld [vmem:[#allocation8 + $0x30] sm:$0xff]
    %v2507 = vld [vmem:[#allocation8 + $0x38] sm:$0xff]
    %v2508 = vld [vmem:[#allocation8 + $0x40] sm:$0xff]
    %v2509 = vld [vmem:[#allocation8 + $0x48] sm:$0xff]
    %v2510 = vld [vmem:[#allocation8 + $0x50] sm:$0xff]
    %v2511 = vld [vmem:[#allocation8 + $0x58] sm:$0xff]
    %v2512 = vld [vmem:[#allocation8 + $0x60] sm:$0xff]
    %v2513 = vld [vmem:[#allocation8 + $0x68] sm:$0xff]
    %v2514 = vld [vmem:[#allocation8 + $0x70] sm:$0xff]
    %v2515 = vld [vmem:[#allocation8 + $0x78] sm:$0xff]
    %v2516 = vld [vmem:[#allocation8 + $0x80] sm:$0xff]
    %v2517 = vld [vmem:[#allocation8 + $0x88] sm:$0xff]
    %v2518 = vld [vmem:[#allocation8 + $0x90] sm:$0xff]
    %v2519 = vld [vmem:[#allocation8 + $0x98] sm:$0xff]
    %v2520 = vld [vmem:[#allocation8 + $0xa0] sm:$0xff]
    %v2521 = vld [vmem:[#allocation8 + $0xa8] sm:$0xff]
    %v2522 = vld [vmem:[#allocation8 + $0xb0] sm:$0xff]
    %v2523 = vld [vmem:[#allocation8 + $0xb8] sm:$0xff]
    %v2524 = vld [vmem:[#allocation8 + $0xc0] sm:$0xff]
    %v2525 = vld [vmem:[#allocation8 + $0xc8] sm:$0xff]
    %v2526 = vld [vmem:[#allocation8 + $0xd0] sm:$0xff]
    %v2527 = vld [vmem:[#allocation8 + $0xd8] sm:$0xff]
    %v2528 = vld [vmem:[#allocation8 + $0xe0] sm:$0xff]
    %v2529 = vld [vmem:[#allocation8 + $0xe8] sm:$0xff]
    %v2530 = vld [vmem:[#allocation8 + $0xf0] sm:$0xff]
    %v2531 = vld [vmem:[#allocation8 + $0xf8] sm:$0xff]
    %v2532 = vld [vmem:[%s9] sm:$0xf]
    %v2534 = vlaneseq
    %v2535 = vshrl.u32 %v2534, 7
    %v2536 = vsub.s32 0, %v2535
    %v2537 = vrot.slane %v2532, %v2536
    %v2538 = vlaneseq
    %v2539 = vshrl.u32 %v2538, 7
    %v2540 = vsub.s32 1, %v2539
    %v2541 = vrot.slane %v2532, %v2540
    %v2542 = vlaneseq
    %v2543 = vshrl.u32 %v2542, 7
    %v2544 = vsub.s32 2, %v2543
    %v2545 = vrot.slane %v2532, %v2544
    %v2546 = vlaneseq
    %v2547 = vshrl.u32 %v2546, 7
    %v2548 = vsub.s32 3, %v2547
    %v2549 = vrot.slane %v2532, %v2548
    %v2586 = vunpack.c.l.b16 %v2500
    %v2587 = vunpack.c.h.b16 %v2500
    %v2588 = vunpack.c.l.b16 %v2501
    %v2589 = vunpack.c.h.b16 %v2501
    %v2590 = vunpack.c.l.b16 %v2502
    %v2591 = vunpack.c.h.b16 %v2502
    %v2592 = vunpack.c.l.b16 %v2503
    %v2593 = vunpack.c.h.b16 %v2503
    %v2594 = vunpack.c.l.b16 %v2504
    %v2595 = vunpack.c.h.b16 %v2504
    %v2596 = vunpack.c.l.b16 %v2505
    %v2597 = vunpack.c.h.b16 %v2505
    %v2598 = vunpack.c.l.b16 %v2506
    %v2599 = vunpack.c.h.b16 %v2506
    %v2600 = vunpack.c.l.b16 %v2507
    %v2601 = vunpack.c.h.b16 %v2507
    %v2602 = vunpack.c.l.b16 %v2508
    %v2603 = vunpack.c.h.b16 %v2508
    %v2604 = vunpack.c.l.b16 %v2509
    %v2605 = vunpack.c.h.b16 %v2509
    %v2606 = vunpack.c.l.b16 %v2510
    %v2607 = vunpack.c.h.b16 %v2510
    %v2608 = vunpack.c.l.b16 %v2511
    %v2609 = vunpack.c.h.b16 %v2511
    %v2610 = vunpack.c.l.b16 %v2512
    %v2611 = vunpack.c.h.b16 %v2512
    %v2612 = vunpack.c.l.b16 %v2513
    %v2613 = vunpack.c.h.b16 %v2513
    %v2614 = vunpack.c.l.b16 %v2514
    %v2615 = vunpack.c.h.b16 %v2514
    %v2616 = vunpack.c.l.b16 %v2515
    %v2617 = vunpack.c.h.b16 %v2515
    %v2618 = vunpack.c.l.b16 %v2516
    %v2619 = vunpack.c.h.b16 %v2516
    %v2620 = vunpack.c.l.b16 %v2517
    %v2621 = vunpack.c.h.b16 %v2517
    %v2622 = vunpack.c.l.b16 %v2518
    %v2623 = vunpack.c.h.b16 %v2518
    %v2624 = vunpack.c.l.b16 %v2519
    %v2625 = vunpack.c.h.b16 %v2519
    %v2626 = vunpack.c.l.b16 %v2520
    %v2627 = vunpack.c.h.b16 %v2520
    %v2628 = vunpack.c.l.b16 %v2521
    %v2629 = vunpack.c.h.b16 %v2521
    %v2630 = vunpack.c.l.b16 %v2522
    %v2631 = vunpack.c.h.b16 %v2522
    %v2632 = vunpack.c.l.b16 %v2523
    %v2633 = vunpack.c.h.b16 %v2523
    %v2634 = vunpack.c.l.b16 %v2524
    %v2635 = vunpack.c.h.b16 %v2524
    %v2636 = vunpack.c.l.b16 %v2525
    %v2637 = vunpack.c.h.b16 %v2525
    %v2638 = vunpack.c.l.b16 %v2526
    %v2639 = vunpack.c.h.b16 %v2526
    %v2640 = vunpack.c.l.b16 %v2527
    %v2641 = vunpack.c.h.b16 %v2527
    %v2642 = vunpack.c.l.b16 %v2528
    %v2643 = vunpack.c.h.b16 %v2528
    %v2644 = vunpack.c.l.b16 %v2529
    %v2645 = vunpack.c.h.b16 %v2529
    %v2646 = vunpack.c.l.b16 %v2530
    %v2647 = vunpack.c.h.b16 %v2530
    %v2648 = vunpack.c.l.b16 %v2531
    %v2649 = vunpack.c.h.b16 %v2531
    %v2650 = vpack.c.b16 %v2590, %v2586
    %v2651 = vpack.c.b16 %v2591, %v2587
    %v2652 = vpack.c.b16 %v2592, %v2588
    %v2653 = vpack.c.b16 %v2593, %v2589
    %v2654 = vpack.c.b16 %v2598, %v2594
    %v2655 = vpack.c.b16 %v2599, %v2595
    %v2656 = vpack.c.b16 %v2600, %v2596
    %v2657 = vpack.c.b16 %v2601, %v2597
    %v2658 = vpack.c.b16 %v2606, %v2602
    %v2659 = vpack.c.b16 %v2607, %v2603
    %v2660 = vpack.c.b16 %v2608, %v2604
    %v2661 = vpack.c.b16 %v2609, %v2605
    %v2662 = vpack.c.b16 %v2614, %v2610
    %v2663 = vpack.c.b16 %v2615, %v2611
    %v2664 = vpack.c.b16 %v2616, %v2612
    %v2665 = vpack.c.b16 %v2617, %v2613
    %v2666 = vpack.c.b16 %v2622, %v2618
    %v2667 = vpack.c.b16 %v2623, %v2619
    %v2668 = vpack.c.b16 %v2624, %v2620
    %v2669 = vpack.c.b16 %v2625, %v2621
    %v2670 = vpack.c.b16 %v2630, %v2626
    %v2671 = vpack.c.b16 %v2631, %v2627
    %v2672 = vpack.c.b16 %v2632, %v2628
    %v2673 = vpack.c.b16 %v2633, %v2629
    %v2674 = vpack.c.b16 %v2638, %v2634
    %v2675 = vpack.c.b16 %v2639, %v2635
    %v2676 = vpack.c.b16 %v2640, %v2636
    %v2677 = vpack.c.b16 %v2641, %v2637
    %v2678 = vpack.c.b16 %v2646, %v2642
    %v2679 = vpack.c.b16 %v2647, %v2643
    %v2680 = vpack.c.b16 %v2648, %v2644
    %v2681 = vpack.c.b16 %v2649, %v2645
    %2714 = vmatprep.subr.bf16.mxu0 %v2651
    %2715 = vmatpush1.bf16.msra.mxu0 %v2650
    %2716 = vmatprep.subr.bf16.mxu0 %v2655
    %2717 = vmatpush1.bf16.msra.mxu0 %v2654
    %2718 = vmatprep.subr.bf16.mxu0 %v2659
    %2719 = vmatpush1.bf16.msra.mxu0 %v2658
    %2720 = vmatprep.subr.bf16.mxu0 %v2663
    %2721 = vmatpush1.bf16.msra.mxu0 %v2662
    %2722 = vmatprep.subr.bf16.mxu0 %v2667
    %2723 = vmatpush1.bf16.msra.mxu0 %v2666
    %2724 = vmatprep.subr.bf16.mxu0 %v2671
    %2725 = vmatpush1.bf16.msra.mxu0 %v2670
    %2726 = vmatprep.subr.bf16.mxu0 %v2675
    %2727 = vmatpush1.bf16.msra.mxu0 %v2674
    %2728 = vmatprep.subr.bf16.mxu0 %v2679
    %2729 = vmatpush1.bf16.msra.mxu0 %v2678
    %2730 = vmatprep.subr.bf16.mxu0 0
    %2731 = vmatpush1.bf16.msra.mxu0 0
    %2732 = vmatprep.subr.bf16.mxu0 0
    %2733 = vmatpush1.bf16.msra.mxu0 0
    %2734 = vmatprep.subr.bf16.mxu0 0
    %2735 = vmatpush1.bf16.msra.mxu0 0
    %2736 = vmatprep.subr.bf16.mxu0 0
    %2737 = vmatpush1.bf16.msra.mxu0 0
    %2738 = vmatprep.subr.bf16.mxu0 0
    %2739 = vmatpush1.bf16.msra.mxu0 0
    %2740 = vmatprep.subr.bf16.mxu0 0
    %2741 = vmatpush1.bf16.msra.mxu0 0
    %2742 = vmatprep.subr.bf16.mxu0 0
    %2743 = vmatpush1.bf16.msra.mxu0 0
    %2744 = vmatprep.subr.bf16.mxu0 0
    %2745 = vmatpush1.bf16.msra.mxu0 0
    %2746 = vmatprep.mubr.bf16.mxu0 0
    %2747 = vmatmul.mubr.bf16.gmra.mrb[0].mxu0 %v2498
    %v2748 = vpop.f32.mrb[0].mxu0
    %v2749 = vadd.f32 %v2537, %v2748
    %v2750 = vpop.f32.mrb[0].mxu0
    %v2751 = vadd.f32 %v2541, %v2750
    %v2752 = vpop.f32.mrb[0].mxu0
    %v2753 = vadd.f32 %v2537, %v2752
    %v2754 = vpop.f32.mrb[0].mxu0
    %v2755 = vadd.f32 %v2541, %v2754
    %2756 = vmatprep.mubr.bf16.mxu0 0
    %2757 = vmatmul.mubr.bf16.gmra.mrb[0].mxu0 %v2499
    %v2758 = vpop.f32.mrb[0].mxu0
    %v2759 = vadd.f32 %v2537, %v2758
    %v2760 = vpop.f32.mrb[0].mxu0
    %v2761 = vadd.f32 %v2541, %v2760
    %v2762 = vpop.f32.mrb[0].mxu0
    %v2763 = vadd.f32 %v2537, %v2762
    %v2764 = vpop.f32.mrb[0].mxu0
    %v2765 = vadd.f32 %v2541, %v2764
    %2766 = vdwg.mxu0
    %2767 = vmatprep.subr.bf16.mxu0 %v2653
    %2768 = vmatpush1.bf16.msra.mxu0 %v2652
    %2769 = vmatprep.subr.bf16.mxu0 %v2657
    %2770 = vmatpush1.bf16.msra.mxu0 %v2656
    %2771 = vmatprep.subr.bf16.mxu0 %v2661
    %2772 = vmatpush1.bf16.msra.mxu0 %v2660
    %2773 = vmatprep.subr.bf16.mxu0 %v2665
    %2774 = vmatpush1.bf16.msra.mxu0 %v2664
    %2775 = vmatprep.subr.bf16.mxu0 %v2669
    %2776 = vmatpush1.bf16.msra.mxu0 %v2668
    %2777 = vmatprep.subr.bf16.mxu0 %v2673
    %2778 = vmatpush1.bf16.msra.mxu0 %v2672
    %2779 = vmatprep.subr.bf16.mxu0 %v2677
    %2780 = vmatpush1.bf16.msra.mxu0 %v2676
    %2781 = vmatprep.subr.bf16.mxu0 %v2681
    %2782 = vmatpush1.bf16.msra.mxu0 %v2680
    %2783 = vmatprep.subr.bf16.mxu0 0
    %2784 = vmatpush1.bf16.msra.mxu0 0
    %2785 = vmatprep.subr.bf16.mxu0 0
    %2786 = vmatpush1.bf16.msra.mxu0 0
    %2787 = vmatprep.subr.bf16.mxu0 0
    %2788 = vmatpush1.bf16.msra.mxu0 0
    %2789 = vmatprep.subr.bf16.mxu0 0
    %2790 = vmatpush1.bf16.msra.mxu0 0
    %2791 = vmatprep.subr.bf16.mxu0 0
    %2792 = vmatpush1.bf16.msra.mxu0 0
    %2793 = vmatprep.subr.bf16.mxu0 0
    %2794 = vmatpush1.bf16.msra.mxu0 0
    %2795 = vmatprep.subr.bf16.mxu0 0
    %2796 = vmatpush1.bf16.msra.mxu0 0
    %2797 = vmatprep.subr.bf16.mxu0 0
    %2798 = vmatpush1.bf16.msra.mxu0 0
    %2799 = vmatprep.mubr.bf16.mxu0 0
    %2800 = vmatmul.mubr.bf16.gmra.mrb[0].mxu0 %v2498
    %v2801 = vpop.f32.mrb[0].mxu0
    %v2802 = vadd.f32 %v2545, %v2801
    %v2803 = vpop.f32.mrb[0].mxu0
    %v2804 = vadd.f32 %v2549, %v2803
    %v2805 = vpop.f32.mrb[0].mxu0
    %v2806 = vadd.f32 %v2545, %v2805
    %v2807 = vpop.f32.mrb[0].mxu0
    %v2808 = vadd.f32 %v2549, %v2807
    %2809 = vmatprep.mubr.bf16.mxu0 0
    %2810 = vmatmul.mubr.bf16.gmra.mrb[0].mxu0 %v2499
    %v2811 = vpop.f32.mrb[0].mxu0
    %v2812 = vadd.f32 %v2545, %v2811
    %v2813 = vpop.f32.mrb[0].mxu0
    %v2814 = vadd.f32 %v2549, %v2813
    %v2815 = vpop.f32.mrb[0].mxu0
    %v2816 = vadd.f32 %v2545, %v2815
    %v2817 = vpop.f32.mrb[0].mxu0
    %v2818 = vadd.f32 %v2549, %v2817
    %2819 = vdwg.mxu0
    %v2820 = vmax.f32 %v2749, 0.0
    %v2821 = vmax.f32 %v2751, 0.0
    %v2822 = vmax.f32 %v2802, 0.0
    %v2823 = vmax.f32 %v2804, 0.0
    %v2824 = vmax.f32 %v2753, 0.0
    %v2825 = vmax.f32 %v2755, 0.0
    %v2826 = vmax.f32 %v2806, 0.0
    %v2827 = vmax.f32 %v2808, 0.0
    %v2828 = vmax.f32 %v2759, 0.0
    %v2829 = vmax.f32 %v2761, 0.0
    %v2830 = vmax.f32 %v2812, 0.0
    %v2831 = vmax.f32 %v2814, 0.0
    %v2832 = vmax.f32 %v2763, 0.0
    %v2833 = vmax.f32 %v2765, 0.0
    %v2834 = vmax.f32 %v2816, 0.0
    %v2835 = vmax.f32 %v2818, 0.0
    %v2836 = vpack.c.bf16 %v2824, %v2820
    %v2837 = vpack.c.bf16 %v2825, %v2821
    %v2838 = vpack.c.bf16 %v2826, %v2822
    %v2839 = vpack.c.bf16 %v2827, %v2823
    %v2840 = vpack.c.bf16 %v2832, %v2828
    %v2841 = vpack.c.bf16 %v2833, %v2829
    %v2842 = vpack.c.bf16 %v2834, %v2830
    %v2843 = vpack.c.bf16 %v2835, %v2831
    %v2844 = vld [vmem:[#allocation10] sm:$0xf]
    %v2845 = vld [vmem:[#allocation10 + $0x4] sm:$0xf]
    %v2846 = vld [vmem:[#allocation10 + $0x8] sm:$0xf]
    %v2847 = vld [vmem:[#allocation10 + $0xc] sm:$0xf]
    %v2848 = vld [vmem:[#allocation10 + $0x10] sm:$0xf]
    %v2849 = vld [vmem:[#allocation10 + $0x14] sm:$0xf]
    %v2850 = vld [vmem:[#allocation10 + $0x18] sm:$0xf]
    %v2851 = vld [vmem:[#allocation10 + $0x1c] sm:$0xf]
    %v2852 = vld [vmem:[#allocation10 + $0x20] sm:$0xf]
    %v2853 = vld [vmem:[#allocation10 + $0x24] sm:$0xf]
    %v2854 = vld [vmem:[#allocation10 + $0x28] sm:$0xf]
    %v2855 = vld [vmem:[#allocation10 + $0x2c] sm:$0xf]
    %v2856 = vld [vmem:[#allocation10 + $0x30] sm:$0xf]
    %v2857 = vld [vmem:[#allocation10 + $0x34] sm:$0xf]
    %v2858 = vld [vmem:[#allocation10 + $0x38] sm:$0xf]
    %v2859 = vld [vmem:[#allocation10 + $0x3c] sm:$0xf]
    %v2860 = vld [vmem:[#allocation10 + $0x40] sm:$0xf]
    %v2861 = vld [vmem:[#allocation10 + $0x44] sm:$0xf]
    %v2862 = vld [vmem:[#allocation10 + $0x48] sm:$0xf]
    %v2863 = vld [vmem:[#allocation10 + $0x4c] sm:$0xf]
    %v2864 = vld [vmem:[#allocation10 + $0x50] sm:$0xf]
    %v2865 = vld [vmem:[#allocation10 + $0x54] sm:$0xf]
    %v2866 = vld [vmem:[#allocation10 + $0x58] sm:$0xf]
    %v2867 = vld [vmem:[#allocation10 + $0x5c] sm:$0xf]
    %v2868 = vld [vmem:[#allocation10 + $0x60] sm:$0xf]
    %v2869 = vld [vmem:[#allocation10 + $0x64] sm:$0xf]
    %v2870 = vld [vmem:[#allocation10 + $0x68] sm:$0xf]
    %v2871 = vld [vmem:[#allocation10 + $0x6c] sm:$0xf]
    %v2872 = vld [vmem:[#allocation10 + $0x70] sm:$0xf]
    %v2873 = vld [vmem:[#allocation10 + $0x74] sm:$0xf]
    %v2874 = vld [vmem:[#allocation10 + $0x78] sm:$0xf]
    %v2875 = vld [vmem:[#allocation10 + $0x7c] sm:$0xf]
    %v2876 = vld [vmem:[#allocation10 + $0x80] sm:$0xf]
    %v2877 = vld [vmem:[#allocation10 + $0x84] sm:$0xf]
    %v2878 = vld [vmem:[#allocation10 + $0x88] sm:$0xf]
    %v2879 = vld [vmem:[#allocation10 + $0x8c] sm:$0xf]
    %v2880 = vld [vmem:[#allocation10 + $0x90] sm:$0xf]
    %v2881 = vld [vmem:[#allocation10 + $0x94] sm:$0xf]
    %v2882 = vld [vmem:[#allocation10 + $0x98] sm:$0xf]
    %v2883 = vld [vmem:[#allocation10 + $0x9c] sm:$0xf]
    %v2884 = vld [vmem:[#allocation10 + $0xa0] sm:$0xf]
    %v2885 = vld [vmem:[#allocation10 + $0xa4] sm:$0xf]
    %v2886 = vld [vmem:[#allocation10 + $0xa8] sm:$0xf]
    %v2887 = vld [vmem:[#allocation10 + $0xac] sm:$0xf]
    %v2888 = vld [vmem:[#allocation10 + $0xb0] sm:$0xf]
    %v2889 = vld [vmem:[#allocation10 + $0xb4] sm:$0xf]
    %v2890 = vld [vmem:[#allocation10 + $0xb8] sm:$0xf]
    %v2891 = vld [vmem:[#allocation10 + $0xbc] sm:$0xf]
    %v2892 = vld [vmem:[#allocation10 + $0xc0] sm:$0xf]
    %v2893 = vld [vmem:[#allocation10 + $0xc4] sm:$0xf]
    %v2894 = vld [vmem:[#allocation10 + $0xc8] sm:$0xf]
    %v2895 = vld [vmem:[#allocation10 + $0xcc] sm:$0xf]
    %v2896 = vld [vmem:[#allocation10 + $0xd0] sm:$0xf]
    %v2897 = vld [vmem:[#allocation10 + $0xd4] sm:$0xf]
    %v2898 = vld [vmem:[#allocation10 + $0xd8] sm:$0xf]
    %v2899 = vld [vmem:[#allocation10 + $0xdc] sm:$0xf]
    %v2900 = vld [vmem:[#allocation10 + $0xe0] sm:$0xf]
    %v2901 = vld [vmem:[#allocation10 + $0xe4] sm:$0xf]
    %v2902 = vld [vmem:[#allocation10 + $0xe8] sm:$0xf]
    %v2903 = vld [vmem:[#allocation10 + $0xec] sm:$0xf]
    %v2904 = vld [vmem:[#allocation10 + $0xf0] sm:$0xf]
    %v2905 = vld [vmem:[#allocation10 + $0xf4] sm:$0xf]
    %v2906 = vld [vmem:[#allocation10 + $0xf8] sm:$0xf]
    %v2907 = vld [vmem:[#allocation10 + $0xfc] sm:$0xf]
    %v2908 = vld [vmem:[%s11] sm:$0x1]
    %v2910 = vlaneseq
    %v2911 = vshrl.u32 %v2910, 7
    %v2912 = vsub.s32 0, %v2911
    %v2913 = vrot.slane %v2908, %v2912
    %v2979 = vunpack.c.l.b16 %v2844
    %v2980 = vunpack.c.l.b16 %v2845
    %v2981 = vunpack.c.l.b16 %v2846
    %v2982 = vunpack.c.l.b16 %v2847
    %v2983 = vunpack.c.l.b16 %v2848
    %v2984 = vunpack.c.l.b16 %v2849
    %v2985 = vunpack.c.l.b16 %v2850
    %v2986 = vunpack.c.l.b16 %v2851
    %v2987 = vunpack.c.l.b16 %v2852
    %v2988 = vunpack.c.l.b16 %v2853
    %v2989 = vunpack.c.l.b16 %v2854
    %v2990 = vunpack.c.l.b16 %v2855
    %v2991 = vunpack.c.l.b16 %v2856
    %v2992 = vunpack.c.l.b16 %v2857
    %v2993 = vunpack.c.l.b16 %v2858
    %v2994 = vunpack.c.l.b16 %v2859
    %v2995 = vunpack.c.l.b16 %v2860
    %v2996 = vunpack.c.l.b16 %v2861
    %v2997 = vunpack.c.l.b16 %v2862
    %v2998 = vunpack.c.l.b16 %v2863
    %v2999 = vunpack.c.l.b16 %v2864
    %v3000 = vunpack.c.l.b16 %v2865
    %v3001 = vunpack.c.l.b16 %v2866
    %v3002 = vunpack.c.l.b16 %v2867
    %v3003 = vunpack.c.l.b16 %v2868
    %v3004 = vunpack.c.l.b16 %v2869
    %v3005 = vunpack.c.l.b16 %v2870
    %v3006 = vunpack.c.l.b16 %v2871
    %v3007 = vunpack.c.l.b16 %v2872
    %v3008 = vunpack.c.l.b16 %v2873
    %v3009 = vunpack.c.l.b16 %v2874
    %v3010 = vunpack.c.l.b16 %v2875
    %v3011 = vunpack.c.l.b16 %v2876
    %v3012 = vunpack.c.l.b16 %v2877
    %v3013 = vunpack.c.l.b16 %v2878
    %v3014 = vunpack.c.l.b16 %v2879
    %v3015 = vunpack.c.l.b16 %v2880
    %v3016 = vunpack.c.l.b16 %v2881
    %v3017 = vunpack.c.l.b16 %v2882
    %v3018 = vunpack.c.l.b16 %v2883
    %v3019 = vunpack.c.l.b16 %v2884
    %v3020 = vunpack.c.l.b16 %v2885
    %v3021 = vunpack.c.l.b16 %v2886
    %v3022 = vunpack.c.l.b16 %v2887
    %v3023 = vunpack.c.l.b16 %v2888
    %v3024 = vunpack.c.l.b16 %v2889
    %v3025 = vunpack.c.l.b16 %v2890
    %v3026 = vunpack.c.l.b16 %v2891
    %v3027 = vunpack.c.l.b16 %v2892
    %v3028 = vunpack.c.l.b16 %v2893
    %v3029 = vunpack.c.l.b16 %v2894
    %v3030 = vunpack.c.l.b16 %v2895
    %v3031 = vunpack.c.l.b16 %v2896
    %v3032 = vunpack.c.l.b16 %v2897
    %v3033 = vunpack.c.l.b16 %v2898
    %v3034 = vunpack.c.l.b16 %v2899
    %v3035 = vunpack.c.l.b16 %v2900
    %v3036 = vunpack.c.l.b16 %v2901
    %v3037 = vunpack.c.l.b16 %v2902
    %v3038 = vunpack.c.l.b16 %v2903
    %v3039 = vunpack.c.l.b16 %v2904
    %v3040 = vunpack.c.l.b16 %v2905
    %v3041 = vunpack.c.l.b16 %v2906
    %v3042 = vunpack.c.l.b16 %v2907
    %v3043 = vpack.c.b16 %v2980, %v2979
    %v3044 = vpack.c.b16 %v2982, %v2981
    %v3045 = vpack.c.b16 %v2984, %v2983
    %v3046 = vpack.c.b16 %v2986, %v2985
    %v3047 = vpack.c.b16 %v2988, %v2987
    %v3048 = vpack.c.b16 %v2990, %v2989
    %v3049 = vpack.c.b16 %v2992, %v2991
    %v3050 = vpack.c.b16 %v2994, %v2993
    %v3051 = vpack.c.b16 %v2996, %v2995
    %v3052 = vpack.c.b16 %v2998, %v2997
    %v3053 = vpack.c.b16 %v3000, %v2999
    %v3054 = vpack.c.b16 %v3002, %v3001
    %v3055 = vpack.c.b16 %v3004, %v3003
    %v3056 = vpack.c.b16 %v3006, %v3005
    %v3057 = vpack.c.b16 %v3008, %v3007
    %v3058 = vpack.c.b16 %v3010, %v3009
    %v3059 = vpack.c.b16 %v3012, %v3011
    %v3060 = vpack.c.b16 %v3014, %v3013
    %v3061 = vpack.c.b16 %v3016, %v3015
    %v3062 = vpack.c.b16 %v3018, %v3017
    %v3063 = vpack.c.b16 %v3020, %v3019
    %v3064 = vpack.c.b16 %v3022, %v3021
    %v3065 = vpack.c.b16 %v3024, %v3023
    %v3066 = vpack.c.b16 %v3026, %v3025
    %v3067 = vpack.c.b16 %v3028, %v3027
    %v3068 = vpack.c.b16 %v3030, %v3029
    %v3069 = vpack.c.b16 %v3032, %v3031
    %v3070 = vpack.c.b16 %v3034, %v3033
    %v3071 = vpack.c.b16 %v3036, %v3035
    %v3072 = vpack.c.b16 %v3038, %v3037
    %v3073 = vpack.c.b16 %v3040, %v3039
    %v3074 = vpack.c.b16 %v3042, %v3041
    %3107 = vmatprep.subr.bf16.mxu0 0
    %3108 = vmatpush1.bf16.msra.mxu0 %v3043
    %3109 = vmatprep.subr.bf16.mxu0 0
    %3110 = vmatpush1.bf16.msra.mxu0 %v3044
    %3111 = vmatprep.subr.bf16.mxu0 0
    %3112 = vmatpush1.bf16.msra.mxu0 %v3045
    %3113 = vmatprep.subr.bf16.mxu0 0
    %3114 = vmatpush1.bf16.msra.mxu0 %v3046
    %3115 = vmatprep.subr.bf16.mxu0 0
    %3116 = vmatpush1.bf16.msra.mxu0 %v3047
    %3117 = vmatprep.subr.bf16.mxu0 0
    %3118 = vmatpush1.bf16.msra.mxu0 %v3048
    %3119 = vmatprep.subr.bf16.mxu0 0
    %3120 = vmatpush1.bf16.msra.mxu0 %v3049
    %3121 = vmatprep.subr.bf16.mxu0 0
    %3122 = vmatpush1.bf16.msra.mxu0 %v3050
    %3123 = vmatprep.subr.bf16.mxu0 0
    %3124 = vmatpush1.bf16.msra.mxu0 %v3051
    %3125 = vmatprep.subr.bf16.mxu0 0
    %3126 = vmatpush1.bf16.msra.mxu0 %v3052
    %3127 = vmatprep.subr.bf16.mxu0 0
    %3128 = vmatpush1.bf16.msra.mxu0 %v3053
    %3129 = vmatprep.subr.bf16.mxu0 0
    %3130 = vmatpush1.bf16.msra.mxu0 %v3054
    %3131 = vmatprep.subr.bf16.mxu0 0
    %3132 = vmatpush1.bf16.msra.mxu0 %v3055
    %3133 = vmatprep.subr.bf16.mxu0 0
    %3134 = vmatpush1.bf16.msra.mxu0 %v3056
    %3135 = vmatprep.subr.bf16.mxu0 0
    %3136 = vmatpush1.bf16.msra.mxu0 %v3057
    %3137 = vmatprep.subr.bf16.mxu0 0
    %3138 = vmatpush1.bf16.msra.mxu0 %v3058
    %3139 = vmatprep.mubr.bf16.mxu0 %v2837
    %3140 = vmatmul.mubr.bf16.gmra.mrb[0].mxu0 %v2836
    %v3141 = vpop.f32.mrb[0].mxu0
    %v3142 = vadd.f32 %v2913, %v3141
    %v3143 = vpop.f32.mrb[0].mxu0
    %v3144 = vpop.f32.mrb[0].mxu0
    %v3145 = vadd.f32 %v2913, %v3144
    %v3146 = vpop.f32.mrb[0].mxu0
    %3147 = vmatprep.mubr.bf16.mxu0 %v2841
    %3148 = vmatmul.mubr.bf16.gmra.mrb[0].mxu0 %v2840
    %v3149 = vpop.f32.mrb[0].mxu0
    %v3150 = vadd.f32 %v2913, %v3149
    %v3151 = vpop.f32.mrb[0].mxu0
    %v3152 = vpop.f32.mrb[0].mxu0
    %v3153 = vadd.f32 %v2913, %v3152
    %v3154 = vpop.f32.mrb[0].mxu0
    %3155 = vdwg.mxu0
    %3156 = vmatprep.subr.bf16.mxu0 0
    %3157 = vmatpush1.bf16.msra.mxu0 %v3059
    %3158 = vmatprep.subr.bf16.mxu0 0
    %3159 = vmatpush1.bf16.msra.mxu0 %v3060
    %3160 = vmatprep.subr.bf16.mxu0 0
    %3161 = vmatpush1.bf16.msra.mxu0 %v3061
    %3162 = vmatprep.subr.bf16.mxu0 0
    %3163 = vmatpush1.bf16.msra.mxu0 %v3062
    %3164 = vmatprep.subr.bf16.mxu0 0
    %3165 = vmatpush1.bf16.msra.mxu0 %v3063
    %3166 = vmatprep.subr.bf16.mxu0 0
    %3167 = vmatpush1.bf16.msra.mxu0 %v3064
    %3168 = vmatprep.subr.bf16.mxu0 0
    %3169 = vmatpush1.bf16.msra.mxu0 %v3065
    %3170 = vmatprep.subr.bf16.mxu0 0
    %3171 = vmatpush1.bf16.msra.mxu0 %v3066
    %3172 = vmatprep.subr.bf16.mxu0 0
    %3173 = vmatpush1.bf16.msra.mxu0 %v3067
    %3174 = vmatprep.subr.bf16.mxu0 0
    %3175 = vmatpush1.bf16.msra.mxu0 %v3068
    %3176 = vmatprep.subr.bf16.mxu0 0
    %3177 = vmatpush1.bf16.msra.mxu0 %v3069
    %3178 = vmatprep.subr.bf16.mxu0 0
    %3179 = vmatpush1.bf16.msra.mxu0 %v3070
    %3180 = vmatprep.subr.bf16.mxu0 0
    %3181 = vmatpush1.bf16.msra.mxu0 %v3071
    %3182 = vmatprep.subr.bf16.mxu0 0
    %3183 = vmatpush1.bf16.msra.mxu0 %v3072
    %3184 = vmatprep.subr.bf16.mxu0 0
    %3185 = vmatpush1.bf16.msra.mxu0 %v3073
    %3186 = vmatprep.subr.bf16.mxu0 0
    %3187 = vmatpush1.bf16.msra.mxu0 %v3074
    %3188 = vmatprep.mubr.bf16.mxu0 %v2839
    %3189 = vmatmul.mubr.bf16.gmra.mrb[0].mxu0 %v2838
    %v3190 = vpop.f32.mrb[0].mxu0
    %v3191 = vadd.f32 %v3142, %v3190
    %v3192 = vpop.f32.mrb[0].mxu0
    %v3193 = vpop.f32.mrb[0].mxu0
    %v3194 = vadd.f32 %v3145, %v3193
    %v3195 = vpop.f32.mrb[0].mxu0
    %3196 = vmatprep.mubr.bf16.mxu0 %v2843
    %3197 = vmatmul.mubr.bf16.gmra.mrb[0].mxu0 %v2842
    %v3198 = vpop.f32.mrb[0].mxu0
    %v3199 = vadd.f32 %v3150, %v3198
    %v3200 = vpop.f32.mrb[0].mxu0
    %v3201 = vpop.f32.mrb[0].mxu0
    %v3202 = vadd.f32 %v3153, %v3201
    %v3203 = vpop.f32.mrb[0].mxu0
    %3204 = vdwg.mxu0
    %v3205 = vadd.f32 %v2428, %v3191
    %v3206 = vadd.f32 %v2429, %v3194
    %v3207 = vadd.f32 %v2430, %v3199
    %v3208 = vadd.f32 %v2431, %v3202
    %3209 = vst [vmem:[#allocation11] sm:$0xff] %v3205
    %3210 = vst [vmem:[#allocation11 + $0x8] sm:$0xff] %v3206
    %3211 = vst [vmem:[#allocation11 + $0x10] sm:$0xff] %v3207
    %3212 = vst [vmem:[#allocation11 + $0x18] sm:$0xff] %v3208
    // Predicated region
    $region70: #{tpu_custom_call.1} parent=1 // pred_check
      _
    $region71: #{tpu_custom_call.1} parent=1 // pred_check_branch
      %3214 = sbr.rel (0) target = $region73
    $region72: #{tpu_custom_call.1} parent=1 // pred_region
      %s3216 = ssub.s32 512, 512
      %3217 = vsyncadd [#allocation4], %s3216
      %s3218 = sshll.u32 [#allocation11], 4
      %s3219 = int_to_ptr.vmem [resolvable:$true] %s3218
      %3224 = dma.vmem_to_hbm [thread:$0]  %s3219, 512, %s12, [#allocation4], 128, 128, 8
    $region73: #{tpu_custom_call.1} parent=1 // pred_fallthru
      _
    // Predicated region
    $region74: #{tpu_custom_call.1} parent=1 // pred_check
      _
    $region75: #{tpu_custom_call.1} parent=1 // pred_check_branch
      %3226 = sbr.rel (0) target = $region77
    $region76: #{tpu_custom_call.1} parent=1 // pred_region
      %3227 = dma.done [#allocation4], 512
    $region77: #{tpu_custom_call.1} parent=1 // pred_fallthru
      _
    %3228 = vsyncpa [#allocation3], 1
    %3229 = vsyncpa [#allocation6], 1
    %3230 = vsyncpa [#allocation9], 1
    %3231 = vsyncpa [#allocation4], 1

</llo_original>
